<compile_context>
chip_gen: v6e
topology: v6e:2x2x1
jax: 0.10.0
libtpu: 0.0.40
codegen_flags: <defaults>
</compile_context>

<pallas_src>
import functools

import jax
import jax.numpy as jnp
from jax.experimental import pallas as pl
from jax.experimental.pallas import tpu as pltpu


def _round_up(x, m):
    return ((x + m - 1) // m) * m


def _pad_rows(x, n_pad):
    if n_pad == 0:
        return x
    return jnp.pad(x, ((0, n_pad), (0, 0)))


def _choose_tile(n, cap, align):
    """Tile <= cap (aligned) chosen so the padded total wastes < one align unit
    per tile (avoids the round_up(B, 512) ~2x padding-waste pattern)."""
    n_al = _round_up(max(n, 1), align)
    cap_al = max(align, (cap // align) * align)
    if n_al <= cap_al:
        return n_al
    nt = -(-n_al // cap_al)                      # cdiv
    return _round_up(-(-n_al // nt), align)


def _table_tile(nrows, cap, align=128):
    """Row tile for streamed tables.  If nrows is already a multiple of
    `align`, pick a tile that divides nrows exactly (no re-padding copy)."""
    cap_al = max(align, (cap // align) * align)
    if nrows % align == 0:
        m = nrows // align
        for d in range(min(cap_al // align, m), 0, -1):
            if m % d == 0:
                return d * align
        return align
    return _choose_tile(nrows, cap, align)


@functools.lru_cache(maxsize=None)
def _vmem_limit_bytes():
    # Per-generation scoped-VMEM cap: ~48 MiB on v7x (64 MiB physical / TC),
    # 96 MiB on v5e/v6e (128 MiB physical).  Falls back to 32 MiB if the
    # hardware query is unavailable.
    try:
        cap = int(pltpu.get_tpu_info().vmem_capacity_bytes)
        return max(32 * 1024 * 1024, min((cap * 3) // 4, 96 * 1024 * 1024))
    except Exception:
        return 32 * 1024 * 1024


def _cparams(dim_sem):
    return pltpu.CompilerParams(dimension_semantics=dim_sem,
                                vmem_limit_bytes=_vmem_limit_bytes())


# ----------------------------------------------------------------------------
# Kernel 1: prediction network (the NCD "hot path"), tiled over the batch.
# PosLinear effective weights |W| are precomputed once (bf16) in the wrapper.
# ----------------------------------------------------------------------------
def _prednet_kernel(stu_ref, kdiff_ref, ediff_ref, kp_ref,
                    w1_ref, b1_ref, w2_ref, b2_ref, w3row_ref, b3_ref, out_ref):
    stat = jax.nn.sigmoid(stu_ref[...])            # sigmoid(student_emb)
    kd = jax.nn.sigmoid(kdiff_ref[...])            # sigmoid(k_difficulty)
    ed = jax.nn.sigmoid(ediff_ref[...])            # sigmoid(e_difficulty)
    x = kp_ref[...] * (stat - kd) * ed             # [TB, K]

    h1 = jax.nn.sigmoid(
        jnp.dot(x.astype(jnp.bfloat16), w1_ref[...],
                preferred_element_type=jnp.float32) + b1_ref[...])
    # TODO(synk): nn.Dropout(p=0.5) treated as identity (eval-mode semantics).
    h2 = jax.nn.sigmoid(
        jnp.dot(h1.astype(jnp.bfloat16), w2_ref[...],
                preferred_element_type=jnp.float32) + b2_ref[...])
    # Final (256 -> 1) layer as VPU multiply + lane reduce instead of an
    # N=1-column MXU matmul.
    logit = jnp.sum(h2 * w3row_ref[...], axis=-1, keepdims=True) + b3_ref[...]
    out_ref[...] = jax.nn.sigmoid(logit)


def prednet_forward(stu_emb, kdiff, ediff, kp,
                    w1a, b1, w2a, b2, w3a_row, b3, *, tile_b=1024):
    B, K = stu_emb.shape
    L1 = w1a.shape[1]
    L2 = w2a.shape[1]

    tb = _choose_tile(B, tile_b, 8)
    Bp = _round_up(B, tb)
    pad = Bp - B
    stu_emb = _pad_rows(stu_emb, pad)
    kdiff = _pad_rows(kdiff, pad)
    ediff = _pad_rows(ediff, pad)
    kp = _pad_rows(kp, pad)

    row = lambda i: (i, 0)
    const = lambda i: (0, 0)

    out = pl.pallas_call(
        _prednet_kernel,
        out_shape=jax.ShapeDtypeStruct((Bp, 1), jnp.float32),
        grid=(Bp // tb,),
        in_specs=[
            pl.BlockSpec((tb, K), row),        # stu_emb
            pl.BlockSpec((tb, K), row),        # k_difficulty
            pl.BlockSpec((tb, 1), row),        # e_difficulty
            pl.BlockSpec((tb, K), row),        # knowledge point mask
            pl.BlockSpec((K, L1), const),      # |W1| bf16, resident
            pl.BlockSpec((1, L1), const),      # b1
            pl.BlockSpec((L1, L2), const),     # |W2| bf16, resident
            pl.BlockSpec((1, L2), const),      # b2
            pl.BlockSpec((1, L2), const),      # |W3| as a row (f32)
            pl.BlockSpec((1, 1), const),       # b3
        ],
        out_specs=pl.BlockSpec((tb, 1), row),
        compiler_params=_cparams(("parallel",)),
    )(stu_emb, kdiff, ediff, kp, w1a, b1, w2a, b2, w3a_row, b3)
    return out[:B]


# ----------------------------------------------------------------------------
# Kernel 2: 2-layer MLP (Linear -> ReLU -> Linear) + fused row L2-normalize,
# tiled over table rows; weights resident across grid steps (bf16).
# Output feature dim is padded to a multiple of 128 (lane-dense stores) and
# rows >= n_valid are forced to exactly zero.
# ----------------------------------------------------------------------------
def _mlp2_norm_kernel(x_ref, w1_ref, b1_ref, w2_ref, b2_ref, out_ref,
                      *, n_valid, tile_rows):
    xb = x_ref[...].astype(jnp.bfloat16)
    h = jnp.maximum(
        jnp.dot(xb, w1_ref[...], preferred_element_type=jnp.float32)
        + b1_ref[...], 0.0)
    y = jnp.dot(h.astype(jnp.bfloat16), w2_ref[...],
                preferred_element_type=jnp.float32) + b2_ref[...]
    # x / sqrt(1e-8 + ||x||^2)  (matches cal_infonce_loss normalization);
    # zero-padded output columns contribute 0 to the norm.
    inv = jax.lax.rsqrt(1e-8 + jnp.sum(y * y, axis=-1, keepdims=True))
    # Mask padded rows to exactly zero so streamed InfoNCE pad-correction is
    # exact.
    row0 = pl.program_id(0) * tile_rows
    rows = jax.lax.broadcasted_iota(jnp.int32, (tile_rows, 1), 0) + row0
    mask = (rows < n_valid).astype(jnp.float32)
    out_ref[...] = (y * inv * mask).astype(out_ref.dtype)


def mlp2_normed(x, w1, b1, w2, b2, *, tile_rows=1024):
    """Returns (padded normalized table [Np, Kp] bf16, valid_rows, valid_cols)."""
    N, Din = x.shape
    H = w1.shape[1]
    Dout = w2.shape[1]
    Kp = _round_up(Dout, 128)

    w1b = w1.astype(jnp.bfloat16)
    w2p = jnp.pad(w2, ((0, 0), (0, Kp - Dout))).astype(jnp.bfloat16)
    b2p = jnp.pad(b2, ((0, 0), (0, Kp - Dout)))

    tn = _choose_tile(N, tile_rows, 128)   # 128-aligned rows -> no re-pad later
    Np = _round_up(N, tn)
    xp = _pad_rows(x, Np - N)

    row = lambda i: (i, 0)
    const = lambda i: (0, 0)

    out = pl.pallas_call(
        functools.partial(_mlp2_norm_kernel, n_valid=N, tile_rows=tn),
        out_shape=jax.ShapeDtypeStruct((Np, Kp), jnp.bfloat16),
        grid=(Np // tn,),
        in_specs=[
            pl.BlockSpec((tn, Din), row),
            pl.BlockSpec((Din, H), const),
            pl.BlockSpec((1, H), const),
            pl.BlockSpec((H, Kp), const),
            pl.BlockSpec((1, Kp), const),
        ],
        out_specs=pl.BlockSpec((tn, Kp), row),
        compiler_params=_cparams(("parallel",)),
    )(xp, w1b, b1, w2p, b2p)
    return out, N, Dout


# ----------------------------------------------------------------------------
# Kernel 3: fused InfoNCE (kd + simi terms sharing e1 / e2).
#   n1s   : pre-normalized embeds1 scaled by 1/temp, feature-padded [B, Kp] f32
#   n2    : pre-normalized gathered embeds2, feature-padded   [B, Kp] bf16
#   tbl_a : normalized "all2" table A (full table), row blocks [tile_a, Kp] bf16
#   tbl_b : normalized "all2" table B (simi table),  row blocks [tile_b, Kp] bf16
# Padded rows / feature columns are exactly zero -> exp(0)=1 each, subtracted
# exactly at init / finalize.
# ----------------------------------------------------------------------------
def _infonce_pair_kernel(n1s_ref, n2_ref, ta_ref, tb_ref, outa_ref, outb_ref,
                         nume_sc, da_sc, db_sc, *,
                         nblk_a, nblk_b, pad_a, pad_b, pad_feat):
    k = pl.program_id(0)

    @pl.when(k == 0)
    def _init():
        prod = n1s_ref[...] * n2_ref[...].astype(jnp.float32)
        nume_sc[...] = (jnp.sum(jnp.exp(prod), keepdims=True)
                        - jnp.float32(pad_feat))
        da_sc[...] = jnp.zeros_like(da_sc)
        db_sc[...] = jnp.zeros_like(db_sc)

    n1b = n1s_ref[...].astype(jnp.bfloat16)

    @pl.when(k < nblk_a)
    def _acc_a():
        la = jax.lax.dot_general(n1b, ta_ref[...],
                                 (((1,), (1,)), ((), ())),
                                 preferred_element_type=jnp.float32)   # [B, tile_a]
        da_sc[...] = da_sc[...] + jnp.sum(jnp.exp(la), axis=-1, keepdims=True)

    @pl.when(k < nblk_b)
    def _acc_b():
        lb = jax.lax.dot_general(n1b, tb_ref[...],
                                 (((1,), (1,)), ((), ())),
                                 preferred_element_type=jnp.float32)   # [B, tile_b]
        db_sc[...] = db_sc[...] + jnp.sum(jnp.exp(lb), axis=-1, keepdims=True)

    @pl.when(k == pl.num_programs(0) - 1)
    def _finalize():
        nume = nume_sc[...]
        da = da_sc[...] - jnp.float32(pad_a)
        db = db_sc[...] - jnp.float32(pad_b)
        outa_ref[...] = jnp.mean(-jnp.log(nume / (da + 1e-8) + 1e-8),
                                 keepdims=True)
        outb_ref[...] = jnp.mean(-jnp.log(nume / (db + 1e-8) + 1e-8),
                                 keepdims=True)


def _prep_table(tbl, cap):
    nrows = tbl.shape[0]
    tile = _table_tile(nrows, cap, 128)
    tot = _round_up(nrows, tile)
    if tot != nrows:
        tbl = _pad_rows(tbl, tot - nrows)
    return tbl, tile, tot // tile, tot


def infonce_pair_loss(e1, n2_rows, tbl_a, rows_a, tbl_b, rows_b, temp, *,
                      tile_cap=None):
    """Returns (loss_a, loss_b) = (InfoNCE with table A, InfoNCE with table B),
    both sharing e1 (raw) and n2_rows (normalized, feature-padded, bf16)."""
    B, F = e1.shape
    Kp = tbl_a.shape[1]

    # Normalize embeds1 once, fold in 1/temp, zero-pad features to Kp.
    n1 = e1 / jnp.sqrt(1e-8 + jnp.sum(e1 * e1, axis=-1, keepdims=True))
    n1s = jnp.pad(n1 * (1.0 / temp), ((0, 0), (0, Kp - F)))

    cap = tile_cap if tile_cap is not None else (
        2048 if _vmem_limit_bytes() >= 64 * 1024 * 1024 else 1024)

    ta, tile_a, nblk_a, tot_a = _prep_table(tbl_a, cap)
    tb2, tile_b, nblk_b, tot_b = _prep_table(tbl_b, cap)

    pad_a = tot_a - rows_a          # zero rows in table A (exp(0)=1 each)
    pad_b = tot_b - rows_b          # zero rows in table B
    pad_feat = B * (Kp - F)         # zero feature elements in the numerator

    grid_n = max(nblk_a, nblk_b)
    const = lambda k: (0, 0)
    # Clamped block index -> the shorter table stops issuing DMAs once
    # exhausted (Pallas skips copies when the block index does not change).
    ia = lambda k, na=nblk_a: (jnp.minimum(k, na - 1), 0)
    ib = lambda k, nb=nblk_b: (jnp.minimum(k, nb - 1), 0)

    # TODO(synk): on v7x (2 TensorCores) a leading "parallel" split of the
    # streamed axis with per-half denominators would use both cores.
    out_a, out_b = pl.pallas_call(
        functools.partial(_infonce_pair_kernel,
                          nblk_a=nblk_a, nblk_b=nblk_b,
                          pad_a=float(pad_a), pad_b=float(pad_b),
                          pad_feat=float(pad_feat)),
        out_shape=(jax.ShapeDtypeStruct((1, 1), jnp.float32),
                   jax.ShapeDtypeStruct((1, 1), jnp.float32)),
        grid=(grid_n,),
        in_specs=[
            pl.BlockSpec((B, Kp), const),        # n1s (loaded once)
            pl.BlockSpec((B, Kp), const),        # n2  (loaded once)
            pl.BlockSpec((tile_a, Kp), ia),      # streamed table A row blocks
            pl.BlockSpec((tile_b, Kp), ib),      # streamed table B row blocks
        ],
        out_specs=(pl.BlockSpec((1, 1), const), pl.BlockSpec((1, 1), const)),
        scratch_shapes=[
            pltpu.VMEM((1, 1), jnp.float32),     # numerator (scalar)
            pltpu.VMEM((B, 1), jnp.float32),     # denominator A accumulator
            pltpu.VMEM((B, 1), jnp.float32),     # denominator B accumulator
        ],
        compiler_params=_cparams(("arbitrary",)),
    )(n1s, n2_rows, ta, tb2)
    return out_a[0, 0], out_b[0, 0]


# ----------------------------------------------------------------------------
# Full NCDNet_con forward (glue in plain JAX, compute in Pallas kernels)
# ----------------------------------------------------------------------------
def ncdnet_con_forward(params, stu_id, input_exercise, input_knowledge_point):
    B = stu_id.shape[0]

    # embedding lookups (glue)
    stu_emb = params["student_emb"][stu_id]                 # [B, K]   (raw)
    kdiff_raw = params["k_difficulty"][input_exercise]      # [B, K]   (raw)
    ediff_raw = params["e_difficulty"][input_exercise]      # [B, 1]   (raw)

    # PosLinear effective weight 2*relu(-W)+W == |W|, computed once, bf16.
    w1a = jnp.abs(params["w1"]).astype(jnp.bfloat16)
    w2a = jnp.abs(params["w2"]).astype(jnp.bfloat16)
    w3a_row = jnp.abs(params["w3"]).reshape(1, -1)

    # prediction head (Pallas, batch-tiled)
    output_1 = prednet_forward(
        stu_emb, kdiff_raw, ediff_raw, input_knowledge_point,
        w1a, params["b1"], w2a, params["b2"], w3a_row, params["b3"])   # [B, 1]

    # contrastive branch
    pro_emb = jnp.concatenate([ediff_raw, kdiff_raw], axis=1)          # [B, 1+K]

    # MLP profile projections, L2-normalized + lane-padded + row-masked inside
    # the kernel (normalization commutes with the row gathers below).
    usrprf_n, n_usr, _ = mlp2_normed(params["usrprf_embeds"],
                                     params["mlp_stu_w1"], params["mlp_stu_b1"],
                                     params["mlp_stu_w2"], params["mlp_stu_b2"])
    itmprf_n, n_itm, _ = mlp2_normed(params["itmprf_embeds"],
                                     params["mlp_pro_w1"], params["mlp_pro_b1"],
                                     params["mlp_pro_w2"], params["mlp_pro_b2"])

    usr_prf_n = usrprf_n[stu_id]                              # [B, Kp]  normalized
    itm_prf_n = itmprf_n[input_exercise]                      # [B, Kp2] normalized

    simi_user_idx = params["similar_students"][stu_id].reshape(-1)        # [B*S]
    simi_exer_idx = params["similar_exercises"][input_exercise].reshape(-1)
    simi_user_n = usrprf_n[simi_user_idx]                     # [B*S, Kp]  (no .T)
    simi_exer_n = itmprf_n[simi_exer_idx]                     # [B*S, Kp2] (no .T)

    # Fused (kd, simi) InfoNCE per shared (embeds1, embeds2) pair.
    kd_stu, simi_stu = infonce_pair_loss(
        stu_emb, usr_prf_n, usrprf_n, n_usr,
        simi_user_n, simi_user_idx.shape[0], 0.5)
    kd_pro, simi_pro = infonce_pair_loss(
        pro_emb, itm_prf_n, itmprf_n, n_itm,
        simi_exer_n, simi_exer_idx.shape[0], 0.5)

    kd_loss = kd_stu / B + kd_pro / B
    simi_loss = simi_stu / B + simi_pro / B
    total_loss = 0.04 * simi_loss + 0.015 * kd_loss

    return output_1.reshape(-1), total_loss


# ----------------------------------------------------------------------------
# Deterministic parameter construction (synthetic, mirrors __init__ shapes)
# ----------------------------------------------------------------------------
def init_params(key, *, knowledge_n, exer_n, student_n, usr_dim, itm_dim, num_sim):
    ks = jax.random.split(key, 24)
    f32 = jnp.float32

    def xavier(k, shape):  # shape = (in, out)
        fan_in, fan_out = shape[0], shape[-1]
        std = jnp.sqrt(2.0 / (fan_in + fan_out))
        return (jax.random.normal(k, shape, dtype=f32) * std).astype(f32)

    len1, len2 = 512, 256
    stu_hidden = (usr_dim + knowledge_n) // 2
    pro_hidden = (itm_dim + 2000) // 2

    params = {
        # embedding tables
        "student_emb": xavier(ks[0], (student_n, knowledge_n)),
        "k_difficulty": xavier(ks[1], (exer_n, knowledge_n)),
        "e_difficulty": xavier(ks[2], (exer_n, 1)),
        # prednet PosLinear weights (pre-transposed to [in, out]) + biases [1, out]
        "w1": xavier(ks[3], (knowledge_n, len1)),
        "b1": jnp.zeros((1, len1), f32),
        "w2": xavier(ks[4], (len1, len2)),
        "b2": jnp.zeros((1, len2), f32),
        "w3": xavier(ks[5], (len2, 1)),
        "b3": jnp.zeros((1, 1), f32),
        # mlp_stu
        "mlp_stu_w1": xavier(ks[6], (usr_dim, stu_hidden)),
        "mlp_stu_b1": jnp.zeros((1, stu_hidden), f32),
        "mlp_stu_w2": xavier(ks[7], (stu_hidden, knowledge_n)),
        "mlp_stu_b2": jnp.zeros((1, knowledge_n), f32),
        # mlp_pro
        "mlp_pro_w1": xavier(ks[8], (itm_dim, pro_hidden)),
        "mlp_pro_b1": jnp.zeros((1, pro_hidden), f32),
        "mlp_pro_w2": xavier(ks[9], (pro_hidden, 1 + knowledge_n)),
        "mlp_pro_b2": jnp.zeros((1, 1 + knowledge_n), f32),
        # profile embeddings (usr_emb / itm_emb buffers)
        "usrprf_embeds": jax.random.normal(ks[10], (student_n, usr_dim), dtype=f32),
        "itmprf_embeds": jax.random.normal(ks[11], (exer_n, itm_dim), dtype=f32),
        # similar-id tables
        "similar_students": jax.random.randint(
            ks[12], (student_n, num_sim), 0, student_n, dtype=jnp.int32),
        "similar_exercises": jax.random.randint(
            ks[13], (exer_n, num_sim), 0, exer_n, dtype=jnp.int32),
    }
    return params


if __name__ == "__main__":
    knowledge_n, exer_n, student_n = 32, 16, 16
    usr_dim, itm_dim, num_sim = 64, 48, 4
    B = 8

    key = jax.random.PRNGKey(0)
    pkey, k1, k2, k3 = jax.random.split(key, 4)

    params = init_params(pkey, knowledge_n=knowledge_n, exer_n=exer_n,
                         student_n=student_n, usr_dim=usr_dim,
                         itm_dim=itm_dim, num_sim=num_sim)

    stu_id = jax.random.randint(k1, (B,), 0, student_n, dtype=jnp.int32)
    input_exercise = jax.random.randint(k2, (B,), 0, exer_n, dtype=jnp.int32)
    input_knowledge_point = jax.random.bernoulli(
        k3, 0.5, (B, knowledge_n)).astype(jnp.float32)

    fwd = jax.jit(ncdnet_con_forward)
    output_1, total_loss = fwd(params, stu_id, input_exercise, input_knowledge_point)
    jax.block_until_ready((output_1, total_loss))

    assert output_1.shape == (B,)
    assert total_loss.shape == ()
    assert bool(jnp.all(jnp.isfinite(output_1)))
    assert bool(jnp.isfinite(total_loss))
    print("KERNEL_OK")
</pallas_src>

<mosaic_0001>
module attributes {stable_mosaic.version = 11 : i64} {
  func.func @_mlp2_norm_kernel(%arg0: i32, %arg1: memref<128x48xf32, #tpu.memory_space<vmem>>, %arg2: memref<48x1024xbf16, #tpu.memory_space<vmem>>, %arg3: memref<1x1024xf32, #tpu.memory_space<vmem>>, %arg4: memref<1024x128xbf16, #tpu.memory_space<vmem>>, %arg5: memref<1x128xf32, #tpu.memory_space<vmem>>, %arg6: memref<128x128xbf16, #tpu.memory_space<vmem>>) attributes {dimension_semantics = [#tpu.dimension_semantics<parallel>], iteration_bounds = array<i64: 1>, scalar_prefetch = 0 : i64, scratch_operands = 0 : i64, tpu.core_type = #tpu.core_type<tc>, window_params = [{transform_indices = @transform_0, window_bounds = array<i64: 128, 48>}, {pipeline_mode = #tpu.pipeline_mode<synchronous>, transform_indices = @transform_1, window_bounds = array<i64: 48, 1024>}, {pipeline_mode = #tpu.pipeline_mode<synchronous>, transform_indices = @transform_2, window_bounds = array<i64: 1, 1024>}, {pipeline_mode = #tpu.pipeline_mode<synchronous>, transform_indices = @transform_3, window_bounds = array<i64: 1024, 128>}, {pipeline_mode = #tpu.pipeline_mode<synchronous>, transform_indices = @transform_4, window_bounds = array<i64: 1, 128>}, {transform_indices = @transform_5, window_bounds = array<i64: 128, 128>}]} {
    %c0 = arith.constant 0 : index
    %c0_0 = arith.constant 0 : index
    %0 = vector.load %arg1[%c0, %c0_0] : memref<128x48xf32, #tpu.memory_space<vmem>>, vector<128x48xf32>
    %1 = arith.truncf %0 : vector<128x48xf32> to vector<128x48xbf16>
    %c0_1 = arith.constant 0 : index
    %c0_2 = arith.constant 0 : index
    %2 = vector.load %arg2[%c0_1, %c0_2] : memref<48x1024xbf16, #tpu.memory_space<vmem>>, vector<48x1024xbf16>
    %cst = arith.constant dense<0.000000e+00> : vector<128x1024xf32>
    %3 = tpu.matmul %1, %2, %cst {dimension_numbers = #tpu.dot_dimension_numbers<[1], [0], [0], [1], [0, 0, 1, 1], [], []>} : vector<128x48xbf16>, vector<48x1024xbf16>, vector<128x1024xf32> -> vector<128x1024xf32>
    %c0_3 = arith.constant 0 : index
    %c0_4 = arith.constant 0 : index
    %4 = vector.load %arg3[%c0_3, %c0_4] : memref<1x1024xf32, #tpu.memory_space<vmem>>, vector<1x1024xf32>
    %5 = vector.broadcast %4 : vector<1x1024xf32> to vector<128x1024xf32>
    %6 = arith.addf %3, %5 : vector<128x1024xf32>
    %cst_5 = arith.constant 0.000000e+00 : f32
    %7 = vector.broadcast %cst_5 : f32 to vector<128x1024xf32>
    %8 = arith.maximumf %6, %7 : vector<128x1024xf32>
    %9 = arith.truncf %8 : vector<128x1024xf32> to vector<128x1024xbf16>
    %c0_6 = arith.constant 0 : index
    %c0_7 = arith.constant 0 : index
    %10 = vector.load %arg4[%c0_6, %c0_7] : memref<1024x128xbf16, #tpu.memory_space<vmem>>, vector<1024x128xbf16>
    %cst_8 = arith.constant dense<0.000000e+00> : vector<128x128xf32>
    %11 = tpu.matmul %9, %10, %cst_8 {dimension_numbers = #tpu.dot_dimension_numbers<[1], [0], [0], [1], [0, 0, 1, 1], [], []>} : vector<128x1024xbf16>, vector<1024x128xbf16>, vector<128x128xf32> -> vector<128x128xf32>
    %c0_9 = arith.constant 0 : index
    %c0_10 = arith.constant 0 : index
    %12 = vector.load %arg5[%c0_9, %c0_10] : memref<1x128xf32, #tpu.memory_space<vmem>>, vector<1x128xf32>
    %13 = vector.broadcast %12 : vector<1x128xf32> to vector<128x128xf32>
    %14 = arith.addf %11, %13 : vector<128x128xf32>
    %15 = arith.mulf %14, %14 : vector<128x128xf32>
    %cst_11 = arith.constant dense<0.000000e+00> : vector<128xf32>
    %16 = vector.multi_reduction <add>, %15, %cst_11 [1] : vector<128x128xf32> to vector<128xf32>
    %17 = vector.shape_cast %16 : vector<128xf32> to vector<128x1xf32>
    %cst_12 = arith.constant 9.99999993E-9 : f32
    %18 = vector.broadcast %cst_12 : f32 to vector<128x1xf32>
    %19 = arith.addf %18, %17 : vector<128x1xf32>
    %20 = math.rsqrt %19 : vector<128x1xf32>
    %c128_i32 = arith.constant 128 : i32
    %21 = arith.muli %arg0, %c128_i32 : i32
    %22 = tpu.iota {dimensions = array<i32: 0>} : vector<128x1xi32>
    %23 = vector.broadcast %21 : i32 to vector<128x1xi32>
    %24 = arith.addi %22, %23 : vector<128x1xi32>
    %c16_i32 = arith.constant 16 : i32
    %25 = vector.broadcast %c16_i32 : i32 to vector<128x1xi32>
    %26 = arith.cmpi slt, %24, %25 : vector<128x1xi32>
    %27 = arith.extui %26 : vector<128x1xi1> to vector<128x1xi32>
    %28 = arith.sitofp %27 : vector<128x1xi32> to vector<128x1xf32>
    %29 = vector.broadcast %20 : vector<128x1xf32> to vector<128x128xf32>
    %30 = arith.mulf %14, %29 : vector<128x128xf32>
    %31 = vector.broadcast %28 : vector<128x1xf32> to vector<128x128xf32>
    %32 = arith.mulf %30, %31 : vector<128x128xf32>
    %33 = arith.truncf %32 : vector<128x128xf32> to vector<128x128xbf16>
    %c0_13 = arith.constant 0 : index
    %c0_14 = arith.constant 0 : index
    %34 = vector.load %arg6[%c0_13, %c0_14] : memref<128x128xbf16, #tpu.memory_space<vmem>>, vector<128x128xbf16>
    tpu.vector_store %arg6[%c0_13, %c0_14], %33 {strides = array<i32>} : memref<128x128xbf16, #tpu.memory_space<vmem>>, vector<128x128xbf16>,
    return
  }
  func.func @transform_0(%arg0: i32) -> (i32, i32) {
    %c0_i32 = arith.constant 0 : i32
    %c0_i32_0 = arith.constant 0 : i32
    return %arg0, %c0_i32 : i32, i32
  }
  func.func @transform_1(%arg0: i32) -> (i32, i32) {
    %c0_i32 = arith.constant 0 : i32
    %c0_i32_0 = arith.constant 0 : i32
    %c0_i32_1 = arith.constant 0 : i32
    return %c0_i32, %c0_i32_0 : i32, i32
  }
  func.func @transform_2(%arg0: i32) -> (i32, i32) {
    %c0_i32 = arith.constant 0 : i32
    %c0_i32_0 = arith.constant 0 : i32
    %c0_i32_1 = arith.constant 0 : i32
    return %c0_i32, %c0_i32_0 : i32, i32
  }
  func.func @transform_3(%arg0: i32) -> (i32, i32) {
    %c0_i32 = arith.constant 0 : i32
    %c0_i32_0 = arith.constant 0 : i32
    %c0_i32_1 = arith.constant 0 : i32
    return %c0_i32, %c0_i32_0 : i32, i32
  }
  func.func @transform_4(%arg0: i32) -> (i32, i32) {
    %c0_i32 = arith.constant 0 : i32
    %c0_i32_0 = arith.constant 0 : i32
    %c0_i32_1 = arith.constant 0 : i32
    return %c0_i32, %c0_i32_0 : i32, i32
  }
  func.func @transform_5(%arg0: i32) -> (i32, i32) {
    %c0_i32 = arith.constant 0 : i32
    %c0_i32_0 = arith.constant 0 : i32
    return %arg0, %c0_i32 : i32, i32
  }
}

module attributes {stable_mosaic.version = 11 : i64} {
  func.func @_infonce_pair_kernel(%arg0: i32, %arg1: memref<8x128xf32, #tpu.memory_space<vmem>>, %arg2: memref<8x128xbf16, #tpu.memory_space<vmem>>, %arg3: memref<128x128xbf16, #tpu.memory_space<vmem>>, %arg4: memref<128x128xbf16, #tpu.memory_space<vmem>>, %arg5: memref<1x1xf32, #tpu.memory_space<vmem>>, %arg6: memref<1x1xf32, #tpu.memory_space<vmem>>, %arg7: memref<1x1xf32, #tpu.memory_space<vmem>>, %arg8: memref<8x1xf32, #tpu.memory_space<vmem>>, %arg9: memref<8x1xf32, #tpu.memory_space<vmem>>) attributes {dimension_semantics = [#tpu.dimension_semantics<arbitrary>], iteration_bounds = array<i64: 1>, scalar_prefetch = 0 : i64, scratch_operands = 3 : i64, tpu.core_type = #tpu.core_type<tc>, window_params = [{pipeline_mode = #tpu.pipeline_mode<synchronous>, transform_indices = @transform_0, window_bounds = array<i64: 8, 128>}, {pipeline_mode = #tpu.pipeline_mode<synchronous>, transform_indices = @transform_1, window_bounds = array<i64: 8, 128>}, {transform_indices = @transform_2, window_bounds = array<i64: 128, 128>}, {transform_indices = @transform_3, window_bounds = array<i64: 128, 128>}, {pipeline_mode = #tpu.pipeline_mode<synchronous>, transform_indices = @transform_4, window_bounds = array<i64: 1, 1>}, {pipeline_mode = #tpu.pipeline_mode<synchronous>, transform_indices = @transform_5, window_bounds = array<i64: 1, 1>}]} {
    %c0_i32 = arith.constant 0 : i32
    %0 = arith.cmpi eq, %arg0, %c0_i32 : i32
    %1 = arith.extui %0 : i1 to i32
    %c0_i32_0 = arith.constant 0 : i32
    %2 = arith.cmpi ne, %1, %c0_i32_0 : i32
    scf.if %2 {
      %c0_7 = arith.constant 0 : index
      %c0_8 = arith.constant 0 : index
      %14 = vector.load %arg1[%c0_7, %c0_8] : memref<8x128xf32, #tpu.memory_space<vmem>>, vector<8x128xf32>
      %c0_9 = arith.constant 0 : index
      %c0_10 = arith.constant 0 : index
      %15 = vector.load %arg2[%c0_9, %c0_10] : memref<8x128xbf16, #tpu.memory_space<vmem>>, vector<8x128xbf16>
      %16 = arith.extf %15 : vector<8x128xbf16> to vector<8x128xf32>
      %17 = arith.mulf %14, %16 : vector<8x128xf32>
      %18 = math.exp %17 : vector<8x128xf32>
      %19 = vector.shape_cast %18 : vector<8x128xf32> to vector<1x8x128xf32>
      %cst = arith.constant dense<0.000000e+00> : vector<1xf32>
      %20 = vector.multi_reduction <add>, %19, %cst [1, 2] : vector<1x8x128xf32> to vector<1xf32>
      %21 = vector.shape_cast %20 : vector<1xf32> to vector<1x1x1xf32>
      %22 = vector.extract %21[0, 0, 0] : f32 from vector<1x1x1xf32>
      %23 = vector.broadcast %22 : f32 to vector<1x1xf32>
      %cst_11 = arith.constant 7.600000e+02 : f32
      %24 = vector.broadcast %cst_11 : f32 to vector<1x1xf32>
      %25 = arith.subf %23, %24 : vector<1x1xf32>
      %c0_12 = arith.constant 0 : index
      %c0_13 = arith.constant 0 : index
      %26 = vector.load %arg7[%c0_12, %c0_13] : memref<1x1xf32, #tpu.memory_space<vmem>>, vector<1x1xf32>
      tpu.vector_store %arg7[%c0_12, %c0_13], %25 {strides = array<i32>} : memref<1x1xf32, #tpu.memory_space<vmem>>, vector<1x1xf32>,
      %cst_14 = arith.constant 0.000000e+00 : f32
      %27 = vector.broadcast %cst_14 : f32 to vector<8x1xf32>
      %c0_15 = arith.constant 0 : index
      %c0_16 = arith.constant 0 : index
      %28 = vector.load %arg8[%c0_15, %c0_16] : memref<8x1xf32, #tpu.memory_space<vmem>>, vector<8x1xf32>
      tpu.vector_store %arg8[%c0_15, %c0_16], %27 {strides = array<i32>} : memref<8x1xf32, #tpu.memory_space<vmem>>, vector<8x1xf32>,
      %cst_17 = arith.constant 0.000000e+00 : f32
      %29 = vector.broadcast %cst_17 : f32 to vector<8x1xf32>
      %c0_18 = arith.constant 0 : index
      %c0_19 = arith.constant 0 : index
      %30 = vector.load %arg9[%c0_18, %c0_19] : memref<8x1xf32, #tpu.memory_space<vmem>>, vector<8x1xf32>
      tpu.vector_store %arg9[%c0_18, %c0_19], %29 {strides = array<i32>} : memref<8x1xf32, #tpu.memory_space<vmem>>, vector<8x1xf32>,
    } else {
    }
    %c0 = arith.constant 0 : index
    %c0_1 = arith.constant 0 : index
    %3 = vector.load %arg1[%c0, %c0_1] : memref<8x128xf32, #tpu.memory_space<vmem>>, vector<8x128xf32>
    %4 = arith.truncf %3 : vector<8x128xf32> to vector<8x128xbf16>
    %c1_i32 = arith.constant 1 : i32
    %5 = arith.cmpi slt, %arg0, %c1_i32 : i32
    %6 = arith.extui %5 : i1 to i32
    %c0_i32_2 = arith.constant 0 : i32
    %7 = arith.cmpi ne, %6, %c0_i32_2 : i32
    scf.if %7 {
      %c0_7 = arith.constant 0 : index
      %c0_8 = arith.constant 0 : index
      %14 = vector.load %arg3[%c0_7, %c0_8] : memref<128x128xbf16, #tpu.memory_space<vmem>>, vector<128x128xbf16>
      %cst = arith.constant dense<0.000000e+00> : vector<8x128xf32>
      %15 = tpu.matmul %4, %14, %cst {dimension_numbers = #tpu.dot_dimension_numbers<[1], [1], [0], [0], [0, 0, 1, 0], [], []>} : vector<8x128xbf16>, vector<128x128xbf16>, vector<8x128xf32> -> vector<8x128xf32>
      %c0_9 = arith.constant 0 : index
      %c0_10 = arith.constant 0 : index
      %16 = vector.load %arg8[%c0_9, %c0_10] : memref<8x1xf32, #tpu.memory_space<vmem>>, vector<8x1xf32>
      %17 = math.exp %15 : vector<8x128xf32>
      %cst_11 = arith.constant dense<0.000000e+00> : vector<8xf32>
      %18 = vector.multi_reduction <add>, %17, %cst_11 [1] : vector<8x128xf32> to vector<8xf32>
      %19 = vector.shape_cast %18 : vector<8xf32> to vector<8x1xf32>
      %20 = arith.addf %16, %19 : vector<8x1xf32>
      %c0_12 = arith.constant 0 : index
      %c0_13 = arith.constant 0 : index
      %21 = vector.load %arg8[%c0_12, %c0_13] : memref<8x1xf32, #tpu.memory_space<vmem>>, vector<8x1xf32>
      tpu.vector_store %arg8[%c0_12, %c0_13], %20 {strides = array<i32>} : memref<8x1xf32, #tpu.memory_space<vmem>>, vector<8x1xf32>,
    } else {
    }
    %c1_i32_3 = arith.constant 1 : i32
    %8 = arith.cmpi slt, %arg0, %c1_i32_3 : i32
    %9 = arith.extui %8 : i1 to i32
    %c0_i32_4 = arith.constant 0 : i32
    %10 = arith.cmpi ne, %9, %c0_i32_4 : i32
    scf.if %10 {
      %c0_7 = arith.constant 0 : index
      %c0_8 = arith.constant 0 : index
      %14 = vector.load %arg4[%c0_7, %c0_8] : memref<128x128xbf16, #tpu.memory_space<vmem>>, vector<128x128xbf16>
      %cst = arith.constant dense<0.000000e+00> : vector<8x128xf32>
      %15 = tpu.matmul %4, %14, %cst {dimension_numbers = #tpu.dot_dimension_numbers<[1], [1], [0], [0], [0, 0, 1, 0], [], []>} : vector<8x128xbf16>, vector<128x128xbf16>, vector<8x128xf32> -> vector<8x128xf32>
      %c0_9 = arith.constant 0 : index
      %c0_10 = arith.constant 0 : index
      %16 = vector.load %arg9[%c0_9, %c0_10] : memref<8x1xf32, #tpu.memory_space<vmem>>, vector<8x1xf32>
      %17 = math.exp %15 : vector<8x128xf32>
      %cst_11 = arith.constant dense<0.000000e+00> : vector<8xf32>
      %18 = vector.multi_reduction <add>, %17, %cst_11 [1] : vector<8x128xf32> to vector<8xf32>
      %19 = vector.shape_cast %18 : vector<8xf32> to vector<8x1xf32>
      %20 = arith.addf %16, %19 : vector<8x1xf32>
      %c0_12 = arith.constant 0 : index
      %c0_13 = arith.constant 0 : index
      %21 = vector.load %arg9[%c0_12, %c0_13] : memref<8x1xf32, #tpu.memory_space<vmem>>, vector<8x1xf32>
      tpu.vector_store %arg9[%c0_12, %c0_13], %20 {strides = array<i32>} : memref<8x1xf32, #tpu.memory_space<vmem>>, vector<8x1xf32>,
    } else {
    }
    %c0_i32_5 = arith.constant 0 : i32
    %11 = arith.cmpi eq, %arg0, %c0_i32_5 : i32
    %12 = arith.extui %11 : i1 to i32
    %c0_i32_6 = arith.constant 0 : i32
    %13 = arith.cmpi ne, %12, %c0_i32_6 : i32
    scf.if %13 {
      %c0_7 = arith.constant 0 : index
      %c0_8 = arith.constant 0 : index
      %14 = vector.load %arg7[%c0_7, %c0_8] : memref<1x1xf32, #tpu.memory_space<vmem>>, vector<1x1xf32>
      %c0_9 = arith.constant 0 : index
      %c0_10 = arith.constant 0 : index
      %15 = vector.load %arg8[%c0_9, %c0_10] : memref<8x1xf32, #tpu.memory_space<vmem>>, vector<8x1xf32>
      %cst = arith.constant 1.120000e+02 : f32
      %16 = vector.broadcast %cst : f32 to vector<8x1xf32>
      %17 = arith.subf %15, %16 : vector<8x1xf32>
      %c0_11 = arith.constant 0 : index
      %c0_12 = arith.constant 0 : index
      %18 = vector.load %arg9[%c0_11, %c0_12] : memref<8x1xf32, #tpu.memory_space<vmem>>, vector<8x1xf32>
      %cst_13 = arith.constant 9.600000e+01 : f32
      %19 = vector.broadcast %cst_13 : f32 to vector<8x1xf32>
      %20 = arith.subf %18, %19 : vector<8x1xf32>
      %cst_14 = arith.constant 9.99999993E-9 : f32
      %21 = vector.broadcast %cst_14 : f32 to vector<8x1xf32>
      %22 = arith.addf %17, %21 : vector<8x1xf32>
      %23 = vector.broadcast %14 : vector<1x1xf32> to vector<8x1xf32>
      %24 = arith.divf %23, %22 : vector<8x1xf32>
      %cst_15 = arith.constant 9.99999993E-9 : f32
      %25 = vector.broadcast %cst_15 : f32 to vector<8x1xf32>
      %26 = arith.addf %24, %25 : vector<8x1xf32>
      %27 = math.log %26 : vector<8x1xf32>
      %cst_16 = arith.constant 0.000000e+00 : f32
      %28 = vector.broadcast %cst_16 : f32 to vector<8x1xf32>
      %29 = arith.subf %28, %27 : vector<8x1xf32>
      %30 = vector.shape_cast %29 : vector<8x1xf32> to vector<1x8x1xf32>
      %cst_17 = arith.constant dense<0.000000e+00> : vector<1xf32>
      %31 = vector.multi_reduction <add>, %30, %cst_17 [1, 2] : vector<1x8x1xf32> to vector<1xf32>
      %32 = vector.shape_cast %31 : vector<1xf32> to vector<1x1x1xf32>
      %33 = vector.extract %32[0, 0, 0] : f32 from vector<1x1x1xf32>
      %34 = vector.broadcast %33 : f32 to vector<1x1xf32>
      %cst_18 = arith.constant 8.000000e+00 : f32
      %35 = vector.broadcast %cst_18 : f32 to vector<1x1xf32>
      %36 = arith.divf %34, %35 : vector<1x1xf32>
      %c0_19 = arith.constant 0 : index
      %c0_20 = arith.constant 0 : index
      %37 = vector.load %arg5[%c0_19, %c0_20] : memref<1x1xf32, #tpu.memory_space<vmem>>, vector<1x1xf32>
      tpu.vector_store %arg5[%c0_19, %c0_20], %36 {strides = array<i32>} : memref<1x1xf32, #tpu.memory_space<vmem>>, vector<1x1xf32>,
      %cst_21 = arith.constant 9.99999993E-9 : f32
      %38 = vector.broadcast %cst_21 : f32 to vector<8x1xf32>
      %39 = arith.addf %20, %38 : vector<8x1xf32>
      %40 = vector.broadcast %14 : vector<1x1xf32> to vector<8x1xf32>
      %41 = arith.divf %40, %39 : vector<8x1xf32>
      %cst_22 = arith.constant 9.99999993E-9 : f32
      %42 = vector.broadcast %cst_22 : f32 to vector<8x1xf32>
      %43 = arith.addf %41, %42 : vector<8x1xf32>
      %44 = math.log %43 : vector<8x1xf32>
      %cst_23 = arith.constant 0.000000e+00 : f32
      %45 = vector.broadcast %cst_23 : f32 to vector<8x1xf32>
      %46 = arith.subf %45, %44 : vector<8x1xf32>
      %47 = vector.shape_cast %46 : vector<8x1xf32> to vector<1x8x1xf32>
      %cst_24 = arith.constant dense<0.000000e+00> : vector<1xf32>
      %48 = vector.multi_reduction <add>, %47, %cst_24 [1, 2] : vector<1x8x1xf32> to vector<1xf32>
      %49 = vector.shape_cast %48 : vector<1xf32> to vector<1x1x1xf32>
      %50 = vector.extract %49[0, 0, 0] : f32 from vector<1x1x1xf32>
      %51 = vector.broadcast %50 : f32 to vector<1x1xf32>
      %cst_25 = arith.constant 8.000000e+00 : f32
      %52 = vector.broadcast %cst_25 : f32 to vector<1x1xf32>
      %53 = arith.divf %51, %52 : vector<1x1xf32>
      %c0_26 = arith.constant 0 : index
      %c0_27 = arith.constant 0 : index
      %54 = vector.load %arg6[%c0_26, %c0_27] : memref<1x1xf32, #tpu.memory_space<vmem>>, vector<1x1xf32>
      tpu.vector_store %arg6[%c0_26, %c0_27], %53 {strides = array<i32>} : memref<1x1xf32, #tpu.memory_space<vmem>>, vector<1x1xf32>,
    } else {
    }
    return
  }
  func.func @transform_0(%arg0: i32) -> (i32, i32) {
    %c0_i32 = arith.constant 0 : i32
    %c0_i32_0 = arith.constant 0 : i32
    %c0_i32_1 = arith.constant 0 : i32
    return %c0_i32, %c0_i32_0 : i32, i32
  }
  func.func @transform_1(%arg0: i32) -> (i32, i32) {
    %c0_i32 = arith.constant 0 : i32
    %c0_i32_0 = arith.constant 0 : i32
    %c0_i32_1 = arith.constant 0 : i32
    return %c0_i32, %c0_i32_0 : i32, i32
  }
  func.func @transform_2(%arg0: i32) -> (i32, i32) {
    %c0_i32 = arith.constant 0 : i32
    %0 = arith.minsi %arg0, %c0_i32 : i32
    %c0_i32_0 = arith.constant 0 : i32
    %c0_i32_1 = arith.constant 0 : i32
    return %0, %c0_i32_0 : i32, i32
  }
  func.func @transform_3(%arg0: i32) -> (i32, i32) {
    %c0_i32 = arith.constant 0 : i32
    %0 = arith.minsi %arg0, %c0_i32 : i32
    %c0_i32_0 = arith.constant 0 : i32
    %c0_i32_1 = arith.constant 0 : i32
    return %0, %c0_i32_0 : i32, i32
  }
  func.func @transform_4(%arg0: i32) -> (i32, i32) {
    %c0_i32 = arith.constant 0 : i32
    %c0_i32_0 = arith.constant 0 : i32
    %c0_i32_1 = arith.constant 0 : i32
    return %c0_i32, %c0_i32_0 : i32, i32
  }
  func.func @transform_5(%arg0: i32) -> (i32, i32) {
    %c0_i32 = arith.constant 0 : i32
    %c0_i32_0 = arith.constant 0 : i32
    %c0_i32_1 = arith.constant 0 : i32
    return %c0_i32, %c0_i32_0 : i32, i32
  }
}

module attributes {stable_mosaic.version = 11 : i64} {
  func.func @_infonce_pair_kernel(%arg0: i32, %arg1: memref<8x128xf32, #tpu.memory_space<vmem>>, %arg2: memref<8x128xbf16, #tpu.memory_space<vmem>>, %arg3: memref<128x128xbf16, #tpu.memory_space<vmem>>, %arg4: memref<128x128xbf16, #tpu.memory_space<vmem>>, %arg5: memref<1x1xf32, #tpu.memory_space<vmem>>, %arg6: memref<1x1xf32, #tpu.memory_space<vmem>>, %arg7: memref<1x1xf32, #tpu.memory_space<vmem>>, %arg8: memref<8x1xf32, #tpu.memory_space<vmem>>, %arg9: memref<8x1xf32, #tpu.memory_space<vmem>>) attributes {dimension_semantics = [#tpu.dimension_semantics<arbitrary>], iteration_bounds = array<i64: 1>, scalar_prefetch = 0 : i64, scratch_operands = 3 : i64, tpu.core_type = #tpu.core_type<tc>, window_params = [{pipeline_mode = #tpu.pipeline_mode<synchronous>, transform_indices = @transform_0, window_bounds = array<i64: 8, 128>}, {pipeline_mode = #tpu.pipeline_mode<synchronous>, transform_indices = @transform_1, window_bounds = array<i64: 8, 128>}, {transform_indices = @transform_2, window_bounds = array<i64: 128, 128>}, {transform_indices = @transform_3, window_bounds = array<i64: 128, 128>}, {pipeline_mode = #tpu.pipeline_mode<synchronous>, transform_indices = @transform_4, window_bounds = array<i64: 1, 1>}, {pipeline_mode = #tpu.pipeline_mode<synchronous>, transform_indices = @transform_5, window_bounds = array<i64: 1, 1>}]} {
    %c0_i32 = arith.constant 0 : i32
    %0 = arith.cmpi eq, %arg0, %c0_i32 : i32
    %1 = arith.extui %0 : i1 to i32
    %c0_i32_0 = arith.constant 0 : i32
    %2 = arith.cmpi ne, %1, %c0_i32_0 : i32
    scf.if %2 {
      %c0_7 = arith.constant 0 : index
      %c0_8 = arith.constant 0 : index
      %14 = vector.load %arg1[%c0_7, %c0_8] : memref<8x128xf32, #tpu.memory_space<vmem>>, vector<8x128xf32>
      %c0_9 = arith.constant 0 : index
      %c0_10 = arith.constant 0 : index
      %15 = vector.load %arg2[%c0_9, %c0_10] : memref<8x128xbf16, #tpu.memory_space<vmem>>, vector<8x128xbf16>
      %16 = arith.extf %15 : vector<8x128xbf16> to vector<8x128xf32>
      %17 = arith.mulf %14, %16 : vector<8x128xf32>
      %18 = math.exp %17 : vector<8x128xf32>
      %19 = vector.shape_cast %18 : vector<8x128xf32> to vector<1x8x128xf32>
      %cst = arith.constant dense<0.000000e+00> : vector<1xf32>
      %20 = vector.multi_reduction <add>, %19, %cst [1, 2] : vector<1x8x128xf32> to vector<1xf32>
      %21 = vector.shape_cast %20 : vector<1xf32> to vector<1x1x1xf32>
      %22 = vector.extract %21[0, 0, 0] : f32 from vector<1x1x1xf32>
      %23 = vector.broadcast %22 : f32 to vector<1x1xf32>
      %cst_11 = arith.constant 7.680000e+02 : f32
      %24 = vector.broadcast %cst_11 : f32 to vector<1x1xf32>
      %25 = arith.subf %23, %24 : vector<1x1xf32>
      %c0_12 = arith.constant 0 : index
      %c0_13 = arith.constant 0 : index
      %26 = vector.load %arg7[%c0_12, %c0_13] : memref<1x1xf32, #tpu.memory_space<vmem>>, vector<1x1xf32>
      tpu.vector_store %arg7[%c0_12, %c0_13], %25 {strides = array<i32>} : memref<1x1xf32, #tpu.memory_space<vmem>>, vector<1x1xf32>,
      %cst_14 = arith.constant 0.000000e+00 : f32
      %27 = vector.broadcast %cst_14 : f32 to vector<8x1xf32>
      %c0_15 = arith.constant 0 : index
      %c0_16 = arith.constant 0 : index
      %28 = vector.load %arg8[%c0_15, %c0_16] : memref<8x1xf32, #tpu.memory_space<vmem>>, vector<8x1xf32>
      tpu.vector_store %arg8[%c0_15, %c0_16], %27 {strides = array<i32>} : memref<8x1xf32, #tpu.memory_space<vmem>>, vector<8x1xf32>,
      %cst_17 = arith.constant 0.000000e+00 : f32
      %29 = vector.broadcast %cst_17 : f32 to vector<8x1xf32>
      %c0_18 = arith.constant 0 : index
      %c0_19 = arith.constant 0 : index
      %30 = vector.load %arg9[%c0_18, %c0_19] : memref<8x1xf32, #tpu.memory_space<vmem>>, vector<8x1xf32>
      tpu.vector_store %arg9[%c0_18, %c0_19], %29 {strides = array<i32>} : memref<8x1xf32, #tpu.memory_space<vmem>>, vector<8x1xf32>,
    } else {
    }
    %c0 = arith.constant 0 : index
    %c0_1 = arith.constant 0 : index
    %3 = vector.load %arg1[%c0, %c0_1] : memref<8x128xf32, #tpu.memory_space<vmem>>, vector<8x128xf32>
    %4 = arith.truncf %3 : vector<8x128xf32> to vector<8x128xbf16>
    %c1_i32 = arith.constant 1 : i32
    %5 = arith.cmpi slt, %arg0, %c1_i32 : i32
    %6 = arith.extui %5 : i1 to i32
    %c0_i32_2 = arith.constant 0 : i32
    %7 = arith.cmpi ne, %6, %c0_i32_2 : i32
    scf.if %7 {
      %c0_7 = arith.constant 0 : index
      %c0_8 = arith.constant 0 : index
      %14 = vector.load %arg3[%c0_7, %c0_8] : memref<128x128xbf16, #tpu.memory_space<vmem>>, vector<128x128xbf16>
      %cst = arith.constant dense<0.000000e+00> : vector<8x128xf32>
      %15 = tpu.matmul %4, %14, %cst {dimension_numbers = #tpu.dot_dimension_numbers<[1], [1], [0], [0], [0, 0, 1, 0], [], []>} : vector<8x128xbf16>, vector<128x128xbf16>, vector<8x128xf32> -> vector<8x128xf32>
      %c0_9 = arith.constant 0 : index
      %c0_10 = arith.constant 0 : index
      %16 = vector.load %arg8[%c0_9, %c0_10] : memref<8x1xf32, #tpu.memory_space<vmem>>, vector<8x1xf32>
      %17 = math.exp %15 : vector<8x128xf32>
      %cst_11 = arith.constant dense<0.000000e+00> : vector<8xf32>
      %18 = vector.multi_reduction <add>, %17, %cst_11 [1] : vector<8x128xf32> to vector<8xf32>
      %19 = vector.shape_cast %18 : vector<8xf32> to vector<8x1xf32>
      %20 = arith.addf %16, %19 : vector<8x1xf32>
      %c0_12 = arith.constant 0 : index
      %c0_13 = arith.constant 0 : index
      %21 = vector.load %arg8[%c0_12, %c0_13] : memref<8x1xf32, #tpu.memory_space<vmem>>, vector<8x1xf32>
      tpu.vector_store %arg8[%c0_12, %c0_13], %20 {strides = array<i32>} : memref<8x1xf32, #tpu.memory_space<vmem>>, vector<8x1xf32>,
    } else {
    }
    %c1_i32_3 = arith.constant 1 : i32
    %8 = arith.cmpi slt, %arg0, %c1_i32_3 : i32
    %9 = arith.extui %8 : i1 to i32
    %c0_i32_4 = arith.constant 0 : i32
    %10 = arith.cmpi ne, %9, %c0_i32_4 : i32
    scf.if %10 {
      %c0_7 = arith.constant 0 : index
      %c0_8 = arith.constant 0 : index
      %14 = vector.load %arg4[%c0_7, %c0_8] : memref<128x128xbf16, #tpu.memory_space<vmem>>, vector<128x128xbf16>
      %cst = arith.constant dense<0.000000e+00> : vector<8x128xf32>
      %15 = tpu.matmul %4, %14, %cst {dimension_numbers = #tpu.dot_dimension_numbers<[1], [1], [0], [0], [0, 0, 1, 0], [], []>} : vector<8x128xbf16>, vector<128x128xbf16>, vector<8x128xf32> -> vector<8x128xf32>
      %c0_9 = arith.constant 0 : index
      %c0_10 = arith.constant 0 : index
      %16 = vector.load %arg9[%c0_9, %c0_10] : memref<8x1xf32, #tpu.memory_space<vmem>>, vector<8x1xf32>
      %17 = math.exp %15 : vector<8x128xf32>
      %cst_11 = arith.constant dense<0.000000e+00> : vector<8xf32>
      %18 = vector.multi_reduction <add>, %17, %cst_11 [1] : vector<8x128xf32> to vector<8xf32>
      %19 = vector.shape_cast %18 : vector<8xf32> to vector<8x1xf32>
      %20 = arith.addf %16, %19 : vector<8x1xf32>
      %c0_12 = arith.constant 0 : index
      %c0_13 = arith.constant 0 : index
      %21 = vector.load %arg9[%c0_12, %c0_13] : memref<8x1xf32, #tpu.memory_space<vmem>>, vector<8x1xf32>
      tpu.vector_store %arg9[%c0_12, %c0_13], %20 {strides = array<i32>} : memref<8x1xf32, #tpu.memory_space<vmem>>, vector<8x1xf32>,
    } else {
    }
    %c0_i32_5 = arith.constant 0 : i32
    %11 = arith.cmpi eq, %arg0, %c0_i32_5 : i32
    %12 = arith.extui %11 : i1 to i32
    %c0_i32_6 = arith.constant 0 : i32
    %13 = arith.cmpi ne, %12, %c0_i32_6 : i32
    scf.if %13 {
      %c0_7 = arith.constant 0 : index
      %c0_8 = arith.constant 0 : index
      %14 = vector.load %arg7[%c0_7, %c0_8] : memref<1x1xf32, #tpu.memory_space<vmem>>, vector<1x1xf32>
      %c0_9 = arith.constant 0 : index
      %c0_10 = arith.constant 0 : index
      %15 = vector.load %arg8[%c0_9, %c0_10] : memref<8x1xf32, #tpu.memory_space<vmem>>, vector<8x1xf32>
      %cst = arith.constant 1.120000e+02 : f32
      %16 = vector.broadcast %cst : f32 to vector<8x1xf32>
      %17 = arith.subf %15, %16 : vector<8x1xf32>
      %c0_11 = arith.constant 0 : index
      %c0_12 = arith.constant 0 : index
      %18 = vector.load %arg9[%c0_11, %c0_12] : memref<8x1xf32, #tpu.memory_space<vmem>>, vector<8x1xf32>
      %cst_13 = arith.constant 9.600000e+01 : f32
      %19 = vector.broadcast %cst_13 : f32 to vector<8x1xf32>
      %20 = arith.subf %18, %19 : vector<8x1xf32>
      %cst_14 = arith.constant 9.99999993E-9 : f32
      %21 = vector.broadcast %cst_14 : f32 to vector<8x1xf32>
      %22 = arith.addf %17, %21 : vector<8x1xf32>
      %23 = vector.broadcast %14 : vector<1x1xf32> to vector<8x1xf32>
      %24 = arith.divf %23, %22 : vector<8x1xf32>
      %cst_15 = arith.constant 9.99999993E-9 : f32
      %25 = vector.broadcast %cst_15 : f32 to vector<8x1xf32>
      %26 = arith.addf %24, %25 : vector<8x1xf32>
      %27 = math.log %26 : vector<8x1xf32>
      %cst_16 = arith.constant 0.000000e+00 : f32
      %28 = vector.broadcast %cst_16 : f32 to vector<8x1xf32>
      %29 = arith.subf %28, %27 : vector<8x1xf32>
      %30 = vector.shape_cast %29 : vector<8x1xf32> to vector<1x8x1xf32>
      %cst_17 = arith.constant dense<0.000000e+00> : vector<1xf32>
      %31 = vector.multi_reduction <add>, %30, %cst_17 [1, 2] : vector<1x8x1xf32> to vector<1xf32>
      %32 = vector.shape_cast %31 : vector<1xf32> to vector<1x1x1xf32>
      %33 = vector.extract %32[0, 0, 0] : f32 from vector<1x1x1xf32>
      %34 = vector.broadcast %33 : f32 to vector<1x1xf32>
      %cst_18 = arith.constant 8.000000e+00 : f32
      %35 = vector.broadcast %cst_18 : f32 to vector<1x1xf32>
      %36 = arith.divf %34, %35 : vector<1x1xf32>
      %c0_19 = arith.constant 0 : index
      %c0_20 = arith.constant 0 : index
      %37 = vector.load %arg5[%c0_19, %c0_20] : memref<1x1xf32, #tpu.memory_space<vmem>>, vector<1x1xf32>
      tpu.vector_store %arg5[%c0_19, %c0_20], %36 {strides = array<i32>} : memref<1x1xf32, #tpu.memory_space<vmem>>, vector<1x1xf32>,
      %cst_21 = arith.constant 9.99999993E-9 : f32
      %38 = vector.broadcast %cst_21 : f32 to vector<8x1xf32>
      %39 = arith.addf %20, %38 : vector<8x1xf32>
      %40 = vector.broadcast %14 : vector<1x1xf32> to vector<8x1xf32>
      %41 = arith.divf %40, %39 : vector<8x1xf32>
      %cst_22 = arith.constant 9.99999993E-9 : f32
      %42 = vector.broadcast %cst_22 : f32 to vector<8x1xf32>
      %43 = arith.addf %41, %42 : vector<8x1xf32>
      %44 = math.log %43 : vector<8x1xf32>
      %cst_23 = arith.constant 0.000000e+00 : f32
      %45 = vector.broadcast %cst_23 : f32 to vector<8x1xf32>
      %46 = arith.subf %45, %44 : vector<8x1xf32>
      %47 = vector.shape_cast %46 : vector<8x1xf32> to vector<1x8x1xf32>
      %cst_24 = arith.constant dense<0.000000e+00> : vector<1xf32>
      %48 = vector.multi_reduction <add>, %47, %cst_24 [1, 2] : vector<1x8x1xf32> to vector<1xf32>
      %49 = vector.shape_cast %48 : vector<1xf32> to vector<1x1x1xf32>
      %50 = vector.extract %49[0, 0, 0] : f32 from vector<1x1x1xf32>
      %51 = vector.broadcast %50 : f32 to vector<1x1xf32>
      %cst_25 = arith.constant 8.000000e+00 : f32
      %52 = vector.broadcast %cst_25 : f32 to vector<1x1xf32>
      %53 = arith.divf %51, %52 : vector<1x1xf32>
      %c0_26 = arith.constant 0 : index
      %c0_27 = arith.constant 0 : index
      %54 = vector.load %arg6[%c0_26, %c0_27] : memref<1x1xf32, #tpu.memory_space<vmem>>, vector<1x1xf32>
      tpu.vector_store %arg6[%c0_26, %c0_27], %53 {strides = array<i32>} : memref<1x1xf32, #tpu.memory_space<vmem>>, vector<1x1xf32>,
    } else {
    }
    return
  }
  func.func @transform_0(%arg0: i32) -> (i32, i32) {
    %c0_i32 = arith.constant 0 : i32
    %c0_i32_0 = arith.constant 0 : i32
    %c0_i32_1 = arith.constant 0 : i32
    return %c0_i32, %c0_i32_0 : i32, i32
  }
  func.func @transform_1(%arg0: i32) -> (i32, i32) {
    %c0_i32 = arith.constant 0 : i32
    %c0_i32_0 = arith.constant 0 : i32
    %c0_i32_1 = arith.constant 0 : i32
    return %c0_i32, %c0_i32_0 : i32, i32
  }
  func.func @transform_2(%arg0: i32) -> (i32, i32) {
    %c0_i32 = arith.constant 0 : i32
    %0 = arith.minsi %arg0, %c0_i32 : i32
    %c0_i32_0 = arith.constant 0 : i32
    %c0_i32_1 = arith.constant 0 : i32
    return %0, %c0_i32_0 : i32, i32
  }
  func.func @transform_3(%arg0: i32) -> (i32, i32) {
    %c0_i32 = arith.constant 0 : i32
    %0 = arith.minsi %arg0, %c0_i32 : i32
    %c0_i32_0 = arith.constant 0 : i32
    %c0_i32_1 = arith.constant 0 : i32
    return %0, %c0_i32_0 : i32, i32
  }
  func.func @transform_4(%arg0: i32) -> (i32, i32) {
    %c0_i32 = arith.constant 0 : i32
    %c0_i32_0 = arith.constant 0 : i32
    %c0_i32_1 = arith.constant 0 : i32
    return %c0_i32, %c0_i32_0 : i32, i32
  }
  func.func @transform_5(%arg0: i32) -> (i32, i32) {
    %c0_i32 = arith.constant 0 : i32
    %c0_i32_0 = arith.constant 0 : i32
    %c0_i32_1 = arith.constant 0 : i32
    return %c0_i32, %c0_i32_0 : i32, i32
  }
}

module attributes {stable_mosaic.version = 11 : i64} {
  func.func @_mlp2_norm_kernel(%arg0: i32, %arg1: memref<128x64xf32, #tpu.memory_space<vmem>>, %arg2: memref<64x48xbf16, #tpu.memory_space<vmem>>, %arg3: memref<1x48xf32, #tpu.memory_space<vmem>>, %arg4: memref<48x128xbf16, #tpu.memory_space<vmem>>, %arg5: memref<1x128xf32, #tpu.memory_space<vmem>>, %arg6: memref<128x128xbf16, #tpu.memory_space<vmem>>) attributes {dimension_semantics = [#tpu.dimension_semantics<parallel>], iteration_bounds = array<i64: 1>, scalar_prefetch = 0 : i64, scratch_operands = 0 : i64, tpu.core_type = #tpu.core_type<tc>, window_params = [{transform_indices = @transform_0, window_bounds = array<i64: 128, 64>}, {pipeline_mode = #tpu.pipeline_mode<synchronous>, transform_indices = @transform_1, window_bounds = array<i64: 64, 48>}, {pipeline_mode = #tpu.pipeline_mode<synchronous>, transform_indices = @transform_2, window_bounds = array<i64: 1, 48>}, {pipeline_mode = #tpu.pipeline_mode<synchronous>, transform_indices = @transform_3, window_bounds = array<i64: 48, 128>}, {pipeline_mode = #tpu.pipeline_mode<synchronous>, transform_indices = @transform_4, window_bounds = array<i64: 1, 128>}, {transform_indices = @transform_5, window_bounds = array<i64: 128, 128>}]} {
    %c0 = arith.constant 0 : index
    %c0_0 = arith.constant 0 : index
    %0 = vector.load %arg1[%c0, %c0_0] : memref<128x64xf32, #tpu.memory_space<vmem>>, vector<128x64xf32>
    %1 = arith.truncf %0 : vector<128x64xf32> to vector<128x64xbf16>
    %c0_1 = arith.constant 0 : index
    %c0_2 = arith.constant 0 : index
    %2 = vector.load %arg2[%c0_1, %c0_2] : memref<64x48xbf16, #tpu.memory_space<vmem>>, vector<64x48xbf16>
    %cst = arith.constant dense<0.000000e+00> : vector<128x48xf32>
    %3 = tpu.matmul %1, %2, %cst {dimension_numbers = #tpu.dot_dimension_numbers<[1], [0], [0], [1], [0, 0, 1, 1], [], []>} : vector<128x64xbf16>, vector<64x48xbf16>, vector<128x48xf32> -> vector<128x48xf32>
    %c0_3 = arith.constant 0 : index
    %c0_4 = arith.constant 0 : index
    %4 = vector.load %arg3[%c0_3, %c0_4] : memref<1x48xf32, #tpu.memory_space<vmem>>, vector<1x48xf32>
    %5 = vector.broadcast %4 : vector<1x48xf32> to vector<128x48xf32>
    %6 = arith.addf %3, %5 : vector<128x48xf32>
    %cst_5 = arith.constant 0.000000e+00 : f32
    %7 = vector.broadcast %cst_5 : f32 to vector<128x48xf32>
    %8 = arith.maximumf %6, %7 : vector<128x48xf32>
    %9 = arith.truncf %8 : vector<128x48xf32> to vector<128x48xbf16>
    %c0_6 = arith.constant 0 : index
    %c0_7 = arith.constant 0 : index
    %10 = vector.load %arg4[%c0_6, %c0_7] : memref<48x128xbf16, #tpu.memory_space<vmem>>, vector<48x128xbf16>
    %cst_8 = arith.constant dense<0.000000e+00> : vector<128x128xf32>
    %11 = tpu.matmul %9, %10, %cst_8 {dimension_numbers = #tpu.dot_dimension_numbers<[1], [0], [0], [1], [0, 0, 1, 1], [], []>} : vector<128x48xbf16>, vector<48x128xbf16>, vector<128x128xf32> -> vector<128x128xf32>
    %c0_9 = arith.constant 0 : index
    %c0_10 = arith.constant 0 : index
    %12 = vector.load %arg5[%c0_9, %c0_10] : memref<1x128xf32, #tpu.memory_space<vmem>>, vector<1x128xf32>
    %13 = vector.broadcast %12 : vector<1x128xf32> to vector<128x128xf32>
    %14 = arith.addf %11, %13 : vector<128x128xf32>
    %15 = arith.mulf %14, %14 : vector<128x128xf32>
    %cst_11 = arith.constant dense<0.000000e+00> : vector<128xf32>
    %16 = vector.multi_reduction <add>, %15, %cst_11 [1] : vector<128x128xf32> to vector<128xf32>
    %17 = vector.shape_cast %16 : vector<128xf32> to vector<128x1xf32>
    %cst_12 = arith.constant 9.99999993E-9 : f32
    %18 = vector.broadcast %cst_12 : f32 to vector<128x1xf32>
    %19 = arith.addf %18, %17 : vector<128x1xf32>
    %20 = math.rsqrt %19 : vector<128x1xf32>
    %c128_i32 = arith.constant 128 : i32
    %21 = arith.muli %arg0, %c128_i32 : i32
    %22 = tpu.iota {dimensions = array<i32: 0>} : vector<128x1xi32>
    %23 = vector.broadcast %21 : i32 to vector<128x1xi32>
    %24 = arith.addi %22, %23 : vector<128x1xi32>
    %c16_i32 = arith.constant 16 : i32
    %25 = vector.broadcast %c16_i32 : i32 to vector<128x1xi32>
    %26 = arith.cmpi slt, %24, %25 : vector<128x1xi32>
    %27 = arith.extui %26 : vector<128x1xi1> to vector<128x1xi32>
    %28 = arith.sitofp %27 : vector<128x1xi32> to vector<128x1xf32>
    %29 = vector.broadcast %20 : vector<128x1xf32> to vector<128x128xf32>
    %30 = arith.mulf %14, %29 : vector<128x128xf32>
    %31 = vector.broadcast %28 : vector<128x1xf32> to vector<128x128xf32>
    %32 = arith.mulf %30, %31 : vector<128x128xf32>
    %33 = arith.truncf %32 : vector<128x128xf32> to vector<128x128xbf16>
    %c0_13 = arith.constant 0 : index
    %c0_14 = arith.constant 0 : index
    %34 = vector.load %arg6[%c0_13, %c0_14] : memref<128x128xbf16, #tpu.memory_space<vmem>>, vector<128x128xbf16>
    tpu.vector_store %arg6[%c0_13, %c0_14], %33 {strides = array<i32>} : memref<128x128xbf16, #tpu.memory_space<vmem>>, vector<128x128xbf16>,
    return
  }
  func.func @transform_0(%arg0: i32) -> (i32, i32) {
    %c0_i32 = arith.constant 0 : i32
    %c0_i32_0 = arith.constant 0 : i32
    return %arg0, %c0_i32 : i32, i32
  }
  func.func @transform_1(%arg0: i32) -> (i32, i32) {
    %c0_i32 = arith.constant 0 : i32
    %c0_i32_0 = arith.constant 0 : i32
    %c0_i32_1 = arith.constant 0 : i32
    return %c0_i32, %c0_i32_0 : i32, i32
  }
  func.func @transform_2(%arg0: i32) -> (i32, i32) {
    %c0_i32 = arith.constant 0 : i32
    %c0_i32_0 = arith.constant 0 : i32
    %c0_i32_1 = arith.constant 0 : i32
    return %c0_i32, %c0_i32_0 : i32, i32
  }
  func.func @transform_3(%arg0: i32) -> (i32, i32) {
    %c0_i32 = arith.constant 0 : i32
    %c0_i32_0 = arith.constant 0 : i32
    %c0_i32_1 = arith.constant 0 : i32
    return %c0_i32, %c0_i32_0 : i32, i32
  }
  func.func @transform_4(%arg0: i32) -> (i32, i32) {
    %c0_i32 = arith.constant 0 : i32
    %c0_i32_0 = arith.constant 0 : i32
    %c0_i32_1 = arith.constant 0 : i32
    return %c0_i32, %c0_i32_0 : i32, i32
  }
  func.func @transform_5(%arg0: i32) -> (i32, i32) {
    %c0_i32 = arith.constant 0 : i32
    %c0_i32_0 = arith.constant 0 : i32
    return %arg0, %c0_i32 : i32, i32
  }
}

module attributes {stable_mosaic.version = 11 : i64} {
  func.func @_prednet_kernel(%arg0: i32, %arg1: memref<8x32xf32, #tpu.memory_space<vmem>>, %arg2: memref<8x32xf32, #tpu.memory_space<vmem>>, %arg3: memref<8x1xf32, #tpu.memory_space<vmem>>, %arg4: memref<8x32xf32, #tpu.memory_space<vmem>>, %arg5: memref<32x512xbf16, #tpu.memory_space<vmem>>, %arg6: memref<1x512xf32, #tpu.memory_space<vmem>>, %arg7: memref<512x256xbf16, #tpu.memory_space<vmem>>, %arg8: memref<1x256xf32, #tpu.memory_space<vmem>>, %arg9: memref<1x256xf32, #tpu.memory_space<vmem>>, %arg10: memref<1x1xf32, #tpu.memory_space<vmem>>, %arg11: memref<8x1xf32, #tpu.memory_space<vmem>>) attributes {dimension_semantics = [#tpu.dimension_semantics<parallel>], iteration_bounds = array<i64: 1>, scalar_prefetch = 0 : i64, scratch_operands = 0 : i64, tpu.core_type = #tpu.core_type<tc>, window_params = [{transform_indices = @transform_0, window_bounds = array<i64: 8, 32>}, {transform_indices = @transform_1, window_bounds = array<i64: 8, 32>}, {transform_indices = @transform_2, window_bounds = array<i64: 8, 1>}, {transform_indices = @transform_3, window_bounds = array<i64: 8, 32>}, {pipeline_mode = #tpu.pipeline_mode<synchronous>, transform_indices = @transform_4, window_bounds = array<i64: 32, 512>}, {pipeline_mode = #tpu.pipeline_mode<synchronous>, transform_indices = @transform_5, window_bounds = array<i64: 1, 512>}, {pipeline_mode = #tpu.pipeline_mode<synchronous>, transform_indices = @transform_6, window_bounds = array<i64: 512, 256>}, {pipeline_mode = #tpu.pipeline_mode<synchronous>, transform_indices = @transform_7, window_bounds = array<i64: 1, 256>}, {pipeline_mode = #tpu.pipeline_mode<synchronous>, transform_indices = @transform_8, window_bounds = array<i64: 1, 256>}, {pipeline_mode = #tpu.pipeline_mode<synchronous>, transform_indices = @transform_9, window_bounds = array<i64: 1, 1>}, {transform_indices = @transform_10, window_bounds = array<i64: 8, 1>}]} {
    %c0 = arith.constant 0 : index
    %c0_0 = arith.constant 0 : index
    %0 = vector.load %arg1[%c0, %c0_0] : memref<8x32xf32, #tpu.memory_space<vmem>>, vector<8x32xf32>
    %1 = arith.negf %0 : vector<8x32xf32>
    %2 = math.exp %1 : vector<8x32xf32>
    %cst = arith.constant 1.000000e+00 : f32
    %3 = vector.broadcast %cst : f32 to vector<8x32xf32>
    %4 = arith.addf %3, %2 : vector<8x32xf32>
    %5 = arith.divf %3, %4 : vector<8x32xf32>
    %c0_1 = arith.constant 0 : index
    %c0_2 = arith.constant 0 : index
    %6 = vector.load %arg2[%c0_1, %c0_2] : memref<8x32xf32, #tpu.memory_space<vmem>>, vector<8x32xf32>
    %7 = arith.negf %6 : vector<8x32xf32>
    %8 = math.exp %7 : vector<8x32xf32>
    %cst_3 = arith.constant 1.000000e+00 : f32
    %9 = vector.broadcast %cst_3 : f32 to vector<8x32xf32>
    %10 = arith.addf %9, %8 : vector<8x32xf32>
    %11 = arith.divf %9, %10 : vector<8x32xf32>
    %c0_4 = arith.constant 0 : index
    %c0_5 = arith.constant 0 : index
    %12 = vector.load %arg3[%c0_4, %c0_5] : memref<8x1xf32, #tpu.memory_space<vmem>>, vector<8x1xf32>
    %13 = arith.negf %12 : vector<8x1xf32>
    %14 = math.exp %13 : vector<8x1xf32>
    %cst_6 = arith.constant 1.000000e+00 : f32
    %15 = vector.broadcast %cst_6 : f32 to vector<8x1xf32>
    %16 = arith.addf %15, %14 : vector<8x1xf32>
    %17 = arith.divf %15, %16 : vector<8x1xf32>
    %c0_7 = arith.constant 0 : index
    %c0_8 = arith.constant 0 : index
    %18 = vector.load %arg4[%c0_7, %c0_8] : memref<8x32xf32, #tpu.memory_space<vmem>>, vector<8x32xf32>
    %19 = arith.subf %5, %11 : vector<8x32xf32>
    %20 = arith.mulf %18, %19 : vector<8x32xf32>
    %21 = vector.broadcast %17 : vector<8x1xf32> to vector<8x32xf32>
    %22 = arith.mulf %20, %21 : vector<8x32xf32>
    %23 = arith.truncf %22 : vector<8x32xf32> to vector<8x32xbf16>
    %c0_9 = arith.constant 0 : index
    %c0_10 = arith.constant 0 : index
    %24 = vector.load %arg5[%c0_9, %c0_10] : memref<32x512xbf16, #tpu.memory_space<vmem>>, vector<32x512xbf16>
    %cst_11 = arith.constant dense<0.000000e+00> : vector<8x512xf32>
    %25 = tpu.matmul %23, %24, %cst_11 {dimension_numbers = #tpu.dot_dimension_numbers<[1], [0], [0], [1], [0, 0, 1, 1], [], []>} : vector<8x32xbf16>, vector<32x512xbf16>, vector<8x512xf32> -> vector<8x512xf32>
    %c0_12 = arith.constant 0 : index
    %c0_13 = arith.constant 0 : index
    %26 = vector.load %arg6[%c0_12, %c0_13] : memref<1x512xf32, #tpu.memory_space<vmem>>, vector<1x512xf32>
    %27 = vector.broadcast %26 : vector<1x512xf32> to vector<8x512xf32>
    %28 = arith.addf %25, %27 : vector<8x512xf32>
    %29 = arith.negf %28 : vector<8x512xf32>
    %30 = math.exp %29 : vector<8x512xf32>
    %cst_14 = arith.constant 1.000000e+00 : f32
    %31 = vector.broadcast %cst_14 : f32 to vector<8x512xf32>
    %32 = arith.addf %31, %30 : vector<8x512xf32>
    %33 = arith.divf %31, %32 : vector<8x512xf32>
    %34 = arith.truncf %33 : vector<8x512xf32> to vector<8x512xbf16>
    %c0_15 = arith.constant 0 : index
    %c0_16 = arith.constant 0 : index
    %35 = vector.load %arg7[%c0_15, %c0_16] : memref<512x256xbf16, #tpu.memory_space<vmem>>, vector<512x256xbf16>
    %cst_17 = arith.constant dense<0.000000e+00> : vector<8x256xf32>
    %36 = tpu.matmul %34, %35, %cst_17 {dimension_numbers = #tpu.dot_dimension_numbers<[1], [0], [0], [1], [0, 0, 1, 1], [], []>} : vector<8x512xbf16>, vector<512x256xbf16>, vector<8x256xf32> -> vector<8x256xf32>
    %c0_18 = arith.constant 0 : index
    %c0_19 = arith.constant 0 : index
    %37 = vector.load %arg8[%c0_18, %c0_19] : memref<1x256xf32, #tpu.memory_space<vmem>>, vector<1x256xf32>
    %38 = vector.broadcast %37 : vector<1x256xf32> to vector<8x256xf32>
    %39 = arith.addf %36, %38 : vector<8x256xf32>
    %40 = arith.negf %39 : vector<8x256xf32>
    %41 = math.exp %40 : vector<8x256xf32>
    %cst_20 = arith.constant 1.000000e+00 : f32
    %42 = vector.broadcast %cst_20 : f32 to vector<8x256xf32>
    %43 = arith.addf %42, %41 : vector<8x256xf32>
    %44 = arith.divf %42, %43 : vector<8x256xf32>
    %c0_21 = arith.constant 0 : index
    %c0_22 = arith.constant 0 : index
    %45 = vector.load %arg9[%c0_21, %c0_22] : memref<1x256xf32, #tpu.memory_space<vmem>>, vector<1x256xf32>
    %46 = vector.broadcast %45 : vector<1x256xf32> to vector<8x256xf32>
    %47 = arith.mulf %44, %46 : vector<8x256xf32>
    %cst_23 = arith.constant dense<0.000000e+00> : vector<8xf32>
    %48 = vector.multi_reduction <add>, %47, %cst_23 [1] : vector<8x256xf32> to vector<8xf32>
    %49 = vector.shape_cast %48 : vector<8xf32> to vector<8x1xf32>
    %c0_24 = arith.constant 0 : index
    %c0_25 = arith.constant 0 : index
    %50 = vector.load %arg10[%c0_24, %c0_25] : memref<1x1xf32, #tpu.memory_space<vmem>>, vector<1x1xf32>
    %51 = vector.broadcast %50 : vector<1x1xf32> to vector<8x1xf32>
    %52 = arith.addf %49, %51 : vector<8x1xf32>
    %53 = arith.negf %52 : vector<8x1xf32>
    %54 = math.exp %53 : vector<8x1xf32>
    %cst_26 = arith.constant 1.000000e+00 : f32
    %55 = vector.broadcast %cst_26 : f32 to vector<8x1xf32>
    %56 = arith.addf %55, %54 : vector<8x1xf32>
    %57 = arith.divf %55, %56 : vector<8x1xf32>
    %c0_27 = arith.constant 0 : index
    %c0_28 = arith.constant 0 : index
    %58 = vector.load %arg11[%c0_27, %c0_28] : memref<8x1xf32, #tpu.memory_space<vmem>>, vector<8x1xf32>
    tpu.vector_store %arg11[%c0_27, %c0_28], %57 {strides = array<i32>} : memref<8x1xf32, #tpu.memory_space<vmem>>, vector<8x1xf32>,
    return
  }
  func.func @transform_0(%arg0: i32) -> (i32, i32) {
    %c0_i32 = arith.constant 0 : i32
    %c0_i32_0 = arith.constant 0 : i32
    return %arg0, %c0_i32 : i32, i32
  }
  func.func @transform_1(%arg0: i32) -> (i32, i32) {
    %c0_i32 = arith.constant 0 : i32
    %c0_i32_0 = arith.constant 0 : i32
    return %arg0, %c0_i32 : i32, i32
  }
  func.func @transform_2(%arg0: i32) -> (i32, i32) {
    %c0_i32 = arith.constant 0 : i32
    %c0_i32_0 = arith.constant 0 : i32
    return %arg0, %c0_i32 : i32, i32
  }
  func.func @transform_3(%arg0: i32) -> (i32, i32) {
    %c0_i32 = arith.constant 0 : i32
    %c0_i32_0 = arith.constant 0 : i32
    return %arg0, %c0_i32 : i32, i32
  }
  func.func @transform_4(%arg0: i32) -> (i32, i32) {
    %c0_i32 = arith.constant 0 : i32
    %c0_i32_0 = arith.constant 0 : i32
    %c0_i32_1 = arith.constant 0 : i32
    return %c0_i32, %c0_i32_0 : i32, i32
  }
  func.func @transform_5(%arg0: i32) -> (i32, i32) {
    %c0_i32 = arith.constant 0 : i32
    %c0_i32_0 = arith.constant 0 : i32
    %c0_i32_1 = arith.constant 0 : i32
    return %c0_i32, %c0_i32_0 : i32, i32
  }
  func.func @transform_6(%arg0: i32) -> (i32, i32) {
    %c0_i32 = arith.constant 0 : i32
    %c0_i32_0 = arith.constant 0 : i32
    %c0_i32_1 = arith.constant 0 : i32
    return %c0_i32, %c0_i32_0 : i32, i32
  }
  func.func @transform_7(%arg0: i32) -> (i32, i32) {
    %c0_i32 = arith.constant 0 : i32
    %c0_i32_0 = arith.constant 0 : i32
    %c0_i32_1 = arith.constant 0 : i32
    return %c0_i32, %c0_i32_0 : i32, i32
  }
  func.func @transform_8(%arg0: i32) -> (i32, i32) {
    %c0_i32 = arith.constant 0 : i32
    %c0_i32_0 = arith.constant 0 : i32
    %c0_i32_1 = arith.constant 0 : i32
    return %c0_i32, %c0_i32_0 : i32, i32
  }
  func.func @transform_9(%arg0: i32) -> (i32, i32) {
    %c0_i32 = arith.constant 0 : i32
    %c0_i32_0 = arith.constant 0 : i32
    %c0_i32_1 = arith.constant 0 : i32
    return %c0_i32, %c0_i32_0 : i32, i32
  }
  func.func @transform_10(%arg0: i32) -> (i32, i32) {
    %c0_i32 = arith.constant 0 : i32
    %c0_i32_0 = arith.constant 0 : i32
    return %arg0, %c0_i32 : i32, i32
  }
}

</mosaic_0001>

<llo_original>
// kernel: ncdnet_con_forward.9
$region0: #{ncdnet_con_forward.9}
  #allocation0 [shape = 'u32[]', space=smem, size = 0x4, offset = 0x4, fixed_abs, tag = 'smem constant byte address 0x4 - core index']
  #allocation1 [shape = 'u32[144,128]{1,0:T(1,128)}', space=vmem, size = 0x12000, scoped, tag = 'internal scratch']
  #allocation2 [shape = 'f32[1,1]{1,0:T(1,128)}', space=vmem, size = 0x200, scoped, tag = 'scratch operand']
  #allocation3 [shape = 'f32[8,1]{1,0:T(8,128)}', space=vmem, size = 0x1000, scoped, tag = 'scratch operand']
  #allocation4 [shape = 'f32[8,1]{1,0:T(8,128)}', space=vmem, size = 0x1000, scoped, tag = 'scratch operand']
  %s0 = inlined_call_operand.vmem [shape: f32[8,128], index: 0, kind: input, shape index: {}]
  %s1 = inlined_call_operand.vmem [shape: bf16[8,128], index: 1, kind: input, shape index: {}]
  %s2 = inlined_call_operand.vmem [shape: bf16[128,128], index: 2, kind: input, shape index: {}]
  %s3 = inlined_call_operand.vmem [shape: bf16[128,128], index: 3, kind: input, shape index: {}]
  %s4 = inlined_call_operand.hbm [shape: f32[1,1], index: 4, kind: output, shape index: {0}]
  %s5 = inlined_call_operand.hbm [shape: f32[1,1], index: 5, kind: output, shape index: {1}]
  %6 = xla_tuple %s4, %s5
  %s7 = sld [smem:[#allocation0]]
  $region46: #{ncdnet_con_forward.9} parent=0
    _
  %s9 = ssub.s32 1, %s7
  %s10 = scalar_select 0, %s9, %s7
  $region1: #{ncdnet_con_forward.9} parent=0
    #allocation5 [shape = 'u8[512]{0}', space=vmem, size = 0x400, scoped, tag = 'output window, operand 0, single buffered']
    #allocation6 [shape = 's32[1]{0}', space=sflag, size = 0x4, scoped, tag = 'scoped memory for ncdnet_con_forward.9']
    #allocation7 [shape = 'u8[512]{0}', space=vmem, size = 0x400, scoped, tag = 'output window, operand 1, single buffered']
    #allocation8 [shape = 's32[1]{0}', space=sflag, size = 0x4, scoped, tag = 'scoped memory for ncdnet_con_forward.9']
    %11 = vsyncpa [#allocation6], 0
    %12 = vsyncpa [#allocation8], 0
    // Predicated region
    $region2: #{ncdnet_con_forward.9} parent=1 // pred_check
      _
    $region3: #{ncdnet_con_forward.9} parent=1 // pred_check_branch
      %14 = sbr.rel (0) target = $region5
    $region4: #{ncdnet_con_forward.9} parent=1 // pred_region
      _
    $region5: #{ncdnet_con_forward.9} parent=1 // pred_fallthru
      _
    // Predicated region
    $region6: #{ncdnet_con_forward.9} parent=1 // pred_check
      _
    $region7: #{ncdnet_con_forward.9} parent=1 // pred_check_branch
      %16 = sbr.rel (0) target = $region9
    $region8: #{ncdnet_con_forward.9} parent=1 // pred_region
      _
    $region9: #{ncdnet_con_forward.9} parent=1 // pred_fallthru
      _
    // Predicated region
    $region10: #{ncdnet_con_forward.9} parent=1 // pred_check
      _
    $region11: #{ncdnet_con_forward.9} parent=1 // pred_check_branch
      %18 = sbr.rel (0) target = $region13
    $region12: #{ncdnet_con_forward.9} parent=1 // pred_region
      _
    $region13: #{ncdnet_con_forward.9} parent=1 // pred_fallthru
      _
    // Predicated region
    $region14: #{ncdnet_con_forward.9} parent=1 // pred_check
      _
    $region15: #{ncdnet_con_forward.9} parent=1 // pred_check_branch
      %20 = sbr.rel (0) target = $region17
    $region16: #{ncdnet_con_forward.9} parent=1 // pred_region
      _
    $region17: #{ncdnet_con_forward.9} parent=1 // pred_fallthru
      _
    %p22 = scmp.eq.s32.totalorder 0, 0
    // Predicated region
    $region18: #{ncdnet_con_forward.9} parent=1 // pred_check
      %p23 = pneg %p22
    $region19: #{ncdnet_con_forward.9} parent=1 // pred_check_branch
      %25 = sbr.rel (%p23) target = $region21
    $region20: #{ncdnet_con_forward.9} parent=1 // pred_region
      %v26 = vld [vmem:[%s0] sm:$0xff]
      %v27 = vld [vmem:[%s1] sm:$0xf]
      %v28 = vunpack.c.l.bf16 %v27
      %v29 = vmul.f32 %v26, %v28
      %v30 = vmul.f32 %v29, 1.442695
      %v31 = vpow.pop %v30
      %32 = vadd.xlane.f32.xlu0 %v31
      %v33 = vpop.xlane.xlu0 %32
      %v34 = vrot.slane %v33, 4
      %v35 = vadd.f32 %v33, %v34
      %v36 = vrot.slane %v35, 2
      %v37 = vadd.f32 %v35, %v36
      %v38 = vrot.slane %v37, 1
      %v39 = vadd.f32 %v37, %v38
      %s40 = vtos %v39
      %v41 = vstv %s40
      %v42 = vsub.f32 %v41, 760.0
      %vm43 = vcmask 0
      %44 = vst.msk [vmem:[#allocation2] sm:$0x1] %vm43, %v42
      %vm45 = vcmask 7168
      %46 = vst.msk [vmem:[#allocation3] sm:$0xff] %vm45, 0.0
      %47 = vst.msk [vmem:[#allocation4] sm:$0xff] %vm45, 0.0
    $region21: #{ncdnet_con_forward.9} parent=1 // pred_fallthru
      _
    %v48 = vld [vmem:[%s0] sm:$0xff]
    %v49 = vpack.c.bf16 %v48, %v48
    %p50 = scmp.lt.s32.totalorder 0, 1
    // Predicated region
    $region22: #{ncdnet_con_forward.9} parent=1 // pred_check
      %p51 = pneg %p50
    $region23: #{ncdnet_con_forward.9} parent=1 // pred_check_branch
      %53 = sbr.rel (%p51) target = $region25
    $region24: #{ncdnet_con_forward.9} parent=1 // pred_region
      %v54 = vld [vmem:[%s2] sm:$0xf]
      %v55 = vld [vmem:[%s2 + $0x4] sm:$0xf]
      %v56 = vld [vmem:[%s2 + $0x8] sm:$0xf]
      %v57 = vld [vmem:[%s2 + $0xc] sm:$0xf]
      %v58 = vld [vmem:[%s2 + $0x10] sm:$0xf]
      %v59 = vld [vmem:[%s2 + $0x14] sm:$0xf]
      %v60 = vld [vmem:[%s2 + $0x18] sm:$0xf]
      %v61 = vld [vmem:[%s2 + $0x1c] sm:$0xf]
      %v62 = vld [vmem:[%s2 + $0x20] sm:$0xf]
      %v63 = vld [vmem:[%s2 + $0x24] sm:$0xf]
      %v64 = vld [vmem:[%s2 + $0x28] sm:$0xf]
      %v65 = vld [vmem:[%s2 + $0x2c] sm:$0xf]
      %v66 = vld [vmem:[%s2 + $0x30] sm:$0xf]
      %v67 = vld [vmem:[%s2 + $0x34] sm:$0xf]
      %v68 = vld [vmem:[%s2 + $0x38] sm:$0xf]
      %v69 = vld [vmem:[%s2 + $0x3c] sm:$0xf]
      %v86 = vunpack.c.l.b16 %v54
      %v87 = vunpack.c.l.b16 %v55
      %v88 = vunpack.c.l.b16 %v56
      %v89 = vunpack.c.l.b16 %v57
      %v90 = vunpack.c.l.b16 %v58
      %v91 = vunpack.c.l.b16 %v59
      %v92 = vunpack.c.l.b16 %v60
      %v93 = vunpack.c.l.b16 %v61
      %v94 = vunpack.c.l.b16 %v62
      %v95 = vunpack.c.l.b16 %v63
      %v96 = vunpack.c.l.b16 %v64
      %v97 = vunpack.c.l.b16 %v65
      %v98 = vunpack.c.l.b16 %v66
      %v99 = vunpack.c.l.b16 %v67
      %v100 = vunpack.c.l.b16 %v68
      %v101 = vunpack.c.l.b16 %v69
      %v102 = vpack.c.b16 %v87, %v86
      %v103 = vpack.c.b16 %v89, %v88
      %v104 = vpack.c.b16 %v91, %v90
      %v105 = vpack.c.b16 %v93, %v92
      %v106 = vpack.c.b16 %v95, %v94
      %v107 = vpack.c.b16 %v97, %v96
      %v108 = vpack.c.b16 %v99, %v98
      %v109 = vpack.c.b16 %v101, %v100
      %118 = vmatprep.subr.bf16.mxu0 0
      %119 = vmatpush1.bf16.xpose.msra.mxu0 %v109
      %120 = vmatprep.subr.bf16.mxu0 0
      %121 = vmatpush1.bf16.xpose.msra.mxu0 %v108
      %122 = vmatprep.subr.bf16.mxu0 0
      %123 = vmatpush1.bf16.xpose.msra.mxu0 %v107
      %124 = vmatprep.subr.bf16.mxu0 0
      %125 = vmatpush1.bf16.xpose.msra.mxu0 %v106
      %126 = vmatprep.subr.bf16.mxu0 0
      %127 = vmatpush1.bf16.xpose.msra.mxu0 %v105
      %128 = vmatprep.subr.bf16.mxu0 0
      %129 = vmatpush1.bf16.xpose.msra.mxu0 %v104
      %130 = vmatprep.subr.bf16.mxu0 0
      %131 = vmatpush1.bf16.xpose.msra.mxu0 %v103
      %132 = vmatprep.subr.bf16.mxu0 0
      %133 = vmatpush1.bf16.xpose.msra.mxu0 %v102
      %134 = vmatprep.subr.bf16.mxu0 0
      %135 = vmatpush2.bf16.xpose.msra.mxu0 0
      %136 = vmatprep.subr.bf16.mxu0 0
      %137 = vmatpush2.bf16.xpose.msra.mxu0 0
      %138 = vmatprep.subr.bf16.mxu0 0
      %139 = vmatpush2.bf16.xpose.msra.mxu0 0
      %140 = vmatprep.subr.bf16.mxu0 0
      %141 = vmatpush2.bf16.xpose.msra.mxu0 0
      %142 = vmatprep.subr.bf16.mxu0 0
      %143 = vmatpush2.bf16.xpose.msra.mxu0 0
      %144 = vmatprep.subr.bf16.mxu0 0
      %145 = vmatpush2.bf16.xpose.msra.mxu0 0
      %146 = vmatprep.subr.bf16.mxu0 0
      %147 = vmatpush2.bf16.xpose.msra.mxu0 0
      %148 = vmatprep.subr.bf16.mxu0 0
      %149 = vmatpush2.bf16.xpose.msra.mxu0 0
      %150 = vmatprep.mubr.bf16.mxu0 0
      %151 = vmatmul.mubr.bf16.gmra.mxu0 %v49
      %v152 = vpop.f32.mrf.mxu0
      %v153 = vadd.f32 0.0, %v152
      %v154 = vpop.f32.mrf.mxu0
      %v155 = vpop.f32.mrf.mxu0
      %v156 = vpop.f32.mrf.mxu0
      %157 = vdwg.mxu0
      %v158 = vld [vmem:[#allocation3] sm:$0xff]
      %v159 = vmul.f32 %v153, 1.442695
      %v160 = vpow.pop %v159
      %161 = vadd.xlane.f32.xlu0 %v160
      %v162 = vpop.xlane.xlu0 %161
      %v163 = vadd.f32 %v158, %v162
      %vm164 = vcmask 7168
      %165 = vst.msk [vmem:[#allocation3] sm:$0xff] %vm164, %v163
      %v166 = vld [vmem:[%s3] sm:$0xf]
      %v167 = vld [vmem:[%s3 + $0x4] sm:$0xf]
      %v168 = vld [vmem:[%s3 + $0x8] sm:$0xf]
      %v169 = vld [vmem:[%s3 + $0xc] sm:$0xf]
      %v170 = vld [vmem:[%s3 + $0x10] sm:$0xf]
      %v171 = vld [vmem:[%s3 + $0x14] sm:$0xf]
      %v172 = vld [vmem:[%s3 + $0x18] sm:$0xf]
      %v173 = vld [vmem:[%s3 + $0x1c] sm:$0xf]
      %v174 = vld [vmem:[%s3 + $0x20] sm:$0xf]
      %v175 = vld [vmem:[%s3 + $0x24] sm:$0xf]
      %v176 = vld [vmem:[%s3 + $0x28] sm:$0xf]
      %v177 = vld [vmem:[%s3 + $0x2c] sm:$0xf]
      %v178 = vld [vmem:[%s3 + $0x30] sm:$0xf]
      %v179 = vld [vmem:[%s3 + $0x34] sm:$0xf]
      %v180 = vld [vmem:[%s3 + $0x38] sm:$0xf]
      %v181 = vld [vmem:[%s3 + $0x3c] sm:$0xf]
      %v198 = vunpack.c.l.b16 %v166
      %v199 = vunpack.c.l.b16 %v167
      %v200 = vunpack.c.l.b16 %v168
      %v201 = vunpack.c.l.b16 %v169
      %v202 = vunpack.c.l.b16 %v170
      %v203 = vunpack.c.l.b16 %v171
      %v204 = vunpack.c.l.b16 %v172
      %v205 = vunpack.c.l.b16 %v173
      %v206 = vunpack.c.l.b16 %v174
      %v207 = vunpack.c.l.b16 %v175
      %v208 = vunpack.c.l.b16 %v176
      %v209 = vunpack.c.l.b16 %v177
      %v210 = vunpack.c.l.b16 %v178
      %v211 = vunpack.c.l.b16 %v179
      %v212 = vunpack.c.l.b16 %v180
      %v213 = vunpack.c.l.b16 %v181
      %v214 = vpack.c.b16 %v199, %v198
      %v215 = vpack.c.b16 %v201, %v200
      %v216 = vpack.c.b16 %v203, %v202
      %v217 = vpack.c.b16 %v205, %v204
      %v218 = vpack.c.b16 %v207, %v206
      %v219 = vpack.c.b16 %v209, %v208
      %v220 = vpack.c.b16 %v211, %v210
      %v221 = vpack.c.b16 %v213, %v212
      %230 = vmatprep.subr.bf16.mxu0 0
      %231 = vmatpush1.bf16.xpose.msra.mxu0 %v221
      %232 = vmatprep.subr.bf16.mxu0 0
      %233 = vmatpush1.bf16.xpose.msra.mxu0 %v220
      %234 = vmatprep.subr.bf16.mxu0 0
      %235 = vmatpush1.bf16.xpose.msra.mxu0 %v219
      %236 = vmatprep.subr.bf16.mxu0 0
      %237 = vmatpush1.bf16.xpose.msra.mxu0 %v218
      %238 = vmatprep.subr.bf16.mxu0 0
      %239 = vmatpush1.bf16.xpose.msra.mxu0 %v217
      %240 = vmatprep.subr.bf16.mxu0 0
      %241 = vmatpush1.bf16.xpose.msra.mxu0 %v216
      %242 = vmatprep.subr.bf16.mxu0 0
      %243 = vmatpush1.bf16.xpose.msra.mxu0 %v215
      %244 = vmatprep.subr.bf16.mxu0 0
      %245 = vmatpush1.bf16.xpose.msra.mxu0 %v214
      %246 = vmatprep.subr.bf16.mxu0 0
      %247 = vmatpush2.bf16.xpose.msra.mxu0 0
      %248 = vmatprep.subr.bf16.mxu0 0
      %249 = vmatpush2.bf16.xpose.msra.mxu0 0
      %250 = vmatprep.subr.bf16.mxu0 0
      %251 = vmatpush2.bf16.xpose.msra.mxu0 0
      %252 = vmatprep.subr.bf16.mxu0 0
      %253 = vmatpush2.bf16.xpose.msra.mxu0 0
      %254 = vmatprep.subr.bf16.mxu0 0
      %255 = vmatpush2.bf16.xpose.msra.mxu0 0
      %256 = vmatprep.subr.bf16.mxu0 0
      %257 = vmatpush2.bf16.xpose.msra.mxu0 0
      %258 = vmatprep.subr.bf16.mxu0 0
      %259 = vmatpush2.bf16.xpose.msra.mxu0 0
      %260 = vmatprep.subr.bf16.mxu0 0
      %261 = vmatpush2.bf16.xpose.msra.mxu0 0
      %262 = vmatprep.mubr.bf16.mxu0 0
      %263 = vmatmul.mubr.bf16.gmra.mxu0 %v49
      %v264 = vpop.f32.mrf.mxu0
      %v265 = vadd.f32 0.0, %v264
      %v266 = vpop.f32.mrf.mxu0
      %v267 = vpop.f32.mrf.mxu0
      %v268 = vpop.f32.mrf.mxu0
      %269 = vdwg.mxu0
      %v270 = vld [vmem:[#allocation4] sm:$0xff]
      %v271 = vmul.f32 %v265, 1.442695
      %v272 = vpow.pop %v271
      %273 = vadd.xlane.f32.xlu0 %v272
      %v274 = vpop.xlane.xlu0 %273
      %v275 = vadd.f32 %v270, %v274
      %276 = vst.msk [vmem:[#allocation4] sm:$0xff] %vm164, %v275
    $region25: #{ncdnet_con_forward.9} parent=1 // pred_fallthru
      _
    // Predicated region
    $region26: #{ncdnet_con_forward.9} parent=1 // pred_check
      %p277 = pneg %p22
    $region27: #{ncdnet_con_forward.9} parent=1 // pred_check_branch
      %279 = sbr.rel (%p277) target = $region29
    $region28: #{ncdnet_con_forward.9} parent=1 // pred_region
      %v280 = vld [vmem:[#allocation2] sm:$0x1]
      %v281 = vld [vmem:[#allocation3] sm:$0xff]
      %v282 = vsub.f32 %v281, 112.0
      %v283 = vld [vmem:[#allocation4] sm:$0xff]
      %v284 = vsub.f32 %v283, 96.0
      %v285 = vadd.f32 %v282, 1e-08
      %v287 = vlaneseq
      %v288 = vshrl.u32 %v287, 7
      %v289 = vsub.s32 0, %v288
      %v290 = vrot.slane %v280, %v289
      %v292 = vrcp.pop %v285
      %v293 = vmul.f32 %v290, %v292
      %v294 = vadd.f32 %v293, 1e-08
      %v295 = vlog2.pop %v294
      %v296 = vmul.f32 %v295, 0.6931472
      %v297 = vsub.f32 0.0, %v296
      %vm298 = vcmask 7168
      %v299 = vsel %vm298, %v297, 0.0
      %300 = vadd.xlane.f32.xlu0 %v299
      %v301 = vpop.xlane.xlu0 %300
      %v302 = vrot.slane %v301, 4
      %v303 = vadd.f32 %v301, %v302
      %v304 = vrot.slane %v303, 2
      %v305 = vadd.f32 %v303, %v304
      %v306 = vrot.slane %v305, 1
      %v307 = vadd.f32 %v305, %v306
      %s308 = vtos %v307
      %v309 = vstv %s308
      %v310 = vrcp.pop 8.0
      %v311 = vmul.f32 %v309, %v310
      %vm312 = vcmask 0
      %313 = vst.msk [vmem:[#allocation5] sm:$0x1] %vm312, %v311
      %v314 = vadd.f32 %v284, 1e-08
      %v315 = vrcp.pop %v314
      %v316 = vmul.f32 %v290, %v315
      %v317 = vadd.f32 %v316, 1e-08
      %v318 = vlog2.pop %v317
      %v319 = vmul.f32 %v318, 0.6931472
      %v320 = vsub.f32 0.0, %v319
      %v321 = vsel %vm298, %v320, 0.0
      %322 = vadd.xlane.f32.xlu0 %v321
      %v323 = vpop.xlane.xlu0 %322
      %v324 = vrot.slane %v323, 4
      %v325 = vadd.f32 %v323, %v324
      %v326 = vrot.slane %v325, 2
      %v327 = vadd.f32 %v325, %v326
      %v328 = vrot.slane %v327, 1
      %v329 = vadd.f32 %v327, %v328
      %s330 = vtos %v329
      %v331 = vstv %s330
      %v332 = vmul.f32 %v331, %v310
      %333 = vst.msk [vmem:[#allocation7] sm:$0x1] %vm312, %v332
    $region29: #{ncdnet_con_forward.9} parent=1 // pred_fallthru
      _
    // Predicated region
    $region30: #{ncdnet_con_forward.9} parent=1 // pred_check
      _
    $region31: #{ncdnet_con_forward.9} parent=1 // pred_check_branch
      %335 = sbr.rel (0) target = $region33
    $region32: #{ncdnet_con_forward.9} parent=1 // pred_region
      %s337 = ssub.s32 16, 16
      %338 = vsyncadd [#allocation6], %s337
      %s340 = sshll.u32 [#allocation5], 4
      %s341 = int_to_ptr.vmem [resolvable:$true] %s340
      %343 = dma.vmem_to_hbm [thread:$0]  %s341, 16, %s4, [#allocation6]
    $region33: #{ncdnet_con_forward.9} parent=1 // pred_fallthru
      _
    // Predicated region
    $region34: #{ncdnet_con_forward.9} parent=1 // pred_check
      _
    $region35: #{ncdnet_con_forward.9} parent=1 // pred_check_branch
      %345 = sbr.rel (0) target = $region37
    $region36: #{ncdnet_con_forward.9} parent=1 // pred_region
      %s347 = ssub.s32 16, 16
      %348 = vsyncadd [#allocation8], %s347
      %s350 = sshll.u32 [#allocation7], 4
      %s351 = int_to_ptr.vmem [resolvable:$true] %s350
      %353 = dma.vmem_to_hbm [thread:$0]  %s351, 16, %s5, [#allocation8]
    $region37: #{ncdnet_con_forward.9} parent=1 // pred_fallthru
      _
    // Predicated region
    $region38: #{ncdnet_con_forward.9} parent=1 // pred_check
      _
    $region39: #{ncdnet_con_forward.9} parent=1 // pred_check_branch
      %355 = sbr.rel (0) target = $region41
    $region40: #{ncdnet_con_forward.9} parent=1 // pred_region
      %356 = dma.done [#allocation6], 16
    $region41: #{ncdnet_con_forward.9} parent=1 // pred_fallthru
      _
    // Predicated region
    $region42: #{ncdnet_con_forward.9} parent=1 // pred_check
      _
    $region43: #{ncdnet_con_forward.9} parent=1 // pred_check_branch
      %358 = sbr.rel (0) target = $region45
    $region44: #{ncdnet_con_forward.9} parent=1 // pred_region
      %359 = dma.done [#allocation8], 16
    $region45: #{ncdnet_con_forward.9} parent=1 // pred_fallthru
      _
    %360 = vsyncpa [#allocation6], 1
    %361 = vsyncpa [#allocation8], 1

// kernel: ncdnet_con_forward.8
$region0: #{ncdnet_con_forward.8}
  #allocation0 [shape = 'u32[]', space=smem, size = 0x4, offset = 0x4, fixed_abs, tag = 'smem constant byte address 0x4 - core index']
  #allocation1 [shape = 'u32[144,128]{1,0:T(1,128)}', space=vmem, size = 0x12000, scoped, tag = 'internal scratch']
  #allocation2 [shape = 'f32[1,1]{1,0:T(1,128)}', space=vmem, size = 0x200, scoped, tag = 'scratch operand']
  #allocation3 [shape = 'f32[8,1]{1,0:T(8,128)}', space=vmem, size = 0x1000, scoped, tag = 'scratch operand']
  #allocation4 [shape = 'f32[8,1]{1,0:T(8,128)}', space=vmem, size = 0x1000, scoped, tag = 'scratch operand']
  %s0 = inlined_call_operand.vmem [shape: f32[8,128], index: 0, kind: input, shape index: {}]
  %s1 = inlined_call_operand.vmem [shape: bf16[8,128], index: 1, kind: input, shape index: {}]
  %s2 = inlined_call_operand.vmem [shape: bf16[128,128], index: 2, kind: input, shape index: {}]
  %s3 = inlined_call_operand.vmem [shape: bf16[128,128], index: 3, kind: input, shape index: {}]
  %s4 = inlined_call_operand.hbm [shape: f32[1,1], index: 4, kind: output, shape index: {0}]
  %s5 = inlined_call_operand.hbm [shape: f32[1,1], index: 5, kind: output, shape index: {1}]
  %6 = xla_tuple %s4, %s5
  %s7 = sld [smem:[#allocation0]]
  $region46: #{ncdnet_con_forward.8} parent=0
    _
  %s9 = ssub.s32 1, %s7
  %s10 = scalar_select 0, %s9, %s7
  $region1: #{ncdnet_con_forward.8} parent=0
    #allocation5 [shape = 'u8[512]{0}', space=vmem, size = 0x400, scoped, tag = 'output window, operand 0, single buffered']
    #allocation6 [shape = 's32[1]{0}', space=sflag, size = 0x4, scoped, tag = 'scoped memory for ncdnet_con_forward.8']
    #allocation7 [shape = 'u8[512]{0}', space=vmem, size = 0x400, scoped, tag = 'output window, operand 1, single buffered']
    #allocation8 [shape = 's32[1]{0}', space=sflag, size = 0x4, scoped, tag = 'scoped memory for ncdnet_con_forward.8']
    %11 = vsyncpa [#allocation6], 0
    %12 = vsyncpa [#allocation8], 0
    // Predicated region
    $region2: #{ncdnet_con_forward.8} parent=1 // pred_check
      _
    $region3: #{ncdnet_con_forward.8} parent=1 // pred_check_branch
      %14 = sbr.rel (0) target = $region5
    $region4: #{ncdnet_con_forward.8} parent=1 // pred_region
      _
    $region5: #{ncdnet_con_forward.8} parent=1 // pred_fallthru
      _
    // Predicated region
    $region6: #{ncdnet_con_forward.8} parent=1 // pred_check
      _
    $region7: #{ncdnet_con_forward.8} parent=1 // pred_check_branch
      %16 = sbr.rel (0) target = $region9
    $region8: #{ncdnet_con_forward.8} parent=1 // pred_region
      _
    $region9: #{ncdnet_con_forward.8} parent=1 // pred_fallthru
      _
    // Predicated region
    $region10: #{ncdnet_con_forward.8} parent=1 // pred_check
      _
    $region11: #{ncdnet_con_forward.8} parent=1 // pred_check_branch
      %18 = sbr.rel (0) target = $region13
    $region12: #{ncdnet_con_forward.8} parent=1 // pred_region
      _
    $region13: #{ncdnet_con_forward.8} parent=1 // pred_fallthru
      _
    // Predicated region
    $region14: #{ncdnet_con_forward.8} parent=1 // pred_check
      _
    $region15: #{ncdnet_con_forward.8} parent=1 // pred_check_branch
      %20 = sbr.rel (0) target = $region17
    $region16: #{ncdnet_con_forward.8} parent=1 // pred_region
      _
    $region17: #{ncdnet_con_forward.8} parent=1 // pred_fallthru
      _
    %p22 = scmp.eq.s32.totalorder 0, 0
    // Predicated region
    $region18: #{ncdnet_con_forward.8} parent=1 // pred_check
      %p23 = pneg %p22
    $region19: #{ncdnet_con_forward.8} parent=1 // pred_check_branch
      %25 = sbr.rel (%p23) target = $region21
    $region20: #{ncdnet_con_forward.8} parent=1 // pred_region
      %v26 = vld [vmem:[%s0] sm:$0xff]
      %v27 = vld [vmem:[%s1] sm:$0xf]
      %v28 = vunpack.c.l.bf16 %v27
      %v29 = vmul.f32 %v26, %v28
      %v30 = vmul.f32 %v29, 1.442695
      %v31 = vpow.pop %v30
      %32 = vadd.xlane.f32.xlu0 %v31
      %v33 = vpop.xlane.xlu0 %32
      %v34 = vrot.slane %v33, 4
      %v35 = vadd.f32 %v33, %v34
      %v36 = vrot.slane %v35, 2
      %v37 = vadd.f32 %v35, %v36
      %v38 = vrot.slane %v37, 1
      %v39 = vadd.f32 %v37, %v38
      %s40 = vtos %v39
      %v41 = vstv %s40
      %v42 = vsub.f32 %v41, 768.0
      %vm43 = vcmask 0
      %44 = vst.msk [vmem:[#allocation2] sm:$0x1] %vm43, %v42
      %vm45 = vcmask 7168
      %46 = vst.msk [vmem:[#allocation3] sm:$0xff] %vm45, 0.0
      %47 = vst.msk [vmem:[#allocation4] sm:$0xff] %vm45, 0.0
    $region21: #{ncdnet_con_forward.8} parent=1 // pred_fallthru
      _
    %v48 = vld [vmem:[%s0] sm:$0xff]
    %v49 = vpack.c.bf16 %v48, %v48
    %p50 = scmp.lt.s32.totalorder 0, 1
    // Predicated region
    $region22: #{ncdnet_con_forward.8} parent=1 // pred_check
      %p51 = pneg %p50
    $region23: #{ncdnet_con_forward.8} parent=1 // pred_check_branch
      %53 = sbr.rel (%p51) target = $region25
    $region24: #{ncdnet_con_forward.8} parent=1 // pred_region
      %v54 = vld [vmem:[%s2] sm:$0xf]
      %v55 = vld [vmem:[%s2 + $0x4] sm:$0xf]
      %v56 = vld [vmem:[%s2 + $0x8] sm:$0xf]
      %v57 = vld [vmem:[%s2 + $0xc] sm:$0xf]
      %v58 = vld [vmem:[%s2 + $0x10] sm:$0xf]
      %v59 = vld [vmem:[%s2 + $0x14] sm:$0xf]
      %v60 = vld [vmem:[%s2 + $0x18] sm:$0xf]
      %v61 = vld [vmem:[%s2 + $0x1c] sm:$0xf]
      %v62 = vld [vmem:[%s2 + $0x20] sm:$0xf]
      %v63 = vld [vmem:[%s2 + $0x24] sm:$0xf]
      %v64 = vld [vmem:[%s2 + $0x28] sm:$0xf]
      %v65 = vld [vmem:[%s2 + $0x2c] sm:$0xf]
      %v66 = vld [vmem:[%s2 + $0x30] sm:$0xf]
      %v67 = vld [vmem:[%s2 + $0x34] sm:$0xf]
      %v68 = vld [vmem:[%s2 + $0x38] sm:$0xf]
      %v69 = vld [vmem:[%s2 + $0x3c] sm:$0xf]
      %v86 = vunpack.c.l.b16 %v54
      %v87 = vunpack.c.l.b16 %v55
      %v88 = vunpack.c.l.b16 %v56
      %v89 = vunpack.c.l.b16 %v57
      %v90 = vunpack.c.l.b16 %v58
      %v91 = vunpack.c.l.b16 %v59
      %v92 = vunpack.c.l.b16 %v60
      %v93 = vunpack.c.l.b16 %v61
      %v94 = vunpack.c.l.b16 %v62
      %v95 = vunpack.c.l.b16 %v63
      %v96 = vunpack.c.l.b16 %v64
      %v97 = vunpack.c.l.b16 %v65
      %v98 = vunpack.c.l.b16 %v66
      %v99 = vunpack.c.l.b16 %v67
      %v100 = vunpack.c.l.b16 %v68
      %v101 = vunpack.c.l.b16 %v69
      %v102 = vpack.c.b16 %v87, %v86
      %v103 = vpack.c.b16 %v89, %v88
      %v104 = vpack.c.b16 %v91, %v90
      %v105 = vpack.c.b16 %v93, %v92
      %v106 = vpack.c.b16 %v95, %v94
      %v107 = vpack.c.b16 %v97, %v96
      %v108 = vpack.c.b16 %v99, %v98
      %v109 = vpack.c.b16 %v101, %v100
      %118 = vmatprep.subr.bf16.mxu0 0
      %119 = vmatpush1.bf16.xpose.msra.mxu0 %v109
      %120 = vmatprep.subr.bf16.mxu0 0
      %121 = vmatpush1.bf16.xpose.msra.mxu0 %v108
      %122 = vmatprep.subr.bf16.mxu0 0
      %123 = vmatpush1.bf16.xpose.msra.mxu0 %v107
      %124 = vmatprep.subr.bf16.mxu0 0
      %125 = vmatpush1.bf16.xpose.msra.mxu0 %v106
      %126 = vmatprep.subr.bf16.mxu0 0
      %127 = vmatpush1.bf16.xpose.msra.mxu0 %v105
      %128 = vmatprep.subr.bf16.mxu0 0
      %129 = vmatpush1.bf16.xpose.msra.mxu0 %v104
      %130 = vmatprep.subr.bf16.mxu0 0
      %131 = vmatpush1.bf16.xpose.msra.mxu0 %v103
      %132 = vmatprep.subr.bf16.mxu0 0
      %133 = vmatpush1.bf16.xpose.msra.mxu0 %v102
      %134 = vmatprep.subr.bf16.mxu0 0
      %135 = vmatpush2.bf16.xpose.msra.mxu0 0
      %136 = vmatprep.subr.bf16.mxu0 0
      %137 = vmatpush2.bf16.xpose.msra.mxu0 0
      %138 = vmatprep.subr.bf16.mxu0 0
      %139 = vmatpush2.bf16.xpose.msra.mxu0 0
      %140 = vmatprep.subr.bf16.mxu0 0
      %141 = vmatpush2.bf16.xpose.msra.mxu0 0
      %142 = vmatprep.subr.bf16.mxu0 0
      %143 = vmatpush2.bf16.xpose.msra.mxu0 0
      %144 = vmatprep.subr.bf16.mxu0 0
      %145 = vmatpush2.bf16.xpose.msra.mxu0 0
      %146 = vmatprep.subr.bf16.mxu0 0
      %147 = vmatpush2.bf16.xpose.msra.mxu0 0
      %148 = vmatprep.subr.bf16.mxu0 0
      %149 = vmatpush2.bf16.xpose.msra.mxu0 0
      %150 = vmatprep.mubr.bf16.mxu0 0
      %151 = vmatmul.mubr.bf16.gmra.mxu0 %v49
      %v152 = vpop.f32.mrf.mxu0
      %v153 = vadd.f32 0.0, %v152
      %v154 = vpop.f32.mrf.mxu0
      %v155 = vpop.f32.mrf.mxu0
      %v156 = vpop.f32.mrf.mxu0
      %157 = vdwg.mxu0
      %v158 = vld [vmem:[#allocation3] sm:$0xff]
      %v159 = vmul.f32 %v153, 1.442695
      %v160 = vpow.pop %v159
      %161 = vadd.xlane.f32.xlu0 %v160
      %v162 = vpop.xlane.xlu0 %161
      %v163 = vadd.f32 %v158, %v162
      %vm164 = vcmask 7168
      %165 = vst.msk [vmem:[#allocation3] sm:$0xff] %vm164, %v163
      %v166 = vld [vmem:[%s3] sm:$0xf]
      %v167 = vld [vmem:[%s3 + $0x4] sm:$0xf]
      %v168 = vld [vmem:[%s3 + $0x8] sm:$0xf]
      %v169 = vld [vmem:[%s3 + $0xc] sm:$0xf]
      %v170 = vld [vmem:[%s3 + $0x10] sm:$0xf]
      %v171 = vld [vmem:[%s3 + $0x14] sm:$0xf]
      %v172 = vld [vmem:[%s3 + $0x18] sm:$0xf]
      %v173 = vld [vmem:[%s3 + $0x1c] sm:$0xf]
      %v174 = vld [vmem:[%s3 + $0x20] sm:$0xf]
      %v175 = vld [vmem:[%s3 + $0x24] sm:$0xf]
      %v176 = vld [vmem:[%s3 + $0x28] sm:$0xf]
      %v177 = vld [vmem:[%s3 + $0x2c] sm:$0xf]
      %v178 = vld [vmem:[%s3 + $0x30] sm:$0xf]
      %v179 = vld [vmem:[%s3 + $0x34] sm:$0xf]
      %v180 = vld [vmem:[%s3 + $0x38] sm:$0xf]
      %v181 = vld [vmem:[%s3 + $0x3c] sm:$0xf]
      %v198 = vunpack.c.l.b16 %v166
      %v199 = vunpack.c.l.b16 %v167
      %v200 = vunpack.c.l.b16 %v168
      %v201 = vunpack.c.l.b16 %v169
      %v202 = vunpack.c.l.b16 %v170
      %v203 = vunpack.c.l.b16 %v171
      %v204 = vunpack.c.l.b16 %v172
      %v205 = vunpack.c.l.b16 %v173
      %v206 = vunpack.c.l.b16 %v174
      %v207 = vunpack.c.l.b16 %v175
      %v208 = vunpack.c.l.b16 %v176
      %v209 = vunpack.c.l.b16 %v177
      %v210 = vunpack.c.l.b16 %v178
      %v211 = vunpack.c.l.b16 %v179
      %v212 = vunpack.c.l.b16 %v180
      %v213 = vunpack.c.l.b16 %v181
      %v214 = vpack.c.b16 %v199, %v198
      %v215 = vpack.c.b16 %v201, %v200
      %v216 = vpack.c.b16 %v203, %v202
      %v217 = vpack.c.b16 %v205, %v204
      %v218 = vpack.c.b16 %v207, %v206
      %v219 = vpack.c.b16 %v209, %v208
      %v220 = vpack.c.b16 %v211, %v210
      %v221 = vpack.c.b16 %v213, %v212
      %230 = vmatprep.subr.bf16.mxu0 0
      %231 = vmatpush1.bf16.xpose.msra.mxu0 %v221
      %232 = vmatprep.subr.bf16.mxu0 0
      %233 = vmatpush1.bf16.xpose.msra.mxu0 %v220
      %234 = vmatprep.subr.bf16.mxu0 0
      %235 = vmatpush1.bf16.xpose.msra.mxu0 %v219
      %236 = vmatprep.subr.bf16.mxu0 0
      %237 = vmatpush1.bf16.xpose.msra.mxu0 %v218
      %238 = vmatprep.subr.bf16.mxu0 0
      %239 = vmatpush1.bf16.xpose.msra.mxu0 %v217
      %240 = vmatprep.subr.bf16.mxu0 0
      %241 = vmatpush1.bf16.xpose.msra.mxu0 %v216
      %242 = vmatprep.subr.bf16.mxu0 0
      %243 = vmatpush1.bf16.xpose.msra.mxu0 %v215
      %244 = vmatprep.subr.bf16.mxu0 0
      %245 = vmatpush1.bf16.xpose.msra.mxu0 %v214
      %246 = vmatprep.subr.bf16.mxu0 0
      %247 = vmatpush2.bf16.xpose.msra.mxu0 0
      %248 = vmatprep.subr.bf16.mxu0 0
      %249 = vmatpush2.bf16.xpose.msra.mxu0 0
      %250 = vmatprep.subr.bf16.mxu0 0
      %251 = vmatpush2.bf16.xpose.msra.mxu0 0
      %252 = vmatprep.subr.bf16.mxu0 0
      %253 = vmatpush2.bf16.xpose.msra.mxu0 0
      %254 = vmatprep.subr.bf16.mxu0 0
      %255 = vmatpush2.bf16.xpose.msra.mxu0 0
      %256 = vmatprep.subr.bf16.mxu0 0
      %257 = vmatpush2.bf16.xpose.msra.mxu0 0
      %258 = vmatprep.subr.bf16.mxu0 0
      %259 = vmatpush2.bf16.xpose.msra.mxu0 0
      %260 = vmatprep.subr.bf16.mxu0 0
      %261 = vmatpush2.bf16.xpose.msra.mxu0 0
      %262 = vmatprep.mubr.bf16.mxu0 0
      %263 = vmatmul.mubr.bf16.gmra.mxu0 %v49
      %v264 = vpop.f32.mrf.mxu0
      %v265 = vadd.f32 0.0, %v264
      %v266 = vpop.f32.mrf.mxu0
      %v267 = vpop.f32.mrf.mxu0
      %v268 = vpop.f32.mrf.mxu0
      %269 = vdwg.mxu0
      %v270 = vld [vmem:[#allocation4] sm:$0xff]
      %v271 = vmul.f32 %v265, 1.442695
      %v272 = vpow.pop %v271
      %273 = vadd.xlane.f32.xlu0 %v272
      %v274 = vpop.xlane.xlu0 %273
      %v275 = vadd.f32 %v270, %v274
      %276 = vst.msk [vmem:[#allocation4] sm:$0xff] %vm164, %v275
    $region25: #{ncdnet_con_forward.8} parent=1 // pred_fallthru
      _
    // Predicated region
    $region26: #{ncdnet_con_forward.8} parent=1 // pred_check
      %p277 = pneg %p22
    $region27: #{ncdnet_con_forward.8} parent=1 // pred_check_branch
      %279 = sbr.rel (%p277) target = $region29
    $region28: #{ncdnet_con_forward.8} parent=1 // pred_region
      %v280 = vld [vmem:[#allocation2] sm:$0x1]
      %v281 = vld [vmem:[#allocation3] sm:$0xff]
      %v282 = vsub.f32 %v281, 112.0
      %v283 = vld [vmem:[#allocation4] sm:$0xff]
      %v284 = vsub.f32 %v283, 96.0
      %v285 = vadd.f32 %v282, 1e-08
      %v287 = vlaneseq
      %v288 = vshrl.u32 %v287, 7
      %v289 = vsub.s32 0, %v288
      %v290 = vrot.slane %v280, %v289
      %v292 = vrcp.pop %v285
      %v293 = vmul.f32 %v290, %v292
      %v294 = vadd.f32 %v293, 1e-08
      %v295 = vlog2.pop %v294
      %v296 = vmul.f32 %v295, 0.6931472
      %v297 = vsub.f32 0.0, %v296
      %vm298 = vcmask 7168
      %v299 = vsel %vm298, %v297, 0.0
      %300 = vadd.xlane.f32.xlu0 %v299
      %v301 = vpop.xlane.xlu0 %300
      %v302 = vrot.slane %v301, 4
      %v303 = vadd.f32 %v301, %v302
      %v304 = vrot.slane %v303, 2
      %v305 = vadd.f32 %v303, %v304
      %v306 = vrot.slane %v305, 1
      %v307 = vadd.f32 %v305, %v306
      %s308 = vtos %v307
      %v309 = vstv %s308
      %v310 = vrcp.pop 8.0
      %v311 = vmul.f32 %v309, %v310
      %vm312 = vcmask 0
      %313 = vst.msk [vmem:[#allocation5] sm:$0x1] %vm312, %v311
      %v314 = vadd.f32 %v284, 1e-08
      %v315 = vrcp.pop %v314
      %v316 = vmul.f32 %v290, %v315
      %v317 = vadd.f32 %v316, 1e-08
      %v318 = vlog2.pop %v317
      %v319 = vmul.f32 %v318, 0.6931472
      %v320 = vsub.f32 0.0, %v319
      %v321 = vsel %vm298, %v320, 0.0
      %322 = vadd.xlane.f32.xlu0 %v321
      %v323 = vpop.xlane.xlu0 %322
      %v324 = vrot.slane %v323, 4
      %v325 = vadd.f32 %v323, %v324
      %v326 = vrot.slane %v325, 2
      %v327 = vadd.f32 %v325, %v326
      %v328 = vrot.slane %v327, 1
      %v329 = vadd.f32 %v327, %v328
      %s330 = vtos %v329
      %v331 = vstv %s330
      %v332 = vmul.f32 %v331, %v310
      %333 = vst.msk [vmem:[#allocation7] sm:$0x1] %vm312, %v332
    $region29: #{ncdnet_con_forward.8} parent=1 // pred_fallthru
      _
    // Predicated region
    $region30: #{ncdnet_con_forward.8} parent=1 // pred_check
      _
    $region31: #{ncdnet_con_forward.8} parent=1 // pred_check_branch
      %335 = sbr.rel (0) target = $region33
    $region32: #{ncdnet_con_forward.8} parent=1 // pred_region
      %s337 = ssub.s32 16, 16
      %338 = vsyncadd [#allocation6], %s337
      %s340 = sshll.u32 [#allocation5], 4
      %s341 = int_to_ptr.vmem [resolvable:$true] %s340
      %343 = dma.vmem_to_hbm [thread:$0]  %s341, 16, %s4, [#allocation6]
    $region33: #{ncdnet_con_forward.8} parent=1 // pred_fallthru
      _
    // Predicated region
    $region34: #{ncdnet_con_forward.8} parent=1 // pred_check
      _
    $region35: #{ncdnet_con_forward.8} parent=1 // pred_check_branch
      %345 = sbr.rel (0) target = $region37
    $region36: #{ncdnet_con_forward.8} parent=1 // pred_region
      %s347 = ssub.s32 16, 16
      %348 = vsyncadd [#allocation8], %s347
      %s350 = sshll.u32 [#allocation7], 4
      %s351 = int_to_ptr.vmem [resolvable:$true] %s350
      %353 = dma.vmem_to_hbm [thread:$0]  %s351, 16, %s5, [#allocation8]
    $region37: #{ncdnet_con_forward.8} parent=1 // pred_fallthru
      _
    // Predicated region
    $region38: #{ncdnet_con_forward.8} parent=1 // pred_check
      _
    $region39: #{ncdnet_con_forward.8} parent=1 // pred_check_branch
      %355 = sbr.rel (0) target = $region41
    $region40: #{ncdnet_con_forward.8} parent=1 // pred_region
      %356 = dma.done [#allocation6], 16
    $region41: #{ncdnet_con_forward.8} parent=1 // pred_fallthru
      _
    // Predicated region
    $region42: #{ncdnet_con_forward.8} parent=1 // pred_check
      _
    $region43: #{ncdnet_con_forward.8} parent=1 // pred_check_branch
      %358 = sbr.rel (0) target = $region45
    $region44: #{ncdnet_con_forward.8} parent=1 // pred_region
      %359 = dma.done [#allocation8], 16
    $region45: #{ncdnet_con_forward.8} parent=1 // pred_fallthru
      _
    %360 = vsyncpa [#allocation6], 1
    %361 = vsyncpa [#allocation8], 1

// kernel: ncdnet_con_forward.6
$region0: #{ncdnet_con_forward.6}
  #allocation0 [shape = 'u32[]', space=smem, size = 0x4, offset = 0x4, fixed_abs, tag = 'smem constant byte address 0x4 - core index']
  #allocation1 [shape = 'u32[144,128]{1,0:T(1,128)}', space=vmem, size = 0x12000, scoped, tag = 'internal scratch']
  %s0 = inlined_call_operand.vmem [shape: f32[128,64], index: 0, kind: input, shape index: {}]
  %s1 = inlined_call_operand.vmem [shape: bf16[64,48], index: 1, kind: input, shape index: {}]
  %s2 = inlined_call_operand.vmem [shape: f32[1,48], index: 2, kind: input, shape index: {}]
  %s3 = inlined_call_operand.vmem [shape: bf16[48,128], index: 3, kind: input, shape index: {}]
  %s4 = inlined_call_operand.vmem [shape: f32[1,128], index: 4, kind: input, shape index: {}]
  %s5 = inlined_call_operand.vmem [shape: bf16[128,128], index: 5, kind: output, shape index: {}]
  %s6 = sld [smem:[#allocation0]]
  $region30: #{ncdnet_con_forward.6} parent=0
    _
  %s8 = ssub.s32 1, %s6
  %s9 = scalar_select 0, %s8, %s6
  // Predicated region
  $region2: #{ncdnet_con_forward.6} parent=0 // pred_check
    _
  $region3: #{ncdnet_con_forward.6} parent=0 // pred_check_branch
    %11 = sbr.rel (0) target = $region5
  $region4: #{ncdnet_con_forward.6} parent=0 // pred_region
    _
  $region5: #{ncdnet_con_forward.6} parent=0 // pred_fallthru
    _
  // Predicated region
  $region6: #{ncdnet_con_forward.6} parent=0 // pred_check
    _
  $region7: #{ncdnet_con_forward.6} parent=0 // pred_check_branch
    %13 = sbr.rel (0) target = $region9
  $region8: #{ncdnet_con_forward.6} parent=0 // pred_region
    _
  $region9: #{ncdnet_con_forward.6} parent=0 // pred_fallthru
    _
  // Predicated region
  $region10: #{ncdnet_con_forward.6} parent=0 // pred_check
    _
  $region11: #{ncdnet_con_forward.6} parent=0 // pred_check_branch
    %15 = sbr.rel (0) target = $region13
  $region12: #{ncdnet_con_forward.6} parent=0 // pred_region
    _
  $region13: #{ncdnet_con_forward.6} parent=0 // pred_fallthru
    _
  // Predicated region
  $region14: #{ncdnet_con_forward.6} parent=0 // pred_check
    _
  $region15: #{ncdnet_con_forward.6} parent=0 // pred_check_branch
    %17 = sbr.rel (0) target = $region17
  $region16: #{ncdnet_con_forward.6} parent=0 // pred_region
    _
  $region17: #{ncdnet_con_forward.6} parent=0 // pred_fallthru
    _
  // Predicated region
  $region18: #{ncdnet_con_forward.6} parent=0 // pred_check
    _
  $region19: #{ncdnet_con_forward.6} parent=0 // pred_check_branch
    %19 = sbr.rel (0) target = $region21
  $region20: #{ncdnet_con_forward.6} parent=0 // pred_region
    _
  $region21: #{ncdnet_con_forward.6} parent=0 // pred_fallthru
    _
  %v21 = vld [vmem:[%s0] sm:$0xff]
  %v22 = vld [vmem:[%s0 + $0x8] sm:$0xff]
  %v23 = vld [vmem:[%s0 + $0x10] sm:$0xff]
  %v24 = vld [vmem:[%s0 + $0x18] sm:$0xff]
  %v25 = vld [vmem:[%s0 + $0x20] sm:$0xff]
  %v26 = vld [vmem:[%s0 + $0x28] sm:$0xff]
  %v27 = vld [vmem:[%s0 + $0x30] sm:$0xff]
  %v28 = vld [vmem:[%s0 + $0x38] sm:$0xff]
  %v29 = vld [vmem:[%s0 + $0x40] sm:$0xff]
  %v30 = vld [vmem:[%s0 + $0x48] sm:$0xff]
  %v31 = vld [vmem:[%s0 + $0x50] sm:$0xff]
  %v32 = vld [vmem:[%s0 + $0x58] sm:$0xff]
  %v33 = vld [vmem:[%s0 + $0x60] sm:$0xff]
  %v34 = vld [vmem:[%s0 + $0x68] sm:$0xff]
  %v35 = vld [vmem:[%s0 + $0x70] sm:$0xff]
  %v36 = vld [vmem:[%s0 + $0x78] sm:$0xff]
  %v37 = vpack.c.bf16 %v22, %v21
  %v38 = vpack.c.bf16 %v24, %v23
  %v39 = vpack.c.bf16 %v26, %v25
  %v40 = vpack.c.bf16 %v28, %v27
  %v41 = vpack.c.bf16 %v30, %v29
  %v42 = vpack.c.bf16 %v32, %v31
  %v43 = vpack.c.bf16 %v34, %v33
  %v44 = vpack.c.bf16 %v36, %v35
  %v45 = vld [vmem:[%s1] sm:$0xf]
  %v46 = vld [vmem:[%s1 + $0x4] sm:$0xf]
  %v47 = vld [vmem:[%s1 + $0x8] sm:$0xf]
  %v48 = vld [vmem:[%s1 + $0xc] sm:$0xf]
  %v49 = vld [vmem:[%s1 + $0x10] sm:$0xf]
  %v50 = vld [vmem:[%s1 + $0x14] sm:$0xf]
  %v51 = vld [vmem:[%s1 + $0x18] sm:$0xf]
  %v52 = vld [vmem:[%s1 + $0x1c] sm:$0xf]
  %v53 = vld [vmem:[%s2] sm:$0x1]
  %v55 = vlaneseq
  %v56 = vshrl.u32 %v55, 7
  %v57 = vsub.s32 0, %v56
  %v58 = vrot.slane %v53, %v57
  %v68 = vunpack.c.l.b16 %v45
  %v69 = vunpack.c.l.b16 %v46
  %v70 = vunpack.c.l.b16 %v47
  %v71 = vunpack.c.l.b16 %v48
  %v72 = vunpack.c.l.b16 %v49
  %v73 = vunpack.c.l.b16 %v50
  %v74 = vunpack.c.l.b16 %v51
  %v75 = vunpack.c.l.b16 %v52
  %v76 = vpack.c.b16 %v69, %v68
  %v77 = vpack.c.b16 %v71, %v70
  %v78 = vpack.c.b16 %v73, %v72
  %v79 = vpack.c.b16 %v75, %v74
  %vm84 = vcmask 523264
  %v86 = vsel %vm84, %v37, 0
  %v89 = vsel %vm84, %v38, 0
  %v92 = vsel %vm84, %v39, 0
  %v95 = vsel %vm84, %v40, 0
  %v98 = vsel %vm84, %v41, 0
  %v101 = vsel %vm84, %v42, 0
  %v104 = vsel %vm84, %v43, 0
  %v107 = vsel %vm84, %v44, 0
  %109 = vmatprep.subr.bf16.mxu0 0
  %110 = vmatpush1.bf16.msra.mxu0 0
  %111 = vmatprep.subr.bf16.mxu0 0
  %112 = vmatpush1.bf16.msra.mxu0 0
  %113 = vmatprep.subr.bf16.mxu0 0
  %114 = vmatpush1.bf16.msra.mxu0 0
  %115 = vmatprep.subr.bf16.mxu0 0
  %116 = vmatpush1.bf16.msra.mxu0 0
  %117 = vmatprep.subr.bf16.mxu0 0
  %118 = vmatpush1.bf16.msra.mxu0 %v79
  %119 = vmatprep.subr.bf16.mxu0 0
  %120 = vmatpush1.bf16.msra.mxu0 %v78
  %121 = vmatprep.subr.bf16.mxu0 0
  %122 = vmatpush1.bf16.msra.mxu0 %v77
  %123 = vmatprep.subr.bf16.mxu0 0
  %124 = vmatpush1.bf16.msra.mxu0 %v76
  %125 = vmatprep.subr.bf16.mxu0 0
  %126 = vmatpush2.bf16.msra.mxu0 0
  %127 = vmatprep.subr.bf16.mxu0 0
  %128 = vmatpush2.bf16.msra.mxu0 0
  %129 = vmatprep.subr.bf16.mxu0 0
  %130 = vmatpush2.bf16.msra.mxu0 0
  %131 = vmatprep.subr.bf16.mxu0 0
  %132 = vmatpush2.bf16.msra.mxu0 0
  %133 = vmatprep.subr.bf16.mxu0 0
  %134 = vmatpush2.bf16.msra.mxu0 0
  %135 = vmatprep.subr.bf16.mxu0 0
  %136 = vmatpush2.bf16.msra.mxu0 0
  %137 = vmatprep.subr.bf16.mxu0 0
  %138 = vmatpush2.bf16.msra.mxu0 0
  %139 = vmatprep.subr.bf16.mxu0 0
  %140 = vmatpush2.bf16.msra.mxu0 0
  %141 = vmatprep.mubr.bf16.mxu0 0
  %142 = vmatmul.mubr.bf16.gmra.mxu0 %v86
  %v143 = vpop.f32.mrf.mxu0
  %v144 = vadd.f32 %v58, %v143
  %v145 = vpop.f32.mrf.mxu0
  %v146 = vpop.f32.mrf.mxu0
  %v147 = vadd.f32 %v58, %v146
  %v148 = vpop.f32.mrf.mxu0
  %149 = vmatprep.mubr.bf16.mxu0 0
  %150 = vmatmul.mubr.bf16.gmra.mxu0 %v89
  %v151 = vpop.f32.mrf.mxu0
  %v152 = vadd.f32 %v58, %v151
  %v153 = vpop.f32.mrf.mxu0
  %v154 = vpop.f32.mrf.mxu0
  %v155 = vadd.f32 %v58, %v154
  %v156 = vpop.f32.mrf.mxu0
  %157 = vmatprep.mubr.bf16.mxu0 0
  %158 = vmatmul.mubr.bf16.gmra.mxu0 %v92
  %v159 = vpop.f32.mrf.mxu0
  %v160 = vadd.f32 %v58, %v159
  %v161 = vpop.f32.mrf.mxu0
  %v162 = vpop.f32.mrf.mxu0
  %v163 = vadd.f32 %v58, %v162
  %v164 = vpop.f32.mrf.mxu0
  %165 = vmatprep.mubr.bf16.mxu0 0
  %166 = vmatmul.mubr.bf16.gmra.mxu0 %v95
  %v167 = vpop.f32.mrf.mxu0
  %v168 = vadd.f32 %v58, %v167
  %v169 = vpop.f32.mrf.mxu0
  %v170 = vpop.f32.mrf.mxu0
  %v171 = vadd.f32 %v58, %v170
  %v172 = vpop.f32.mrf.mxu0
  %173 = vmatprep.mubr.bf16.mxu0 0
  %174 = vmatmul.mubr.bf16.gmra.mxu0 %v98
  %v175 = vpop.f32.mrf.mxu0
  %v176 = vadd.f32 %v58, %v175
  %v177 = vpop.f32.mrf.mxu0
  %v178 = vpop.f32.mrf.mxu0
  %v179 = vadd.f32 %v58, %v178
  %v180 = vpop.f32.mrf.mxu0
  %181 = vmatprep.mubr.bf16.mxu0 0
  %182 = vmatmul.mubr.bf16.gmra.mxu0 %v101
  %v183 = vpop.f32.mrf.mxu0
  %v184 = vadd.f32 %v58, %v183
  %v185 = vpop.f32.mrf.mxu0
  %v186 = vpop.f32.mrf.mxu0
  %v187 = vadd.f32 %v58, %v186
  %v188 = vpop.f32.mrf.mxu0
  %189 = vmatprep.mubr.bf16.mxu0 0
  %190 = vmatmul.mubr.bf16.gmra.mxu0 %v104
  %v191 = vpop.f32.mrf.mxu0
  %v192 = vadd.f32 %v58, %v191
  %v193 = vpop.f32.mrf.mxu0
  %v194 = vpop.f32.mrf.mxu0
  %v195 = vadd.f32 %v58, %v194
  %v196 = vpop.f32.mrf.mxu0
  %197 = vmatprep.mubr.bf16.mxu0 0
  %198 = vmatmul.mubr.bf16.gmra.mxu0 %v107
  %v199 = vpop.f32.mrf.mxu0
  %v200 = vadd.f32 %v58, %v199
  %v201 = vpop.f32.mrf.mxu0
  %v202 = vpop.f32.mrf.mxu0
  %v203 = vadd.f32 %v58, %v202
  %v204 = vpop.f32.mrf.mxu0
  %205 = vdwg.mxu0
  %v206 = vmax.f32 %v144, 0.0
  %v207 = vmax.f32 %v147, 0.0
  %v208 = vmax.f32 %v152, 0.0
  %v209 = vmax.f32 %v155, 0.0
  %v210 = vmax.f32 %v160, 0.0
  %v211 = vmax.f32 %v163, 0.0
  %v212 = vmax.f32 %v168, 0.0
  %v213 = vmax.f32 %v171, 0.0
  %v214 = vmax.f32 %v176, 0.0
  %v215 = vmax.f32 %v179, 0.0
  %v216 = vmax.f32 %v184, 0.0
  %v217 = vmax.f32 %v187, 0.0
  %v218 = vmax.f32 %v192, 0.0
  %v219 = vmax.f32 %v195, 0.0
  %v220 = vmax.f32 %v200, 0.0
  %v221 = vmax.f32 %v203, 0.0
  %v222 = vpack.c.bf16 %v207, %v206
  %v223 = vpack.c.bf16 %v209, %v208
  %v224 = vpack.c.bf16 %v211, %v210
  %v225 = vpack.c.bf16 %v213, %v212
  %v226 = vpack.c.bf16 %v215, %v214
  %v227 = vpack.c.bf16 %v217, %v216
  %v228 = vpack.c.bf16 %v219, %v218
  %v229 = vpack.c.bf16 %v221, %v220
  %v230 = vld [vmem:[%s3] sm:$0xf]
  %v231 = vld [vmem:[%s3 + $0x4] sm:$0xf]
  %v232 = vld [vmem:[%s3 + $0x8] sm:$0xf]
  %v233 = vld [vmem:[%s3 + $0xc] sm:$0xf]
  %v234 = vld [vmem:[%s3 + $0x10] sm:$0xf]
  %v235 = vld [vmem:[%s3 + $0x14] sm:$0xf]
  %v236 = vld [vmem:[%s4] sm:$0x1]
  %v238 = vlaneseq
  %v239 = vshrl.u32 %v238, 7
  %v240 = vsub.s32 0, %v239
  %v241 = vrot.slane %v236, %v240
  %v249 = vunpack.c.l.b16 %v230
  %v250 = vunpack.c.l.b16 %v231
  %v251 = vunpack.c.l.b16 %v232
  %v252 = vunpack.c.l.b16 %v233
  %v253 = vunpack.c.l.b16 %v234
  %v254 = vunpack.c.l.b16 %v235
  %v255 = vpack.c.b16 %v250, %v249
  %v256 = vpack.c.b16 %v252, %v251
  %v257 = vpack.c.b16 %v254, %v253
  %vm261 = vcmask 392192
  %v263 = vsel %vm261, %v222, 0
  %v266 = vsel %vm261, %v223, 0
  %v269 = vsel %vm261, %v224, 0
  %v272 = vsel %vm261, %v225, 0
  %v275 = vsel %vm261, %v226, 0
  %v278 = vsel %vm261, %v227, 0
  %v281 = vsel %vm261, %v228, 0
  %v284 = vsel %vm261, %v229, 0
  %286 = vmatprep.subr.bf16.mxu0 0
  %287 = vmatpush1.bf16.msra.mxu0 0
  %288 = vmatprep.subr.bf16.mxu0 0
  %289 = vmatpush1.bf16.msra.mxu0 0
  %290 = vmatprep.subr.bf16.mxu0 0
  %291 = vmatpush1.bf16.msra.mxu0 0
  %292 = vmatprep.subr.bf16.mxu0 0
  %293 = vmatpush1.bf16.msra.mxu0 0
  %294 = vmatprep.subr.bf16.mxu0 0
  %295 = vmatpush1.bf16.msra.mxu0 0
  %296 = vmatprep.subr.bf16.mxu0 0
  %297 = vmatpush1.bf16.msra.mxu0 %v257
  %298 = vmatprep.subr.bf16.mxu0 0
  %299 = vmatpush1.bf16.msra.mxu0 %v256
  %300 = vmatprep.subr.bf16.mxu0 0
  %301 = vmatpush1.bf16.msra.mxu0 %v255
  %302 = vmatprep.subr.bf16.mxu0 0
  %303 = vmatpush2.bf16.msra.mxu0 0
  %304 = vmatprep.subr.bf16.mxu0 0
  %305 = vmatpush2.bf16.msra.mxu0 0
  %306 = vmatprep.subr.bf16.mxu0 0
  %307 = vmatpush2.bf16.msra.mxu0 0
  %308 = vmatprep.subr.bf16.mxu0 0
  %309 = vmatpush2.bf16.msra.mxu0 0
  %310 = vmatprep.subr.bf16.mxu0 0
  %311 = vmatpush2.bf16.msra.mxu0 0
  %312 = vmatprep.subr.bf16.mxu0 0
  %313 = vmatpush2.bf16.msra.mxu0 0
  %314 = vmatprep.subr.bf16.mxu0 0
  %315 = vmatpush2.bf16.msra.mxu0 0
  %316 = vmatprep.subr.bf16.mxu0 0
  %317 = vmatpush2.bf16.msra.mxu0 0
  %318 = vmatprep.mubr.bf16.mxu0 0
  %319 = vmatmul.mubr.bf16.gmra.mxu0 %v263
  %v320 = vpop.f32.mrf.mxu0
  %v321 = vadd.f32 %v241, %v320
  %v322 = vpop.f32.mrf.mxu0
  %v323 = vpop.f32.mrf.mxu0
  %v324 = vadd.f32 %v241, %v323
  %v325 = vpop.f32.mrf.mxu0
  %326 = vmatprep.mubr.bf16.mxu0 0
  %327 = vmatmul.mubr.bf16.gmra.mxu0 %v266
  %v328 = vpop.f32.mrf.mxu0
  %v329 = vadd.f32 %v241, %v328
  %v330 = vpop.f32.mrf.mxu0
  %v331 = vpop.f32.mrf.mxu0
  %v332 = vadd.f32 %v241, %v331
  %v333 = vpop.f32.mrf.mxu0
  %334 = vmatprep.mubr.bf16.mxu0 0
  %335 = vmatmul.mubr.bf16.gmra.mxu0 %v269
  %v336 = vpop.f32.mrf.mxu0
  %v337 = vadd.f32 %v241, %v336
  %v338 = vpop.f32.mrf.mxu0
  %v339 = vpop.f32.mrf.mxu0
  %v340 = vadd.f32 %v241, %v339
  %v341 = vpop.f32.mrf.mxu0
  %342 = vmatprep.mubr.bf16.mxu0 0
  %343 = vmatmul.mubr.bf16.gmra.mxu0 %v272
  %v344 = vpop.f32.mrf.mxu0
  %v345 = vadd.f32 %v241, %v344
  %v346 = vpop.f32.mrf.mxu0
  %v347 = vpop.f32.mrf.mxu0
  %v348 = vadd.f32 %v241, %v347
  %v349 = vpop.f32.mrf.mxu0
  %350 = vmatprep.mubr.bf16.mxu0 0
  %351 = vmatmul.mubr.bf16.gmra.mxu0 %v275
  %v352 = vpop.f32.mrf.mxu0
  %v353 = vadd.f32 %v241, %v352
  %v354 = vpop.f32.mrf.mxu0
  %v355 = vpop.f32.mrf.mxu0
  %v356 = vadd.f32 %v241, %v355
  %v357 = vpop.f32.mrf.mxu0
  %358 = vmatprep.mubr.bf16.mxu0 0
  %359 = vmatmul.mubr.bf16.gmra.mxu0 %v278
  %v360 = vpop.f32.mrf.mxu0
  %v361 = vadd.f32 %v241, %v360
  %v362 = vpop.f32.mrf.mxu0
  %v363 = vpop.f32.mrf.mxu0
  %v364 = vadd.f32 %v241, %v363
  %v365 = vpop.f32.mrf.mxu0
  %366 = vmatprep.mubr.bf16.mxu0 0
  %367 = vmatmul.mubr.bf16.gmra.mxu0 %v281
  %v368 = vpop.f32.mrf.mxu0
  %v369 = vadd.f32 %v241, %v368
  %v370 = vpop.f32.mrf.mxu0
  %v371 = vpop.f32.mrf.mxu0
  %v372 = vadd.f32 %v241, %v371
  %v373 = vpop.f32.mrf.mxu0
  %374 = vmatprep.mubr.bf16.mxu0 0
  %375 = vmatmul.mubr.bf16.gmra.mxu0 %v284
  %v376 = vpop.f32.mrf.mxu0
  %v377 = vadd.f32 %v241, %v376
  %v378 = vpop.f32.mrf.mxu0
  %v379 = vpop.f32.mrf.mxu0
  %v380 = vadd.f32 %v241, %v379
  %v381 = vpop.f32.mrf.mxu0
  %382 = vdwg.mxu0
  %v383 = vmul.f32 %v321, %v321
  %v384 = vmul.f32 %v324, %v324
  %v385 = vmul.f32 %v329, %v329
  %v386 = vmul.f32 %v332, %v332
  %v387 = vmul.f32 %v337, %v337
  %v388 = vmul.f32 %v340, %v340
  %v389 = vmul.f32 %v345, %v345
  %v390 = vmul.f32 %v348, %v348
  %v391 = vmul.f32 %v353, %v353
  %v392 = vmul.f32 %v356, %v356
  %v393 = vmul.f32 %v361, %v361
  %v394 = vmul.f32 %v364, %v364
  %v395 = vmul.f32 %v369, %v369
  %v396 = vmul.f32 %v372, %v372
  %v397 = vmul.f32 %v377, %v377
  %v398 = vmul.f32 %v380, %v380
  %399 = vadd.xlane.f32.xlu0 %v383
  %v400 = vpop.xlane.xlu0 %399
  %401 = vadd.xlane.f32.xlu0 %v384
  %v402 = vpop.xlane.xlu0 %401
  %403 = vadd.xlane.f32.xlu0 %v385
  %v404 = vpop.xlane.xlu0 %403
  %405 = vadd.xlane.f32.xlu0 %v386
  %v406 = vpop.xlane.xlu0 %405
  %407 = vadd.xlane.f32.xlu0 %v387
  %v408 = vpop.xlane.xlu0 %407
  %409 = vadd.xlane.f32.xlu0 %v388
  %v410 = vpop.xlane.xlu0 %409
  %411 = vadd.xlane.f32.xlu0 %v389
  %v412 = vpop.xlane.xlu0 %411
  %413 = vadd.xlane.f32.xlu0 %v390
  %v414 = vpop.xlane.xlu0 %413
  %415 = vadd.xlane.f32.xlu0 %v391
  %v416 = vpop.xlane.xlu0 %415
  %417 = vadd.xlane.f32.xlu0 %v392
  %v418 = vpop.xlane.xlu0 %417
  %419 = vadd.xlane.f32.xlu0 %v393
  %v420 = vpop.xlane.xlu0 %419
  %421 = vadd.xlane.f32.xlu0 %v394
  %v422 = vpop.xlane.xlu0 %421
  %423 = vadd.xlane.f32.xlu0 %v395
  %v424 = vpop.xlane.xlu0 %423
  %425 = vadd.xlane.f32.xlu0 %v396
  %v426 = vpop.xlane.xlu0 %425
  %427 = vadd.xlane.f32.xlu0 %v397
  %v428 = vpop.xlane.xlu0 %427
  %429 = vadd.xlane.f32.xlu0 %v398
  %v430 = vpop.xlane.xlu0 %429
  %v431 = vadd.f32 %v400, 1e-08
  %v432 = vadd.f32 %v402, 1e-08
  %v433 = vadd.f32 %v404, 1e-08
  %v434 = vadd.f32 %v406, 1e-08
  %v435 = vadd.f32 %v408, 1e-08
  %v436 = vadd.f32 %v410, 1e-08
  %v437 = vadd.f32 %v412, 1e-08
  %v438 = vadd.f32 %v414, 1e-08
  %v439 = vadd.f32 %v416, 1e-08
  %v440 = vadd.f32 %v418, 1e-08
  %v441 = vadd.f32 %v420, 1e-08
  %v442 = vadd.f32 %v422, 1e-08
  %v443 = vadd.f32 %v424, 1e-08
  %v444 = vadd.f32 %v426, 1e-08
  %v445 = vadd.f32 %v428, 1e-08
  %v446 = vadd.f32 %v430, 1e-08
  %v447 = vrsqrt.pop %v431
  %v448 = vrsqrt.pop %v432
  %v449 = vrsqrt.pop %v433
  %v450 = vrsqrt.pop %v434
  %v451 = vrsqrt.pop %v435
  %v452 = vrsqrt.pop %v436
  %v453 = vrsqrt.pop %v437
  %v454 = vrsqrt.pop %v438
  %v455 = vrsqrt.pop %v439
  %v456 = vrsqrt.pop %v440
  %v457 = vrsqrt.pop %v441
  %v458 = vrsqrt.pop %v442
  %v459 = vrsqrt.pop %v443
  %v460 = vrsqrt.pop %v444
  %v461 = vrsqrt.pop %v445
  %v462 = vrsqrt.pop %v446
  %s463 = smul.u32 0, 128
  %v464 = vlaneseq
  %v465 = vshrl.u32 %v464, 7
  %v466 = vadd.s32 %v465, 8
  %v467 = vadd.s32 %v465, 16
  %v468 = vadd.s32 %v465, 24
  %v469 = vadd.s32 %v465, 32
  %v470 = vadd.s32 %v465, 40
  %v471 = vadd.s32 %v465, 48
  %v472 = vadd.s32 %v465, 56
  %v473 = vadd.s32 %v465, 64
  %v474 = vadd.s32 %v465, 72
  %v475 = vadd.s32 %v465, 80
  %v476 = vadd.s32 %v465, 88
  %v477 = vadd.s32 %v465, 96
  %v478 = vadd.s32 %v465, 104
  %v479 = vadd.s32 %v465, 112
  %v480 = vadd.s32 %v465, 120
  %v481 = vstv %s463
  %v482 = vadd.s32 %v465, %v481
  %v483 = vadd.s32 %v466, %v481
  %v484 = vadd.s32 %v467, %v481
  %v485 = vadd.s32 %v468, %v481
  %v486 = vadd.s32 %v469, %v481
  %v487 = vadd.s32 %v470, %v481
  %v488 = vadd.s32 %v471, %v481
  %v489 = vadd.s32 %v472, %v481
  %v490 = vadd.s32 %v473, %v481
  %v491 = vadd.s32 %v474, %v481
  %v492 = vadd.s32 %v475, %v481
  %v493 = vadd.s32 %v476, %v481
  %v494 = vadd.s32 %v477, %v481
  %v495 = vadd.s32 %v478, %v481
  %v496 = vadd.s32 %v479, %v481
  %v497 = vadd.s32 %v480, %v481
  %vm498 = vcmp.lt.s32.totalorder %v482, 16
  %vm499 = vcmp.lt.s32.totalorder %v483, 16
  %vm500 = vcmp.lt.s32.totalorder %v484, 16
  %vm501 = vcmp.lt.s32.totalorder %v485, 16
  %vm502 = vcmp.lt.s32.totalorder %v486, 16
  %vm503 = vcmp.lt.s32.totalorder %v487, 16
  %vm504 = vcmp.lt.s32.totalorder %v488, 16
  %vm505 = vcmp.lt.s32.totalorder %v489, 16
  %vm506 = vcmp.lt.s32.totalorder %v490, 16
  %vm507 = vcmp.lt.s32.totalorder %v491, 16
  %vm508 = vcmp.lt.s32.totalorder %v492, 16
  %vm509 = vcmp.lt.s32.totalorder %v493, 16
  %vm510 = vcmp.lt.s32.totalorder %v494, 16
  %vm511 = vcmp.lt.s32.totalorder %v495, 16
  %vm512 = vcmp.lt.s32.totalorder %v496, 16
  %vm513 = vcmp.lt.s32.totalorder %v497, 16
  %v514 = vsel %vm498, 1, 0
  %v515 = vsel %vm499, 1, 0
  %v516 = vsel %vm500, 1, 0
  %v517 = vsel %vm501, 1, 0
  %v518 = vsel %vm502, 1, 0
  %v519 = vsel %vm503, 1, 0
  %v520 = vsel %vm504, 1, 0
  %v521 = vsel %vm505, 1, 0
  %v522 = vsel %vm506, 1, 0
  %v523 = vsel %vm507, 1, 0
  %v524 = vsel %vm508, 1, 0
  %v525 = vsel %vm509, 1, 0
  %v526 = vsel %vm510, 1, 0
  %v527 = vsel %vm511, 1, 0
  %v528 = vsel %vm512, 1, 0
  %v529 = vsel %vm513, 1, 0
  %v530 = vcvt.s32.f32 %v514
  %v531 = vcvt.s32.f32 %v515
  %v532 = vcvt.s32.f32 %v516
  %v533 = vcvt.s32.f32 %v517
  %v534 = vcvt.s32.f32 %v518
  %v535 = vcvt.s32.f32 %v519
  %v536 = vcvt.s32.f32 %v520
  %v537 = vcvt.s32.f32 %v521
  %v538 = vcvt.s32.f32 %v522
  %v539 = vcvt.s32.f32 %v523
  %v540 = vcvt.s32.f32 %v524
  %v541 = vcvt.s32.f32 %v525
  %v542 = vcvt.s32.f32 %v526
  %v543 = vcvt.s32.f32 %v527
  %v544 = vcvt.s32.f32 %v528
  %v545 = vcvt.s32.f32 %v529
  %v546 = vmul.f32 %v321, %v447
  %v547 = vmul.f32 %v324, %v448
  %v548 = vmul.f32 %v329, %v449
  %v549 = vmul.f32 %v332, %v450
  %v550 = vmul.f32 %v337, %v451
  %v551 = vmul.f32 %v340, %v452
  %v552 = vmul.f32 %v345, %v453
  %v553 = vmul.f32 %v348, %v454
  %v554 = vmul.f32 %v353, %v455
  %v555 = vmul.f32 %v356, %v456
  %v556 = vmul.f32 %v361, %v457
  %v557 = vmul.f32 %v364, %v458
  %v558 = vmul.f32 %v369, %v459
  %v559 = vmul.f32 %v372, %v460
  %v560 = vmul.f32 %v377, %v461
  %v561 = vmul.f32 %v380, %v462
  %v562 = vmul.f32 %v546, %v530
  %v563 = vmul.f32 %v547, %v531
  %v564 = vmul.f32 %v548, %v532
  %v565 = vmul.f32 %v549, %v533
  %v566 = vmul.f32 %v550, %v534
  %v567 = vmul.f32 %v551, %v535
  %v568 = vmul.f32 %v552, %v536
  %v569 = vmul.f32 %v553, %v537
  %v570 = vmul.f32 %v554, %v538
  %v571 = vmul.f32 %v555, %v539
  %v572 = vmul.f32 %v556, %v540
  %v573 = vmul.f32 %v557, %v541
  %v574 = vmul.f32 %v558, %v542
  %v575 = vmul.f32 %v559, %v543
  %v576 = vmul.f32 %v560, %v544
  %v577 = vmul.f32 %v561, %v545
  %v578 = vpack.c.bf16 %v563, %v562
  %v579 = vpack.c.bf16 %v565, %v564
  %v580 = vpack.c.bf16 %v567, %v566
  %v581 = vpack.c.bf16 %v569, %v568
  %v582 = vpack.c.bf16 %v571, %v570
  %v583 = vpack.c.bf16 %v573, %v572
  %v584 = vpack.c.bf16 %v575, %v574
  %v585 = vpack.c.bf16 %v577, %v576
  %v594 = vunpack.c.l.b16 %v578
  %v595 = vunpack.c.h.b16 %v578
  %v596 = vunpack.c.l.b16 %v579
  %v597 = vunpack.c.h.b16 %v579
  %v598 = vunpack.c.l.b16 %v580
  %v599 = vunpack.c.h.b16 %v580
  %v600 = vunpack.c.l.b16 %v581
  %v601 = vunpack.c.h.b16 %v581
  %v602 = vunpack.c.l.b16 %v582
  %v603 = vunpack.c.h.b16 %v582
  %v604 = vunpack.c.l.b16 %v583
  %v605 = vunpack.c.h.b16 %v583
  %v606 = vunpack.c.l.b16 %v584
  %v607 = vunpack.c.h.b16 %v584
  %v608 = vunpack.c.l.b16 %v585
  %v609 = vunpack.c.h.b16 %v585
  %v610 = vpack.c.b16 %v594, %v594
  %v611 = vpack.c.b16 %v595, %v595
  %v612 = vpack.c.b16 %v596, %v596
  %v613 = vpack.c.b16 %v597, %v597
  %v614 = vpack.c.b16 %v598, %v598
  %v615 = vpack.c.b16 %v599, %v599
  %v616 = vpack.c.b16 %v600, %v600
  %v617 = vpack.c.b16 %v601, %v601
  %v618 = vpack.c.b16 %v602, %v602
  %v619 = vpack.c.b16 %v603, %v603
  %v620 = vpack.c.b16 %v604, %v604
  %v621 = vpack.c.b16 %v605, %v605
  %v622 = vpack.c.b16 %v606, %v606
  %v623 = vpack.c.b16 %v607, %v607
  %v624 = vpack.c.b16 %v608, %v608
  %v625 = vpack.c.b16 %v609, %v609
  %642 = vst [vmem:[%s5] sm:$0xf] %v610
  %643 = vst [vmem:[%s5 + $0x4] sm:$0xf] %v611
  %644 = vst [vmem:[%s5 + $0x8] sm:$0xf] %v612
  %645 = vst [vmem:[%s5 + $0xc] sm:$0xf] %v613
  %646 = vst [vmem:[%s5 + $0x10] sm:$0xf] %v614
  %647 = vst [vmem:[%s5 + $0x14] sm:$0xf] %v615
  %648 = vst [vmem:[%s5 + $0x18] sm:$0xf] %v616
  %649 = vst [vmem:[%s5 + $0x1c] sm:$0xf] %v617
  %650 = vst [vmem:[%s5 + $0x20] sm:$0xf] %v618
  %651 = vst [vmem:[%s5 + $0x24] sm:$0xf] %v619
  %652 = vst [vmem:[%s5 + $0x28] sm:$0xf] %v620
  %653 = vst [vmem:[%s5 + $0x2c] sm:$0xf] %v621
  %654 = vst [vmem:[%s5 + $0x30] sm:$0xf] %v622
  %655 = vst [vmem:[%s5 + $0x34] sm:$0xf] %v623
  %656 = vst [vmem:[%s5 + $0x38] sm:$0xf] %v624
  %657 = vst [vmem:[%s5 + $0x3c] sm:$0xf] %v625
  // Predicated region
  $region22: #{ncdnet_con_forward.6} parent=0 // pred_check
    _
  $region23: #{ncdnet_con_forward.6} parent=0 // pred_check_branch
    %659 = sbr.rel (0) target = $region25
  $region24: #{ncdnet_con_forward.6} parent=0 // pred_region
    _
  $region25: #{ncdnet_con_forward.6} parent=0 // pred_fallthru
    _
  // Predicated region
  $region26: #{ncdnet_con_forward.6} parent=0 // pred_check
    _
  $region27: #{ncdnet_con_forward.6} parent=0 // pred_check_branch
    %661 = sbr.rel (0) target = $region29
  $region28: #{ncdnet_con_forward.6} parent=0 // pred_region
    _
  $region29: #{ncdnet_con_forward.6} parent=0 // pred_fallthru
    _

// kernel: ncdnet_con_forward.7
$region0: #{ncdnet_con_forward.7}
  #allocation0 [shape = 'u32[]', space=smem, size = 0x4, offset = 0x4, fixed_abs, tag = 'smem constant byte address 0x4 - core index']
  #allocation1 [shape = 'u32[144,128]{1,0:T(1,128)}', space=vmem, size = 0x12000, scoped, tag = 'internal scratch']
  %s0 = inlined_call_operand.vmem [shape: f32[128,48], index: 0, kind: input, shape index: {}]
  %s1 = inlined_call_operand.vmem [shape: bf16[48,1024], index: 1, kind: input, shape index: {}]
  %s2 = inlined_call_operand.vmem [shape: f32[1,1024], index: 2, kind: input, shape index: {}]
  %s3 = inlined_call_operand.vmem [shape: bf16[1024,128], index: 3, kind: input, shape index: {}]
  %s4 = inlined_call_operand.vmem [shape: f32[1,128], index: 4, kind: input, shape index: {}]
  %s5 = inlined_call_operand.vmem [shape: bf16[128,128], index: 5, kind: output, shape index: {}]
  %s6 = sld [smem:[#allocation0]]
  $region30: #{ncdnet_con_forward.7} parent=0
    _
  %s8 = ssub.s32 1, %s6
  %s9 = scalar_select 0, %s8, %s6
  // Predicated region
  $region2: #{ncdnet_con_forward.7} parent=0 // pred_check
    _
  $region3: #{ncdnet_con_forward.7} parent=0 // pred_check_branch
    %11 = sbr.rel (0) target = $region5
  $region4: #{ncdnet_con_forward.7} parent=0 // pred_region
    _
  $region5: #{ncdnet_con_forward.7} parent=0 // pred_fallthru
    _
  // Predicated region
  $region6: #{ncdnet_con_forward.7} parent=0 // pred_check
    _
  $region7: #{ncdnet_con_forward.7} parent=0 // pred_check_branch
    %13 = sbr.rel (0) target = $region9
  $region8: #{ncdnet_con_forward.7} parent=0 // pred_region
    _
  $region9: #{ncdnet_con_forward.7} parent=0 // pred_fallthru
    _
  // Predicated region
  $region10: #{ncdnet_con_forward.7} parent=0 // pred_check
    _
  $region11: #{ncdnet_con_forward.7} parent=0 // pred_check_branch
    %15 = sbr.rel (0) target = $region13
  $region12: #{ncdnet_con_forward.7} parent=0 // pred_region
    _
  $region13: #{ncdnet_con_forward.7} parent=0 // pred_fallthru
    _
  // Predicated region
  $region14: #{ncdnet_con_forward.7} parent=0 // pred_check
    _
  $region15: #{ncdnet_con_forward.7} parent=0 // pred_check_branch
    %17 = sbr.rel (0) target = $region17
  $region16: #{ncdnet_con_forward.7} parent=0 // pred_region
    _
  $region17: #{ncdnet_con_forward.7} parent=0 // pred_fallthru
    _
  // Predicated region
  $region18: #{ncdnet_con_forward.7} parent=0 // pred_check
    _
  $region19: #{ncdnet_con_forward.7} parent=0 // pred_check_branch
    %19 = sbr.rel (0) target = $region21
  $region20: #{ncdnet_con_forward.7} parent=0 // pred_region
    _
  $region21: #{ncdnet_con_forward.7} parent=0 // pred_fallthru
    _
  %v21 = vld [vmem:[%s0] sm:$0xff]
  %v22 = vld [vmem:[%s0 + $0x8] sm:$0xff]
  %v23 = vld [vmem:[%s0 + $0x10] sm:$0xff]
  %v24 = vld [vmem:[%s0 + $0x18] sm:$0xff]
  %v25 = vld [vmem:[%s0 + $0x20] sm:$0xff]
  %v26 = vld [vmem:[%s0 + $0x28] sm:$0xff]
  %v27 = vld [vmem:[%s0 + $0x30] sm:$0xff]
  %v28 = vld [vmem:[%s0 + $0x38] sm:$0xff]
  %v29 = vld [vmem:[%s0 + $0x40] sm:$0xff]
  %v30 = vld [vmem:[%s0 + $0x48] sm:$0xff]
  %v31 = vld [vmem:[%s0 + $0x50] sm:$0xff]
  %v32 = vld [vmem:[%s0 + $0x58] sm:$0xff]
  %v33 = vld [vmem:[%s0 + $0x60] sm:$0xff]
  %v34 = vld [vmem:[%s0 + $0x68] sm:$0xff]
  %v35 = vld [vmem:[%s0 + $0x70] sm:$0xff]
  %v36 = vld [vmem:[%s0 + $0x78] sm:$0xff]
  %v37 = vpack.c.bf16 %v22, %v21
  %v38 = vpack.c.bf16 %v24, %v23
  %v39 = vpack.c.bf16 %v26, %v25
  %v40 = vpack.c.bf16 %v28, %v27
  %v41 = vpack.c.bf16 %v30, %v29
  %v42 = vpack.c.bf16 %v32, %v31
  %v43 = vpack.c.bf16 %v34, %v33
  %v44 = vpack.c.bf16 %v36, %v35
  %v45 = vld [vmem:[%s1] sm:$0xff]
  %v46 = vld [vmem:[%s1 + $0x8] sm:$0xff]
  %v47 = vld [vmem:[%s1 + $0x10] sm:$0xff]
  %v48 = vld [vmem:[%s1 + $0x18] sm:$0xff]
  %v49 = vld [vmem:[%s1 + $0x20] sm:$0xff]
  %v50 = vld [vmem:[%s1 + $0x28] sm:$0xff]
  %v51 = vld [vmem:[%s1 + $0x30] sm:$0xff]
  %v52 = vld [vmem:[%s1 + $0x38] sm:$0xff]
  %v53 = vld [vmem:[%s1 + $0x40] sm:$0xff]
  %v54 = vld [vmem:[%s1 + $0x48] sm:$0xff]
  %v55 = vld [vmem:[%s1 + $0x50] sm:$0xff]
  %v56 = vld [vmem:[%s1 + $0x58] sm:$0xff]
  %v57 = vld [vmem:[%s1 + $0x60] sm:$0xff]
  %v58 = vld [vmem:[%s1 + $0x68] sm:$0xff]
  %v59 = vld [vmem:[%s1 + $0x70] sm:$0xff]
  %v60 = vld [vmem:[%s1 + $0x78] sm:$0xff]
  %v61 = vld [vmem:[%s1 + $0x80] sm:$0xff]
  %v62 = vld [vmem:[%s1 + $0x88] sm:$0xff]
  %v63 = vld [vmem:[%s1 + $0x90] sm:$0xff]
  %v64 = vld [vmem:[%s1 + $0x98] sm:$0xff]
  %v65 = vld [vmem:[%s1 + $0xa0] sm:$0xff]
  %v66 = vld [vmem:[%s1 + $0xa8] sm:$0xff]
  %v67 = vld [vmem:[%s1 + $0xb0] sm:$0xff]
  %v68 = vld [vmem:[%s1 + $0xb8] sm:$0xff]
  %v69 = vld [vmem:[%s2] sm:$0xff]
  %v71 = vlaneseq
  %v72 = vshrl.u32 %v71, 7
  %v73 = vsub.s32 0, %v72
  %v74 = vrot.slane %v69, %v73
  %v75 = vlaneseq
  %v76 = vshrl.u32 %v75, 7
  %v77 = vsub.s32 1, %v76
  %v78 = vrot.slane %v69, %v77
  %v79 = vlaneseq
  %v80 = vshrl.u32 %v79, 7
  %v81 = vsub.s32 2, %v80
  %v82 = vrot.slane %v69, %v81
  %v83 = vlaneseq
  %v84 = vshrl.u32 %v83, 7
  %v85 = vsub.s32 3, %v84
  %v86 = vrot.slane %v69, %v85
  %v87 = vlaneseq
  %v88 = vshrl.u32 %v87, 7
  %v89 = vsub.s32 4, %v88
  %v90 = vrot.slane %v69, %v89
  %v91 = vlaneseq
  %v92 = vshrl.u32 %v91, 7
  %v93 = vsub.s32 5, %v92
  %v94 = vrot.slane %v69, %v93
  %v95 = vlaneseq
  %v96 = vshrl.u32 %v95, 7
  %v97 = vsub.s32 6, %v96
  %v98 = vrot.slane %v69, %v97
  %v99 = vlaneseq
  %v100 = vshrl.u32 %v99, 7
  %v101 = vsub.s32 7, %v100
  %v102 = vrot.slane %v69, %v101
  %v135 = vunpack.c.l.b16 %v45
  %v136 = vunpack.c.h.b16 %v45
  %v137 = vunpack.c.l.b16 %v46
  %v138 = vunpack.c.h.b16 %v46
  %v139 = vunpack.c.l.b16 %v47
  %v140 = vunpack.c.h.b16 %v47
  %v141 = vunpack.c.l.b16 %v48
  %v142 = vunpack.c.h.b16 %v48
  %v143 = vunpack.c.l.b16 %v49
  %v144 = vunpack.c.h.b16 %v49
  %v145 = vunpack.c.l.b16 %v50
  %v146 = vunpack.c.h.b16 %v50
  %v147 = vunpack.c.l.b16 %v51
  %v148 = vunpack.c.h.b16 %v51
  %v149 = vunpack.c.l.b16 %v52
  %v150 = vunpack.c.h.b16 %v52
  %v151 = vunpack.c.l.b16 %v53
  %v152 = vunpack.c.h.b16 %v53
  %v153 = vunpack.c.l.b16 %v54
  %v154 = vunpack.c.h.b16 %v54
  %v155 = vunpack.c.l.b16 %v55
  %v156 = vunpack.c.h.b16 %v55
  %v157 = vunpack.c.l.b16 %v56
  %v158 = vunpack.c.h.b16 %v56
  %v159 = vunpack.c.l.b16 %v57
  %v160 = vunpack.c.h.b16 %v57
  %v161 = vunpack.c.l.b16 %v58
  %v162 = vunpack.c.h.b16 %v58
  %v163 = vunpack.c.l.b16 %v59
  %v164 = vunpack.c.h.b16 %v59
  %v165 = vunpack.c.l.b16 %v60
  %v166 = vunpack.c.h.b16 %v60
  %v167 = vunpack.c.l.b16 %v61
  %v168 = vunpack.c.h.b16 %v61
  %v169 = vunpack.c.l.b16 %v62
  %v170 = vunpack.c.h.b16 %v62
  %v171 = vunpack.c.l.b16 %v63
  %v172 = vunpack.c.h.b16 %v63
  %v173 = vunpack.c.l.b16 %v64
  %v174 = vunpack.c.h.b16 %v64
  %v175 = vunpack.c.l.b16 %v65
  %v176 = vunpack.c.h.b16 %v65
  %v177 = vunpack.c.l.b16 %v66
  %v178 = vunpack.c.h.b16 %v66
  %v179 = vunpack.c.l.b16 %v67
  %v180 = vunpack.c.h.b16 %v67
  %v181 = vunpack.c.l.b16 %v68
  %v182 = vunpack.c.h.b16 %v68
  %v183 = vpack.c.b16 %v143, %v135
  %v184 = vpack.c.b16 %v144, %v136
  %v185 = vpack.c.b16 %v145, %v137
  %v186 = vpack.c.b16 %v146, %v138
  %v187 = vpack.c.b16 %v147, %v139
  %v188 = vpack.c.b16 %v148, %v140
  %v189 = vpack.c.b16 %v149, %v141
  %v190 = vpack.c.b16 %v150, %v142
  %v191 = vpack.c.b16 %v159, %v151
  %v192 = vpack.c.b16 %v160, %v152
  %v193 = vpack.c.b16 %v161, %v153
  %v194 = vpack.c.b16 %v162, %v154
  %v195 = vpack.c.b16 %v163, %v155
  %v196 = vpack.c.b16 %v164, %v156
  %v197 = vpack.c.b16 %v165, %v157
  %v198 = vpack.c.b16 %v166, %v158
  %v199 = vpack.c.b16 %v175, %v167
  %v200 = vpack.c.b16 %v176, %v168
  %v201 = vpack.c.b16 %v177, %v169
  %v202 = vpack.c.b16 %v178, %v170
  %v203 = vpack.c.b16 %v179, %v171
  %v204 = vpack.c.b16 %v180, %v172
  %v205 = vpack.c.b16 %v181, %v173
  %v206 = vpack.c.b16 %v182, %v174
  %vm231 = vcmask 392192
  %v233 = vsel %vm231, %v37, 0
  %v236 = vsel %vm231, %v38, 0
  %v239 = vsel %vm231, %v39, 0
  %v242 = vsel %vm231, %v40, 0
  %v245 = vsel %vm231, %v41, 0
  %v248 = vsel %vm231, %v42, 0
  %v251 = vsel %vm231, %v43, 0
  %v254 = vsel %vm231, %v44, 0
  %256 = vmatprep.subr.bf16.mxu0 0
  %257 = vmatpush1.bf16.msra.mxu0 0
  %258 = vmatprep.subr.bf16.mxu0 0
  %259 = vmatpush1.bf16.msra.mxu0 0
  %260 = vmatprep.subr.bf16.mxu0 0
  %261 = vmatpush1.bf16.msra.mxu0 0
  %262 = vmatprep.subr.bf16.mxu0 0
  %263 = vmatpush1.bf16.msra.mxu0 0
  %264 = vmatprep.subr.bf16.mxu0 0
  %265 = vmatpush1.bf16.msra.mxu0 0
  %266 = vmatprep.subr.bf16.mxu0 %v200
  %267 = vmatpush1.bf16.msra.mxu0 %v199
  %268 = vmatprep.subr.bf16.mxu0 %v192
  %269 = vmatpush1.bf16.msra.mxu0 %v191
  %270 = vmatprep.subr.bf16.mxu0 %v184
  %271 = vmatpush1.bf16.msra.mxu0 %v183
  %272 = vmatprep.subr.bf16.mxu0 0
  %273 = vmatpush2.bf16.msra.mxu0 0
  %274 = vmatprep.subr.bf16.mxu0 0
  %275 = vmatpush2.bf16.msra.mxu0 0
  %276 = vmatprep.subr.bf16.mxu0 0
  %277 = vmatpush2.bf16.msra.mxu0 0
  %278 = vmatprep.subr.bf16.mxu0 0
  %279 = vmatpush2.bf16.msra.mxu0 0
  %280 = vmatprep.subr.bf16.mxu0 0
  %281 = vmatpush2.bf16.msra.mxu0 0
  %282 = vmatprep.subr.bf16.mxu0 0
  %283 = vmatpush2.bf16.msra.mxu0 0
  %284 = vmatprep.subr.bf16.mxu0 0
  %285 = vmatpush2.bf16.msra.mxu0 0
  %286 = vmatprep.subr.bf16.mxu0 0
  %287 = vmatpush2.bf16.msra.mxu0 0
  %288 = vmatprep.mubr.bf16.mxu0 0
  %289 = vmatmul.mubr.bf16.gmra.mxu0 %v233
  %v290 = vpop.f32.mrf.mxu0
  %v291 = vadd.f32 %v74, %v290
  %v292 = vpop.f32.mrf.mxu0
  %v293 = vadd.f32 %v78, %v292
  %v294 = vpop.f32.mrf.mxu0
  %v295 = vadd.f32 %v74, %v294
  %v296 = vpop.f32.mrf.mxu0
  %v297 = vadd.f32 %v78, %v296
  %298 = vmatprep.mubr.bf16.mxu0 0
  %299 = vmatmul.mubr.bf16.gmra.mxu0 %v236
  %v300 = vpop.f32.mrf.mxu0
  %v301 = vadd.f32 %v74, %v300
  %v302 = vpop.f32.mrf.mxu0
  %v303 = vadd.f32 %v78, %v302
  %v304 = vpop.f32.mrf.mxu0
  %v305 = vadd.f32 %v74, %v304
  %v306 = vpop.f32.mrf.mxu0
  %v307 = vadd.f32 %v78, %v306
  %308 = vmatprep.mubr.bf16.mxu0 0
  %309 = vmatmul.mubr.bf16.gmra.mxu0 %v239
  %v310 = vpop.f32.mrf.mxu0
  %v311 = vadd.f32 %v74, %v310
  %v312 = vpop.f32.mrf.mxu0
  %v313 = vadd.f32 %v78, %v312
  %v314 = vpop.f32.mrf.mxu0
  %v315 = vadd.f32 %v74, %v314
  %v316 = vpop.f32.mrf.mxu0
  %v317 = vadd.f32 %v78, %v316
  %318 = vmatprep.mubr.bf16.mxu0 0
  %319 = vmatmul.mubr.bf16.gmra.mxu0 %v242
  %v320 = vpop.f32.mrf.mxu0
  %v321 = vadd.f32 %v74, %v320
  %v322 = vpop.f32.mrf.mxu0
  %v323 = vadd.f32 %v78, %v322
  %v324 = vpop.f32.mrf.mxu0
  %v325 = vadd.f32 %v74, %v324
  %v326 = vpop.f32.mrf.mxu0
  %v327 = vadd.f32 %v78, %v326
  %328 = vmatprep.mubr.bf16.mxu0 0
  %329 = vmatmul.mubr.bf16.gmra.mxu0 %v245
  %v330 = vpop.f32.mrf.mxu0
  %v331 = vadd.f32 %v74, %v330
  %v332 = vpop.f32.mrf.mxu0
  %v333 = vadd.f32 %v78, %v332
  %v334 = vpop.f32.mrf.mxu0
  %v335 = vadd.f32 %v74, %v334
  %v336 = vpop.f32.mrf.mxu0
  %v337 = vadd.f32 %v78, %v336
  %338 = vmatprep.mubr.bf16.mxu0 0
  %339 = vmatmul.mubr.bf16.gmra.mxu0 %v248
  %v340 = vpop.f32.mrf.mxu0
  %v341 = vadd.f32 %v74, %v340
  %v342 = vpop.f32.mrf.mxu0
  %v343 = vadd.f32 %v78, %v342
  %v344 = vpop.f32.mrf.mxu0
  %v345 = vadd.f32 %v74, %v344
  %v346 = vpop.f32.mrf.mxu0
  %v347 = vadd.f32 %v78, %v346
  %348 = vmatprep.mubr.bf16.mxu0 0
  %349 = vmatmul.mubr.bf16.gmra.mxu0 %v251
  %v350 = vpop.f32.mrf.mxu0
  %v351 = vadd.f32 %v74, %v350
  %v352 = vpop.f32.mrf.mxu0
  %v353 = vadd.f32 %v78, %v352
  %v354 = vpop.f32.mrf.mxu0
  %v355 = vadd.f32 %v74, %v354
  %v356 = vpop.f32.mrf.mxu0
  %v357 = vadd.f32 %v78, %v356
  %358 = vmatprep.mubr.bf16.mxu0 0
  %359 = vmatmul.mubr.bf16.gmra.mxu0 %v254
  %v360 = vpop.f32.mrf.mxu0
  %v361 = vadd.f32 %v74, %v360
  %v362 = vpop.f32.mrf.mxu0
  %v363 = vadd.f32 %v78, %v362
  %v364 = vpop.f32.mrf.mxu0
  %v365 = vadd.f32 %v74, %v364
  %v366 = vpop.f32.mrf.mxu0
  %v367 = vadd.f32 %v78, %v366
  %368 = vdwg.mxu0
  %369 = vmatprep.subr.bf16.mxu0 0
  %370 = vmatpush1.bf16.msra.mxu0 0
  %371 = vmatprep.subr.bf16.mxu0 0
  %372 = vmatpush1.bf16.msra.mxu0 0
  %373 = vmatprep.subr.bf16.mxu0 0
  %374 = vmatpush1.bf16.msra.mxu0 0
  %375 = vmatprep.subr.bf16.mxu0 0
  %376 = vmatpush1.bf16.msra.mxu0 0
  %377 = vmatprep.subr.bf16.mxu0 0
  %378 = vmatpush1.bf16.msra.mxu0 0
  %379 = vmatprep.subr.bf16.mxu0 %v202
  %380 = vmatpush1.bf16.msra.mxu0 %v201
  %381 = vmatprep.subr.bf16.mxu0 %v194
  %382 = vmatpush1.bf16.msra.mxu0 %v193
  %383 = vmatprep.subr.bf16.mxu0 %v186
  %384 = vmatpush1.bf16.msra.mxu0 %v185
  %385 = vmatprep.subr.bf16.mxu0 0
  %386 = vmatpush2.bf16.msra.mxu0 0
  %387 = vmatprep.subr.bf16.mxu0 0
  %388 = vmatpush2.bf16.msra.mxu0 0
  %389 = vmatprep.subr.bf16.mxu0 0
  %390 = vmatpush2.bf16.msra.mxu0 0
  %391 = vmatprep.subr.bf16.mxu0 0
  %392 = vmatpush2.bf16.msra.mxu0 0
  %393 = vmatprep.subr.bf16.mxu0 0
  %394 = vmatpush2.bf16.msra.mxu0 0
  %395 = vmatprep.subr.bf16.mxu0 0
  %396 = vmatpush2.bf16.msra.mxu0 0
  %397 = vmatprep.subr.bf16.mxu0 0
  %398 = vmatpush2.bf16.msra.mxu0 0
  %399 = vmatprep.subr.bf16.mxu0 0
  %400 = vmatpush2.bf16.msra.mxu0 0
  %401 = vmatprep.mubr.bf16.mxu0 0
  %402 = vmatmul.mubr.bf16.gmra.mxu0 %v233
  %v403 = vpop.f32.mrf.mxu0
  %v404 = vadd.f32 %v82, %v403
  %v405 = vpop.f32.mrf.mxu0
  %v406 = vadd.f32 %v86, %v405
  %v407 = vpop.f32.mrf.mxu0
  %v408 = vadd.f32 %v82, %v407
  %v409 = vpop.f32.mrf.mxu0
  %v410 = vadd.f32 %v86, %v409
  %411 = vmatprep.mubr.bf16.mxu0 0
  %412 = vmatmul.mubr.bf16.gmra.mxu0 %v236
  %v413 = vpop.f32.mrf.mxu0
  %v414 = vadd.f32 %v82, %v413
  %v415 = vpop.f32.mrf.mxu0
  %v416 = vadd.f32 %v86, %v415
  %v417 = vpop.f32.mrf.mxu0
  %v418 = vadd.f32 %v82, %v417
  %v419 = vpop.f32.mrf.mxu0
  %v420 = vadd.f32 %v86, %v419
  %421 = vmatprep.mubr.bf16.mxu0 0
  %422 = vmatmul.mubr.bf16.gmra.mxu0 %v239
  %v423 = vpop.f32.mrf.mxu0
  %v424 = vadd.f32 %v82, %v423
  %v425 = vpop.f32.mrf.mxu0
  %v426 = vadd.f32 %v86, %v425
  %v427 = vpop.f32.mrf.mxu0
  %v428 = vadd.f32 %v82, %v427
  %v429 = vpop.f32.mrf.mxu0
  %v430 = vadd.f32 %v86, %v429
  %431 = vmatprep.mubr.bf16.mxu0 0
  %432 = vmatmul.mubr.bf16.gmra.mxu0 %v242
  %v433 = vpop.f32.mrf.mxu0
  %v434 = vadd.f32 %v82, %v433
  %v435 = vpop.f32.mrf.mxu0
  %v436 = vadd.f32 %v86, %v435
  %v437 = vpop.f32.mrf.mxu0
  %v438 = vadd.f32 %v82, %v437
  %v439 = vpop.f32.mrf.mxu0
  %v440 = vadd.f32 %v86, %v439
  %441 = vmatprep.mubr.bf16.mxu0 0
  %442 = vmatmul.mubr.bf16.gmra.mxu0 %v245
  %v443 = vpop.f32.mrf.mxu0
  %v444 = vadd.f32 %v82, %v443
  %v445 = vpop.f32.mrf.mxu0
  %v446 = vadd.f32 %v86, %v445
  %v447 = vpop.f32.mrf.mxu0
  %v448 = vadd.f32 %v82, %v447
  %v449 = vpop.f32.mrf.mxu0
  %v450 = vadd.f32 %v86, %v449
  %451 = vmatprep.mubr.bf16.mxu0 0
  %452 = vmatmul.mubr.bf16.gmra.mxu0 %v248
  %v453 = vpop.f32.mrf.mxu0
  %v454 = vadd.f32 %v82, %v453
  %v455 = vpop.f32.mrf.mxu0
  %v456 = vadd.f32 %v86, %v455
  %v457 = vpop.f32.mrf.mxu0
  %v458 = vadd.f32 %v82, %v457
  %v459 = vpop.f32.mrf.mxu0
  %v460 = vadd.f32 %v86, %v459
  %461 = vmatprep.mubr.bf16.mxu0 0
  %462 = vmatmul.mubr.bf16.gmra.mxu0 %v251
  %v463 = vpop.f32.mrf.mxu0
  %v464 = vadd.f32 %v82, %v463
  %v465 = vpop.f32.mrf.mxu0
  %v466 = vadd.f32 %v86, %v465
  %v467 = vpop.f32.mrf.mxu0
  %v468 = vadd.f32 %v82, %v467
  %v469 = vpop.f32.mrf.mxu0
  %v470 = vadd.f32 %v86, %v469
  %471 = vmatprep.mubr.bf16.mxu0 0
  %472 = vmatmul.mubr.bf16.gmra.mxu0 %v254
  %v473 = vpop.f32.mrf.mxu0
  %v474 = vadd.f32 %v82, %v473
  %v475 = vpop.f32.mrf.mxu0
  %v476 = vadd.f32 %v86, %v475
  %v477 = vpop.f32.mrf.mxu0
  %v478 = vadd.f32 %v82, %v477
  %v479 = vpop.f32.mrf.mxu0
  %v480 = vadd.f32 %v86, %v479
  %481 = vdwg.mxu0
  %482 = vmatprep.subr.bf16.mxu0 0
  %483 = vmatpush1.bf16.msra.mxu0 0
  %484 = vmatprep.subr.bf16.mxu0 0
  %485 = vmatpush1.bf16.msra.mxu0 0
  %486 = vmatprep.subr.bf16.mxu0 0
  %487 = vmatpush1.bf16.msra.mxu0 0
  %488 = vmatprep.subr.bf16.mxu0 0
  %489 = vmatpush1.bf16.msra.mxu0 0
  %490 = vmatprep.subr.bf16.mxu0 0
  %491 = vmatpush1.bf16.msra.mxu0 0
  %492 = vmatprep.subr.bf16.mxu0 %v204
  %493 = vmatpush1.bf16.msra.mxu0 %v203
  %494 = vmatprep.subr.bf16.mxu0 %v196
  %495 = vmatpush1.bf16.msra.mxu0 %v195
  %496 = vmatprep.subr.bf16.mxu0 %v188
  %497 = vmatpush1.bf16.msra.mxu0 %v187
  %498 = vmatprep.subr.bf16.mxu0 0
  %499 = vmatpush2.bf16.msra.mxu0 0
  %500 = vmatprep.subr.bf16.mxu0 0
  %501 = vmatpush2.bf16.msra.mxu0 0
  %502 = vmatprep.subr.bf16.mxu0 0
  %503 = vmatpush2.bf16.msra.mxu0 0
  %504 = vmatprep.subr.bf16.mxu0 0
  %505 = vmatpush2.bf16.msra.mxu0 0
  %506 = vmatprep.subr.bf16.mxu0 0
  %507 = vmatpush2.bf16.msra.mxu0 0
  %508 = vmatprep.subr.bf16.mxu0 0
  %509 = vmatpush2.bf16.msra.mxu0 0
  %510 = vmatprep.subr.bf16.mxu0 0
  %511 = vmatpush2.bf16.msra.mxu0 0
  %512 = vmatprep.subr.bf16.mxu0 0
  %513 = vmatpush2.bf16.msra.mxu0 0
  %514 = vmatprep.mubr.bf16.mxu0 0
  %515 = vmatmul.mubr.bf16.gmra.mxu0 %v233
  %v516 = vpop.f32.mrf.mxu0
  %v517 = vadd.f32 %v90, %v516
  %v518 = vpop.f32.mrf.mxu0
  %v519 = vadd.f32 %v94, %v518
  %v520 = vpop.f32.mrf.mxu0
  %v521 = vadd.f32 %v90, %v520
  %v522 = vpop.f32.mrf.mxu0
  %v523 = vadd.f32 %v94, %v522
  %524 = vmatprep.mubr.bf16.mxu0 0
  %525 = vmatmul.mubr.bf16.gmra.mxu0 %v236
  %v526 = vpop.f32.mrf.mxu0
  %v527 = vadd.f32 %v90, %v526
  %v528 = vpop.f32.mrf.mxu0
  %v529 = vadd.f32 %v94, %v528
  %v530 = vpop.f32.mrf.mxu0
  %v531 = vadd.f32 %v90, %v530
  %v532 = vpop.f32.mrf.mxu0
  %v533 = vadd.f32 %v94, %v532
  %534 = vmatprep.mubr.bf16.mxu0 0
  %535 = vmatmul.mubr.bf16.gmra.mxu0 %v239
  %v536 = vpop.f32.mrf.mxu0
  %v537 = vadd.f32 %v90, %v536
  %v538 = vpop.f32.mrf.mxu0
  %v539 = vadd.f32 %v94, %v538
  %v540 = vpop.f32.mrf.mxu0
  %v541 = vadd.f32 %v90, %v540
  %v542 = vpop.f32.mrf.mxu0
  %v543 = vadd.f32 %v94, %v542
  %544 = vmatprep.mubr.bf16.mxu0 0
  %545 = vmatmul.mubr.bf16.gmra.mxu0 %v242
  %v546 = vpop.f32.mrf.mxu0
  %v547 = vadd.f32 %v90, %v546
  %v548 = vpop.f32.mrf.mxu0
  %v549 = vadd.f32 %v94, %v548
  %v550 = vpop.f32.mrf.mxu0
  %v551 = vadd.f32 %v90, %v550
  %v552 = vpop.f32.mrf.mxu0
  %v553 = vadd.f32 %v94, %v552
  %554 = vmatprep.mubr.bf16.mxu0 0
  %555 = vmatmul.mubr.bf16.gmra.mxu0 %v245
  %v556 = vpop.f32.mrf.mxu0
  %v557 = vadd.f32 %v90, %v556
  %v558 = vpop.f32.mrf.mxu0
  %v559 = vadd.f32 %v94, %v558
  %v560 = vpop.f32.mrf.mxu0
  %v561 = vadd.f32 %v90, %v560
  %v562 = vpop.f32.mrf.mxu0
  %v563 = vadd.f32 %v94, %v562
  %564 = vmatprep.mubr.bf16.mxu0 0
  %565 = vmatmul.mubr.bf16.gmra.mxu0 %v248
  %v566 = vpop.f32.mrf.mxu0
  %v567 = vadd.f32 %v90, %v566
  %v568 = vpop.f32.mrf.mxu0
  %v569 = vadd.f32 %v94, %v568
  %v570 = vpop.f32.mrf.mxu0
  %v571 = vadd.f32 %v90, %v570
  %v572 = vpop.f32.mrf.mxu0
  %v573 = vadd.f32 %v94, %v572
  %574 = vmatprep.mubr.bf16.mxu0 0
  %575 = vmatmul.mubr.bf16.gmra.mxu0 %v251
  %v576 = vpop.f32.mrf.mxu0
  %v577 = vadd.f32 %v90, %v576
  %v578 = vpop.f32.mrf.mxu0
  %v579 = vadd.f32 %v94, %v578
  %v580 = vpop.f32.mrf.mxu0
  %v581 = vadd.f32 %v90, %v580
  %v582 = vpop.f32.mrf.mxu0
  %v583 = vadd.f32 %v94, %v582
  %584 = vmatprep.mubr.bf16.mxu0 0
  %585 = vmatmul.mubr.bf16.gmra.mxu0 %v254
  %v586 = vpop.f32.mrf.mxu0
  %v587 = vadd.f32 %v90, %v586
  %v588 = vpop.f32.mrf.mxu0
  %v589 = vadd.f32 %v94, %v588
  %v590 = vpop.f32.mrf.mxu0
  %v591 = vadd.f32 %v90, %v590
  %v592 = vpop.f32.mrf.mxu0
  %v593 = vadd.f32 %v94, %v592
  %594 = vdwg.mxu0
  %595 = vmatprep.subr.bf16.mxu0 0
  %596 = vmatpush1.bf16.msra.mxu0 0
  %597 = vmatprep.subr.bf16.mxu0 0
  %598 = vmatpush1.bf16.msra.mxu0 0
  %599 = vmatprep.subr.bf16.mxu0 0
  %600 = vmatpush1.bf16.msra.mxu0 0
  %601 = vmatprep.subr.bf16.mxu0 0
  %602 = vmatpush1.bf16.msra.mxu0 0
  %603 = vmatprep.subr.bf16.mxu0 0
  %604 = vmatpush1.bf16.msra.mxu0 0
  %605 = vmatprep.subr.bf16.mxu0 %v206
  %606 = vmatpush1.bf16.msra.mxu0 %v205
  %607 = vmatprep.subr.bf16.mxu0 %v198
  %608 = vmatpush1.bf16.msra.mxu0 %v197
  %609 = vmatprep.subr.bf16.mxu0 %v190
  %610 = vmatpush1.bf16.msra.mxu0 %v189
  %611 = vmatprep.subr.bf16.mxu0 0
  %612 = vmatpush2.bf16.msra.mxu0 0
  %613 = vmatprep.subr.bf16.mxu0 0
  %614 = vmatpush2.bf16.msra.mxu0 0
  %615 = vmatprep.subr.bf16.mxu0 0
  %616 = vmatpush2.bf16.msra.mxu0 0
  %617 = vmatprep.subr.bf16.mxu0 0
  %618 = vmatpush2.bf16.msra.mxu0 0
  %619 = vmatprep.subr.bf16.mxu0 0
  %620 = vmatpush2.bf16.msra.mxu0 0
  %621 = vmatprep.subr.bf16.mxu0 0
  %622 = vmatpush2.bf16.msra.mxu0 0
  %623 = vmatprep.subr.bf16.mxu0 0
  %624 = vmatpush2.bf16.msra.mxu0 0
  %625 = vmatprep.subr.bf16.mxu0 0
  %626 = vmatpush2.bf16.msra.mxu0 0
  %627 = vmatprep.mubr.bf16.mxu0 0
  %628 = vmatmul.mubr.bf16.gmra.mxu0 %v233
  %v629 = vpop.f32.mrf.mxu0
  %v630 = vadd.f32 %v98, %v629
  %v631 = vpop.f32.mrf.mxu0
  %v632 = vadd.f32 %v102, %v631
  %v633 = vpop.f32.mrf.mxu0
  %v634 = vadd.f32 %v98, %v633
  %v635 = vpop.f32.mrf.mxu0
  %v636 = vadd.f32 %v102, %v635
  %637 = vmatprep.mubr.bf16.mxu0 0
  %638 = vmatmul.mubr.bf16.gmra.mxu0 %v236
  %v639 = vpop.f32.mrf.mxu0
  %v640 = vadd.f32 %v98, %v639
  %v641 = vpop.f32.mrf.mxu0
  %v642 = vadd.f32 %v102, %v641
  %v643 = vpop.f32.mrf.mxu0
  %v644 = vadd.f32 %v98, %v643
  %v645 = vpop.f32.mrf.mxu0
  %v646 = vadd.f32 %v102, %v645
  %647 = vmatprep.mubr.bf16.mxu0 0
  %648 = vmatmul.mubr.bf16.gmra.mxu0 %v239
  %v649 = vpop.f32.mrf.mxu0
  %v650 = vadd.f32 %v98, %v649
  %v651 = vpop.f32.mrf.mxu0
  %v652 = vadd.f32 %v102, %v651
  %v653 = vpop.f32.mrf.mxu0
  %v654 = vadd.f32 %v98, %v653
  %v655 = vpop.f32.mrf.mxu0
  %v656 = vadd.f32 %v102, %v655
  %657 = vmatprep.mubr.bf16.mxu0 0
  %658 = vmatmul.mubr.bf16.gmra.mxu0 %v242
  %v659 = vpop.f32.mrf.mxu0
  %v660 = vadd.f32 %v98, %v659
  %v661 = vpop.f32.mrf.mxu0
  %v662 = vadd.f32 %v102, %v661
  %v663 = vpop.f32.mrf.mxu0
  %v664 = vadd.f32 %v98, %v663
  %v665 = vpop.f32.mrf.mxu0
  %v666 = vadd.f32 %v102, %v665
  %667 = vmatprep.mubr.bf16.mxu0 0
  %668 = vmatmul.mubr.bf16.gmra.mxu0 %v245
  %v669 = vpop.f32.mrf.mxu0
  %v670 = vadd.f32 %v98, %v669
  %v671 = vpop.f32.mrf.mxu0
  %v672 = vadd.f32 %v102, %v671
  %v673 = vpop.f32.mrf.mxu0
  %v674 = vadd.f32 %v98, %v673
  %v675 = vpop.f32.mrf.mxu0
  %v676 = vadd.f32 %v102, %v675
  %677 = vmatprep.mubr.bf16.mxu0 0
  %678 = vmatmul.mubr.bf16.gmra.mxu0 %v248
  %v679 = vpop.f32.mrf.mxu0
  %v680 = vadd.f32 %v98, %v679
  %v681 = vpop.f32.mrf.mxu0
  %v682 = vadd.f32 %v102, %v681
  %v683 = vpop.f32.mrf.mxu0
  %v684 = vadd.f32 %v98, %v683
  %v685 = vpop.f32.mrf.mxu0
  %v686 = vadd.f32 %v102, %v685
  %687 = vmatprep.mubr.bf16.mxu0 0
  %688 = vmatmul.mubr.bf16.gmra.mxu0 %v251
  %v689 = vpop.f32.mrf.mxu0
  %v690 = vadd.f32 %v98, %v689
  %v691 = vpop.f32.mrf.mxu0
  %v692 = vadd.f32 %v102, %v691
  %v693 = vpop.f32.mrf.mxu0
  %v694 = vadd.f32 %v98, %v693
  %v695 = vpop.f32.mrf.mxu0
  %v696 = vadd.f32 %v102, %v695
  %697 = vmatprep.mubr.bf16.mxu0 0
  %698 = vmatmul.mubr.bf16.gmra.mxu0 %v254
  %v699 = vpop.f32.mrf.mxu0
  %v700 = vadd.f32 %v98, %v699
  %v701 = vpop.f32.mrf.mxu0
  %v702 = vadd.f32 %v102, %v701
  %v703 = vpop.f32.mrf.mxu0
  %v704 = vadd.f32 %v98, %v703
  %v705 = vpop.f32.mrf.mxu0
  %v706 = vadd.f32 %v102, %v705
  %707 = vdwg.mxu0
  %v708 = vmax.f32 %v291, 0.0
  %v709 = vmax.f32 %v293, 0.0
  %v710 = vmax.f32 %v404, 0.0
  %v711 = vmax.f32 %v406, 0.0
  %v712 = vmax.f32 %v517, 0.0
  %v713 = vmax.f32 %v519, 0.0
  %v714 = vmax.f32 %v630, 0.0
  %v715 = vmax.f32 %v632, 0.0
  %v716 = vmax.f32 %v295, 0.0
  %v717 = vmax.f32 %v297, 0.0
  %v718 = vmax.f32 %v408, 0.0
  %v719 = vmax.f32 %v410, 0.0
  %v720 = vmax.f32 %v521, 0.0
  %v721 = vmax.f32 %v523, 0.0
  %v722 = vmax.f32 %v634, 0.0
  %v723 = vmax.f32 %v636, 0.0
  %v724 = vmax.f32 %v301, 0.0
  %v725 = vmax.f32 %v303, 0.0
  %v726 = vmax.f32 %v414, 0.0
  %v727 = vmax.f32 %v416, 0.0
  %v728 = vmax.f32 %v527, 0.0
  %v729 = vmax.f32 %v529, 0.0
  %v730 = vmax.f32 %v640, 0.0
  %v731 = vmax.f32 %v642, 0.0
  %v732 = vmax.f32 %v305, 0.0
  %v733 = vmax.f32 %v307, 0.0
  %v734 = vmax.f32 %v418, 0.0
  %v735 = vmax.f32 %v420, 0.0
  %v736 = vmax.f32 %v531, 0.0
  %v737 = vmax.f32 %v533, 0.0
  %v738 = vmax.f32 %v644, 0.0
  %v739 = vmax.f32 %v646, 0.0
  %v740 = vmax.f32 %v311, 0.0
  %v741 = vmax.f32 %v313, 0.0
  %v742 = vmax.f32 %v424, 0.0
  %v743 = vmax.f32 %v426, 0.0
  %v744 = vmax.f32 %v537, 0.0
  %v745 = vmax.f32 %v539, 0.0
  %v746 = vmax.f32 %v650, 0.0
  %v747 = vmax.f32 %v652, 0.0
  %v748 = vmax.f32 %v315, 0.0
  %v749 = vmax.f32 %v317, 0.0
  %v750 = vmax.f32 %v428, 0.0
  %v751 = vmax.f32 %v430, 0.0
  %v752 = vmax.f32 %v541, 0.0
  %v753 = vmax.f32 %v543, 0.0
  %v754 = vmax.f32 %v654, 0.0
  %v755 = vmax.f32 %v656, 0.0
  %v756 = vmax.f32 %v321, 0.0
  %v757 = vmax.f32 %v323, 0.0
  %v758 = vmax.f32 %v434, 0.0
  %v759 = vmax.f32 %v436, 0.0
  %v760 = vmax.f32 %v547, 0.0
  %v761 = vmax.f32 %v549, 0.0
  %v762 = vmax.f32 %v660, 0.0
  %v763 = vmax.f32 %v662, 0.0
  %v764 = vmax.f32 %v325, 0.0
  %v765 = vmax.f32 %v327, 0.0
  %v766 = vmax.f32 %v438, 0.0
  %v767 = vmax.f32 %v440, 0.0
  %v768 = vmax.f32 %v551, 0.0
  %v769 = vmax.f32 %v553, 0.0
  %v770 = vmax.f32 %v664, 0.0
  %v771 = vmax.f32 %v666, 0.0
  %v772 = vmax.f32 %v331, 0.0
  %v773 = vmax.f32 %v333, 0.0
  %v774 = vmax.f32 %v444, 0.0
  %v775 = vmax.f32 %v446, 0.0
  %v776 = vmax.f32 %v557, 0.0
  %v777 = vmax.f32 %v559, 0.0
  %v778 = vmax.f32 %v670, 0.0
  %v779 = vmax.f32 %v672, 0.0
  %v780 = vmax.f32 %v335, 0.0
  %v781 = vmax.f32 %v337, 0.0
  %v782 = vmax.f32 %v448, 0.0
  %v783 = vmax.f32 %v450, 0.0
  %v784 = vmax.f32 %v561, 0.0
  %v785 = vmax.f32 %v563, 0.0
  %v786 = vmax.f32 %v674, 0.0
  %v787 = vmax.f32 %v676, 0.0
  %v788 = vmax.f32 %v341, 0.0
  %v789 = vmax.f32 %v343, 0.0
  %v790 = vmax.f32 %v454, 0.0
  %v791 = vmax.f32 %v456, 0.0
  %v792 = vmax.f32 %v567, 0.0
  %v793 = vmax.f32 %v569, 0.0
  %v794 = vmax.f32 %v680, 0.0
  %v795 = vmax.f32 %v682, 0.0
  %v796 = vmax.f32 %v345, 0.0
  %v797 = vmax.f32 %v347, 0.0
  %v798 = vmax.f32 %v458, 0.0
  %v799 = vmax.f32 %v460, 0.0
  %v800 = vmax.f32 %v571, 0.0
  %v801 = vmax.f32 %v573, 0.0
  %v802 = vmax.f32 %v684, 0.0
  %v803 = vmax.f32 %v686, 0.0
  %v804 = vmax.f32 %v351, 0.0
  %v805 = vmax.f32 %v353, 0.0
  %v806 = vmax.f32 %v464, 0.0
  %v807 = vmax.f32 %v466, 0.0
  %v808 = vmax.f32 %v577, 0.0
  %v809 = vmax.f32 %v579, 0.0
  %v810 = vmax.f32 %v690, 0.0
  %v811 = vmax.f32 %v692, 0.0
  %v812 = vmax.f32 %v355, 0.0
  %v813 = vmax.f32 %v357, 0.0
  %v814 = vmax.f32 %v468, 0.0
  %v815 = vmax.f32 %v470, 0.0
  %v816 = vmax.f32 %v581, 0.0
  %v817 = vmax.f32 %v583, 0.0
  %v818 = vmax.f32 %v694, 0.0
  %v819 = vmax.f32 %v696, 0.0
  %v820 = vmax.f32 %v361, 0.0
  %v821 = vmax.f32 %v363, 0.0
  %v822 = vmax.f32 %v474, 0.0
  %v823 = vmax.f32 %v476, 0.0
  %v824 = vmax.f32 %v587, 0.0
  %v825 = vmax.f32 %v589, 0.0
  %v826 = vmax.f32 %v700, 0.0
  %v827 = vmax.f32 %v702, 0.0
  %v828 = vmax.f32 %v365, 0.0
  %v829 = vmax.f32 %v367, 0.0
  %v830 = vmax.f32 %v478, 0.0
  %v831 = vmax.f32 %v480, 0.0
  %v832 = vmax.f32 %v591, 0.0
  %v833 = vmax.f32 %v593, 0.0
  %v834 = vmax.f32 %v704, 0.0
  %v835 = vmax.f32 %v706, 0.0
  %v836 = vpack.c.bf16 %v716, %v708
  %v837 = vpack.c.bf16 %v717, %v709
  %v838 = vpack.c.bf16 %v718, %v710
  %v839 = vpack.c.bf16 %v719, %v711
  %v840 = vpack.c.bf16 %v720, %v712
  %v841 = vpack.c.bf16 %v721, %v713
  %v842 = vpack.c.bf16 %v722, %v714
  %v843 = vpack.c.bf16 %v723, %v715
  %v844 = vpack.c.bf16 %v732, %v724
  %v845 = vpack.c.bf16 %v733, %v725
  %v846 = vpack.c.bf16 %v734, %v726
  %v847 = vpack.c.bf16 %v735, %v727
  %v848 = vpack.c.bf16 %v736, %v728
  %v849 = vpack.c.bf16 %v737, %v729
  %v850 = vpack.c.bf16 %v738, %v730
  %v851 = vpack.c.bf16 %v739, %v731
  %v852 = vpack.c.bf16 %v748, %v740
  %v853 = vpack.c.bf16 %v749, %v741
  %v854 = vpack.c.bf16 %v750, %v742
  %v855 = vpack.c.bf16 %v751, %v743
  %v856 = vpack.c.bf16 %v752, %v744
  %v857 = vpack.c.bf16 %v753, %v745
  %v858 = vpack.c.bf16 %v754, %v746
  %v859 = vpack.c.bf16 %v755, %v747
  %v860 = vpack.c.bf16 %v764, %v756
  %v861 = vpack.c.bf16 %v765, %v757
  %v862 = vpack.c.bf16 %v766, %v758
  %v863 = vpack.c.bf16 %v767, %v759
  %v864 = vpack.c.bf16 %v768, %v760
  %v865 = vpack.c.bf16 %v769, %v761
  %v866 = vpack.c.bf16 %v770, %v762
  %v867 = vpack.c.bf16 %v771, %v763
  %v868 = vpack.c.bf16 %v780, %v772
  %v869 = vpack.c.bf16 %v781, %v773
  %v870 = vpack.c.bf16 %v782, %v774
  %v871 = vpack.c.bf16 %v783, %v775
  %v872 = vpack.c.bf16 %v784, %v776
  %v873 = vpack.c.bf16 %v785, %v777
  %v874 = vpack.c.bf16 %v786, %v778
  %v875 = vpack.c.bf16 %v787, %v779
  %v876 = vpack.c.bf16 %v796, %v788
  %v877 = vpack.c.bf16 %v797, %v789
  %v878 = vpack.c.bf16 %v798, %v790
  %v879 = vpack.c.bf16 %v799, %v791
  %v880 = vpack.c.bf16 %v800, %v792
  %v881 = vpack.c.bf16 %v801, %v793
  %v882 = vpack.c.bf16 %v802, %v794
  %v883 = vpack.c.bf16 %v803, %v795
  %v884 = vpack.c.bf16 %v812, %v804
  %v885 = vpack.c.bf16 %v813, %v805
  %v886 = vpack.c.bf16 %v814, %v806
  %v887 = vpack.c.bf16 %v815, %v807
  %v888 = vpack.c.bf16 %v816, %v808
  %v889 = vpack.c.bf16 %v817, %v809
  %v890 = vpack.c.bf16 %v818, %v810
  %v891 = vpack.c.bf16 %v819, %v811
  %v892 = vpack.c.bf16 %v828, %v820
  %v893 = vpack.c.bf16 %v829, %v821
  %v894 = vpack.c.bf16 %v830, %v822
  %v895 = vpack.c.bf16 %v831, %v823
  %v896 = vpack.c.bf16 %v832, %v824
  %v897 = vpack.c.bf16 %v833, %v825
  %v898 = vpack.c.bf16 %v834, %v826
  %v899 = vpack.c.bf16 %v835, %v827
  %v900 = vld [vmem:[%s3] sm:$0xf]
  %v901 = vld [vmem:[%s3 + $0x4] sm:$0xf]
  %v902 = vld [vmem:[%s3 + $0x8] sm:$0xf]
  %v903 = vld [vmem:[%s3 + $0xc] sm:$0xf]
  %v904 = vld [vmem:[%s3 + $0x10] sm:$0xf]
  %v905 = vld [vmem:[%s3 + $0x14] sm:$0xf]
  %v906 = vld [vmem:[%s3 + $0x18] sm:$0xf]
  %v907 = vld [vmem:[%s3 + $0x1c] sm:$0xf]
  %v908 = vld [vmem:[%s3 + $0x20] sm:$0xf]
  %v909 = vld [vmem:[%s3 + $0x24] sm:$0xf]
  %v910 = vld [vmem:[%s3 + $0x28] sm:$0xf]
  %v911 = vld [vmem:[%s3 + $0x2c] sm:$0xf]
  %v912 = vld [vmem:[%s3 + $0x30] sm:$0xf]
  %v913 = vld [vmem:[%s3 + $0x34] sm:$0xf]
  %v914 = vld [vmem:[%s3 + $0x38] sm:$0xf]
  %v915 = vld [vmem:[%s3 + $0x3c] sm:$0xf]
  %v916 = vld [vmem:[%s3 + $0x40] sm:$0xf]
  %v917 = vld [vmem:[%s3 + $0x44] sm:$0xf]
  %v918 = vld [vmem:[%s3 + $0x48] sm:$0xf]
  %v919 = vld [vmem:[%s3 + $0x4c] sm:$0xf]
  %v920 = vld [vmem:[%s3 + $0x50] sm:$0xf]
  %v921 = vld [vmem:[%s3 + $0x54] sm:$0xf]
  %v922 = vld [vmem:[%s3 + $0x58] sm:$0xf]
  %v923 = vld [vmem:[%s3 + $0x5c] sm:$0xf]
  %v924 = vld [vmem:[%s3 + $0x60] sm:$0xf]
  %v925 = vld [vmem:[%s3 + $0x64] sm:$0xf]
  %v926 = vld [vmem:[%s3 + $0x68] sm:$0xf]
  %v927 = vld [vmem:[%s3 + $0x6c] sm:$0xf]
  %v928 = vld [vmem:[%s3 + $0x70] sm:$0xf]
  %v929 = vld [vmem:[%s3 + $0x74] sm:$0xf]
  %v930 = vld [vmem:[%s3 + $0x78] sm:$0xf]
  %v931 = vld [vmem:[%s3 + $0x7c] sm:$0xf]
  %v932 = vld [vmem:[%s3 + $0x80] sm:$0xf]
  %v933 = vld [vmem:[%s3 + $0x84] sm:$0xf]
  %v934 = vld [vmem:[%s3 + $0x88] sm:$0xf]
  %v935 = vld [vmem:[%s3 + $0x8c] sm:$0xf]
  %v936 = vld [vmem:[%s3 + $0x90] sm:$0xf]
  %v937 = vld [vmem:[%s3 + $0x94] sm:$0xf]
  %v938 = vld [vmem:[%s3 + $0x98] sm:$0xf]
  %v939 = vld [vmem:[%s3 + $0x9c] sm:$0xf]
  %v940 = vld [vmem:[%s3 + $0xa0] sm:$0xf]
  %v941 = vld [vmem:[%s3 + $0xa4] sm:$0xf]
  %v942 = vld [vmem:[%s3 + $0xa8] sm:$0xf]
  %v943 = vld [vmem:[%s3 + $0xac] sm:$0xf]
  %v944 = vld [vmem:[%s3 + $0xb0] sm:$0xf]
  %v945 = vld [vmem:[%s3 + $0xb4] sm:$0xf]
  %v946 = vld [vmem:[%s3 + $0xb8] sm:$0xf]
  %v947 = vld [vmem:[%s3 + $0xbc] sm:$0xf]
  %v948 = vld [vmem:[%s3 + $0xc0] sm:$0xf]
  %v949 = vld [vmem:[%s3 + $0xc4] sm:$0xf]
  %v950 = vld [vmem:[%s3 + $0xc8] sm:$0xf]
  %v951 = vld [vmem:[%s3 + $0xcc] sm:$0xf]
  %v952 = vld [vmem:[%s3 + $0xd0] sm:$0xf]
  %v953 = vld [vmem:[%s3 + $0xd4] sm:$0xf]
  %v954 = vld [vmem:[%s3 + $0xd8] sm:$0xf]
  %v955 = vld [vmem:[%s3 + $0xdc] sm:$0xf]
  %v956 = vld [vmem:[%s3 + $0xe0] sm:$0xf]
  %v957 = vld [vmem:[%s3 + $0xe4] sm:$0xf]
  %v958 = vld [vmem:[%s3 + $0xe8] sm:$0xf]
  %v959 = vld [vmem:[%s3 + $0xec] sm:$0xf]
  %v960 = vld [vmem:[%s3 + $0xf0] sm:$0xf]
  %v961 = vld [vmem:[%s3 + $0xf4] sm:$0xf]
  %v962 = vld [vmem:[%s3 + $0xf8] sm:$0xf]
  %v963 = vld [vmem:[%s3 + $0xfc] sm:$0xf]
  %v964 = vld [vmem:[%s3 + $0x100] sm:$0xf]
  %v965 = vld [vmem:[%s3 + $0x104] sm:$0xf]
  %v966 = vld [vmem:[%s3 + $0x108] sm:$0xf]
  %v967 = vld [vmem:[%s3 + $0x10c] sm:$0xf]
  %v968 = vld [vmem:[%s3 + $0x110] sm:$0xf]
  %v969 = vld [vmem:[%s3 + $0x114] sm:$0xf]
  %v970 = vld [vmem:[%s3 + $0x118] sm:$0xf]
  %v971 = vld [vmem:[%s3 + $0x11c] sm:$0xf]
  %v972 = vld [vmem:[%s3 + $0x120] sm:$0xf]
  %v973 = vld [vmem:[%s3 + $0x124] sm:$0xf]
  %v974 = vld [vmem:[%s3 + $0x128] sm:$0xf]
  %v975 = vld [vmem:[%s3 + $0x12c] sm:$0xf]
  %v976 = vld [vmem:[%s3 + $0x130] sm:$0xf]
  %v977 = vld [vmem:[%s3 + $0x134] sm:$0xf]
  %v978 = vld [vmem:[%s3 + $0x138] sm:$0xf]
  %v979 = vld [vmem:[%s3 + $0x13c] sm:$0xf]
  %v980 = vld [vmem:[%s3 + $0x140] sm:$0xf]
  %v981 = vld [vmem:[%s3 + $0x144] sm:$0xf]
  %v982 = vld [vmem:[%s3 + $0x148] sm:$0xf]
  %v983 = vld [vmem:[%s3 + $0x14c] sm:$0xf]
  %v984 = vld [vmem:[%s3 + $0x150] sm:$0xf]
  %v985 = vld [vmem:[%s3 + $0x154] sm:$0xf]
  %v986 = vld [vmem:[%s3 + $0x158] sm:$0xf]
  %v987 = vld [vmem:[%s3 + $0x15c] sm:$0xf]
  %v988 = vld [vmem:[%s3 + $0x160] sm:$0xf]
  %v989 = vld [vmem:[%s3 + $0x164] sm:$0xf]
  %v990 = vld [vmem:[%s3 + $0x168] sm:$0xf]
  %v991 = vld [vmem:[%s3 + $0x16c] sm:$0xf]
  %v992 = vld [vmem:[%s3 + $0x170] sm:$0xf]
  %v993 = vld [vmem:[%s3 + $0x174] sm:$0xf]
  %v994 = vld [vmem:[%s3 + $0x178] sm:$0xf]
  %v995 = vld [vmem:[%s3 + $0x17c] sm:$0xf]
  %v996 = vld [vmem:[%s3 + $0x180] sm:$0xf]
  %v997 = vld [vmem:[%s3 + $0x184] sm:$0xf]
  %v998 = vld [vmem:[%s3 + $0x188] sm:$0xf]
  %v999 = vld [vmem:[%s3 + $0x18c] sm:$0xf]
  %v1000 = vld [vmem:[%s3 + $0x190] sm:$0xf]
  %v1001 = vld [vmem:[%s3 + $0x194] sm:$0xf]
  %v1002 = vld [vmem:[%s3 + $0x198] sm:$0xf]
  %v1003 = vld [vmem:[%s3 + $0x19c] sm:$0xf]
  %v1004 = vld [vmem:[%s3 + $0x1a0] sm:$0xf]
  %v1005 = vld [vmem:[%s3 + $0x1a4] sm:$0xf]
  %v1006 = vld [vmem:[%s3 + $0x1a8] sm:$0xf]
  %v1007 = vld [vmem:[%s3 + $0x1ac] sm:$0xf]
  %v1008 = vld [vmem:[%s3 + $0x1b0] sm:$0xf]
  %v1009 = vld [vmem:[%s3 + $0x1b4] sm:$0xf]
  %v1010 = vld [vmem:[%s3 + $0x1b8] sm:$0xf]
  %v1011 = vld [vmem:[%s3 + $0x1bc] sm:$0xf]
  %v1012 = vld [vmem:[%s3 + $0x1c0] sm:$0xf]
  %v1013 = vld [vmem:[%s3 + $0x1c4] sm:$0xf]
  %v1014 = vld [vmem:[%s3 + $0x1c8] sm:$0xf]
  %v1015 = vld [vmem:[%s3 + $0x1cc] sm:$0xf]
  %v1016 = vld [vmem:[%s3 + $0x1d0] sm:$0xf]
  %v1017 = vld [vmem:[%s3 + $0x1d4] sm:$0xf]
  %v1018 = vld [vmem:[%s3 + $0x1d8] sm:$0xf]
  %v1019 = vld [vmem:[%s3 + $0x1dc] sm:$0xf]
  %v1020 = vld [vmem:[%s3 + $0x1e0] sm:$0xf]
  %v1021 = vld [vmem:[%s3 + $0x1e4] sm:$0xf]
  %v1022 = vld [vmem:[%s3 + $0x1e8] sm:$0xf]
  %v1023 = vld [vmem:[%s3 + $0x1ec] sm:$0xf]
  %v1024 = vld [vmem:[%s3 + $0x1f0] sm:$0xf]
  %v1025 = vld [vmem:[%s3 + $0x1f4] sm:$0xf]
  %v1026 = vld [vmem:[%s3 + $0x1f8] sm:$0xf]
  %v1027 = vld [vmem:[%s3 + $0x1fc] sm:$0xf]
  %v1028 = vld [vmem:[%s4] sm:$0x1]
  %v1030 = vlaneseq
  %v1031 = vshrl.u32 %v1030, 7
  %v1032 = vsub.s32 0, %v1031
  %v1033 = vrot.slane %v1028, %v1032
  %v1163 = vunpack.c.l.b16 %v900
  %v1164 = vunpack.c.l.b16 %v901
  %v1165 = vunpack.c.l.b16 %v902
  %v1166 = vunpack.c.l.b16 %v903
  %v1167 = vunpack.c.l.b16 %v904
  %v1168 = vunpack.c.l.b16 %v905
  %v1169 = vunpack.c.l.b16 %v906
  %v1170 = vunpack.c.l.b16 %v907
  %v1171 = vunpack.c.l.b16 %v908
  %v1172 = vunpack.c.l.b16 %v909
  %v1173 = vunpack.c.l.b16 %v910
  %v1174 = vunpack.c.l.b16 %v911
  %v1175 = vunpack.c.l.b16 %v912
  %v1176 = vunpack.c.l.b16 %v913
  %v1177 = vunpack.c.l.b16 %v914
  %v1178 = vunpack.c.l.b16 %v915
  %v1179 = vunpack.c.l.b16 %v916
  %v1180 = vunpack.c.l.b16 %v917
  %v1181 = vunpack.c.l.b16 %v918
  %v1182 = vunpack.c.l.b16 %v919
  %v1183 = vunpack.c.l.b16 %v920
  %v1184 = vunpack.c.l.b16 %v921
  %v1185 = vunpack.c.l.b16 %v922
  %v1186 = vunpack.c.l.b16 %v923
  %v1187 = vunpack.c.l.b16 %v924
  %v1188 = vunpack.c.l.b16 %v925
  %v1189 = vunpack.c.l.b16 %v926
  %v1190 = vunpack.c.l.b16 %v927
  %v1191 = vunpack.c.l.b16 %v928
  %v1192 = vunpack.c.l.b16 %v929
  %v1193 = vunpack.c.l.b16 %v930
  %v1194 = vunpack.c.l.b16 %v931
  %v1195 = vunpack.c.l.b16 %v932
  %v1196 = vunpack.c.l.b16 %v933
  %v1197 = vunpack.c.l.b16 %v934
  %v1198 = vunpack.c.l.b16 %v935
  %v1199 = vunpack.c.l.b16 %v936
  %v1200 = vunpack.c.l.b16 %v937
  %v1201 = vunpack.c.l.b16 %v938
  %v1202 = vunpack.c.l.b16 %v939
  %v1203 = vunpack.c.l.b16 %v940
  %v1204 = vunpack.c.l.b16 %v941
  %v1205 = vunpack.c.l.b16 %v942
  %v1206 = vunpack.c.l.b16 %v943
  %v1207 = vunpack.c.l.b16 %v944
  %v1208 = vunpack.c.l.b16 %v945
  %v1209 = vunpack.c.l.b16 %v946
  %v1210 = vunpack.c.l.b16 %v947
  %v1211 = vunpack.c.l.b16 %v948
  %v1212 = vunpack.c.l.b16 %v949
  %v1213 = vunpack.c.l.b16 %v950
  %v1214 = vunpack.c.l.b16 %v951
  %v1215 = vunpack.c.l.b16 %v952
  %v1216 = vunpack.c.l.b16 %v953
  %v1217 = vunpack.c.l.b16 %v954
  %v1218 = vunpack.c.l.b16 %v955
  %v1219 = vunpack.c.l.b16 %v956
  %v1220 = vunpack.c.l.b16 %v957
  %v1221 = vunpack.c.l.b16 %v958
  %v1222 = vunpack.c.l.b16 %v959
  %v1223 = vunpack.c.l.b16 %v960
  %v1224 = vunpack.c.l.b16 %v961
  %v1225 = vunpack.c.l.b16 %v962
  %v1226 = vunpack.c.l.b16 %v963
  %v1227 = vunpack.c.l.b16 %v964
  %v1228 = vunpack.c.l.b16 %v965
  %v1229 = vunpack.c.l.b16 %v966
  %v1230 = vunpack.c.l.b16 %v967
  %v1231 = vunpack.c.l.b16 %v968
  %v1232 = vunpack.c.l.b16 %v969
  %v1233 = vunpack.c.l.b16 %v970
  %v1234 = vunpack.c.l.b16 %v971
  %v1235 = vunpack.c.l.b16 %v972
  %v1236 = vunpack.c.l.b16 %v973
  %v1237 = vunpack.c.l.b16 %v974
  %v1238 = vunpack.c.l.b16 %v975
  %v1239 = vunpack.c.l.b16 %v976
  %v1240 = vunpack.c.l.b16 %v977
  %v1241 = vunpack.c.l.b16 %v978
  %v1242 = vunpack.c.l.b16 %v979
  %v1243 = vunpack.c.l.b16 %v980
  %v1244 = vunpack.c.l.b16 %v981
  %v1245 = vunpack.c.l.b16 %v982
  %v1246 = vunpack.c.l.b16 %v983
  %v1247 = vunpack.c.l.b16 %v984
  %v1248 = vunpack.c.l.b16 %v985
  %v1249 = vunpack.c.l.b16 %v986
  %v1250 = vunpack.c.l.b16 %v987
  %v1251 = vunpack.c.l.b16 %v988
  %v1252 = vunpack.c.l.b16 %v989
  %v1253 = vunpack.c.l.b16 %v990
  %v1254 = vunpack.c.l.b16 %v991
  %v1255 = vunpack.c.l.b16 %v992
  %v1256 = vunpack.c.l.b16 %v993
  %v1257 = vunpack.c.l.b16 %v994
  %v1258 = vunpack.c.l.b16 %v995
  %v1259 = vunpack.c.l.b16 %v996
  %v1260 = vunpack.c.l.b16 %v997
  %v1261 = vunpack.c.l.b16 %v998
  %v1262 = vunpack.c.l.b16 %v999
  %v1263 = vunpack.c.l.b16 %v1000
  %v1264 = vunpack.c.l.b16 %v1001
  %v1265 = vunpack.c.l.b16 %v1002
  %v1266 = vunpack.c.l.b16 %v1003
  %v1267 = vunpack.c.l.b16 %v1004
  %v1268 = vunpack.c.l.b16 %v1005
  %v1269 = vunpack.c.l.b16 %v1006
  %v1270 = vunpack.c.l.b16 %v1007
  %v1271 = vunpack.c.l.b16 %v1008
  %v1272 = vunpack.c.l.b16 %v1009
  %v1273 = vunpack.c.l.b16 %v1010
  %v1274 = vunpack.c.l.b16 %v1011
  %v1275 = vunpack.c.l.b16 %v1012
  %v1276 = vunpack.c.l.b16 %v1013
  %v1277 = vunpack.c.l.b16 %v1014
  %v1278 = vunpack.c.l.b16 %v1015
  %v1279 = vunpack.c.l.b16 %v1016
  %v1280 = vunpack.c.l.b16 %v1017
  %v1281 = vunpack.c.l.b16 %v1018
  %v1282 = vunpack.c.l.b16 %v1019
  %v1283 = vunpack.c.l.b16 %v1020
  %v1284 = vunpack.c.l.b16 %v1021
  %v1285 = vunpack.c.l.b16 %v1022
  %v1286 = vunpack.c.l.b16 %v1023
  %v1287 = vunpack.c.l.b16 %v1024
  %v1288 = vunpack.c.l.b16 %v1025
  %v1289 = vunpack.c.l.b16 %v1026
  %v1290 = vunpack.c.l.b16 %v1027
  %v1291 = vpack.c.b16 %v1164, %v1163
  %v1292 = vpack.c.b16 %v1166, %v1165
  %v1293 = vpack.c.b16 %v1168, %v1167
  %v1294 = vpack.c.b16 %v1170, %v1169
  %v1295 = vpack.c.b16 %v1172, %v1171
  %v1296 = vpack.c.b16 %v1174, %v1173
  %v1297 = vpack.c.b16 %v1176, %v1175
  %v1298 = vpack.c.b16 %v1178, %v1177
  %v1299 = vpack.c.b16 %v1180, %v1179
  %v1300 = vpack.c.b16 %v1182, %v1181
  %v1301 = vpack.c.b16 %v1184, %v1183
  %v1302 = vpack.c.b16 %v1186, %v1185
  %v1303 = vpack.c.b16 %v1188, %v1187
  %v1304 = vpack.c.b16 %v1190, %v1189
  %v1305 = vpack.c.b16 %v1192, %v1191
  %v1306 = vpack.c.b16 %v1194, %v1193
  %v1307 = vpack.c.b16 %v1196, %v1195
  %v1308 = vpack.c.b16 %v1198, %v1197
  %v1309 = vpack.c.b16 %v1200, %v1199
  %v1310 = vpack.c.b16 %v1202, %v1201
  %v1311 = vpack.c.b16 %v1204, %v1203
  %v1312 = vpack.c.b16 %v1206, %v1205
  %v1313 = vpack.c.b16 %v1208, %v1207
  %v1314 = vpack.c.b16 %v1210, %v1209
  %v1315 = vpack.c.b16 %v1212, %v1211
  %v1316 = vpack.c.b16 %v1214, %v1213
  %v1317 = vpack.c.b16 %v1216, %v1215
  %v1318 = vpack.c.b16 %v1218, %v1217
  %v1319 = vpack.c.b16 %v1220, %v1219
  %v1320 = vpack.c.b16 %v1222, %v1221
  %v1321 = vpack.c.b16 %v1224, %v1223
  %v1322 = vpack.c.b16 %v1226, %v1225
  %v1323 = vpack.c.b16 %v1228, %v1227
  %v1324 = vpack.c.b16 %v1230, %v1229
  %v1325 = vpack.c.b16 %v1232, %v1231
  %v1326 = vpack.c.b16 %v1234, %v1233
  %v1327 = vpack.c.b16 %v1236, %v1235
  %v1328 = vpack.c.b16 %v1238, %v1237
  %v1329 = vpack.c.b16 %v1240, %v1239
  %v1330 = vpack.c.b16 %v1242, %v1241
  %v1331 = vpack.c.b16 %v1244, %v1243
  %v1332 = vpack.c.b16 %v1246, %v1245
  %v1333 = vpack.c.b16 %v1248, %v1247
  %v1334 = vpack.c.b16 %v1250, %v1249
  %v1335 = vpack.c.b16 %v1252, %v1251
  %v1336 = vpack.c.b16 %v1254, %v1253
  %v1337 = vpack.c.b16 %v1256, %v1255
  %v1338 = vpack.c.b16 %v1258, %v1257
  %v1339 = vpack.c.b16 %v1260, %v1259
  %v1340 = vpack.c.b16 %v1262, %v1261
  %v1341 = vpack.c.b16 %v1264, %v1263
  %v1342 = vpack.c.b16 %v1266, %v1265
  %v1343 = vpack.c.b16 %v1268, %v1267
  %v1344 = vpack.c.b16 %v1270, %v1269
  %v1345 = vpack.c.b16 %v1272, %v1271
  %v1346 = vpack.c.b16 %v1274, %v1273
  %v1347 = vpack.c.b16 %v1276, %v1275
  %v1348 = vpack.c.b16 %v1278, %v1277
  %v1349 = vpack.c.b16 %v1280, %v1279
  %v1350 = vpack.c.b16 %v1282, %v1281
  %v1351 = vpack.c.b16 %v1284, %v1283
  %v1352 = vpack.c.b16 %v1286, %v1285
  %v1353 = vpack.c.b16 %v1288, %v1287
  %v1354 = vpack.c.b16 %v1290, %v1289
  %1419 = vmatprep.subr.bf16.mxu0 0
  %1420 = vmatpush1.bf16.msra.mxu0 %v1298
  %1421 = vmatprep.subr.bf16.mxu0 0
  %1422 = vmatpush1.bf16.msra.mxu0 %v1297
  %1423 = vmatprep.subr.bf16.mxu0 0
  %1424 = vmatpush1.bf16.msra.mxu0 %v1296
  %1425 = vmatprep.subr.bf16.mxu0 0
  %1426 = vmatpush1.bf16.msra.mxu0 %v1295
  %1427 = vmatprep.subr.bf16.mxu0 0
  %1428 = vmatpush1.bf16.msra.mxu0 %v1294
  %1429 = vmatprep.subr.bf16.mxu0 0
  %1430 = vmatpush1.bf16.msra.mxu0 %v1293
  %1431 = vmatprep.subr.bf16.mxu0 0
  %1432 = vmatpush1.bf16.msra.mxu0 %v1292
  %1433 = vmatprep.subr.bf16.mxu0 0
  %1434 = vmatpush1.bf16.msra.mxu0 %v1291
  %1435 = vmatprep.subr.bf16.mxu0 0
  %1436 = vmatpush2.bf16.msra.mxu0 %v1306
  %1437 = vmatprep.subr.bf16.mxu0 0
  %1438 = vmatpush2.bf16.msra.mxu0 %v1305
  %1439 = vmatprep.subr.bf16.mxu0 0
  %1440 = vmatpush2.bf16.msra.mxu0 %v1304
  %1441 = vmatprep.subr.bf16.mxu0 0
  %1442 = vmatpush2.bf16.msra.mxu0 %v1303
  %1443 = vmatprep.subr.bf16.mxu0 0
  %1444 = vmatpush2.bf16.msra.mxu0 %v1302
  %1445 = vmatprep.subr.bf16.mxu0 0
  %1446 = vmatpush2.bf16.msra.mxu0 %v1301
  %1447 = vmatprep.subr.bf16.mxu0 0
  %1448 = vmatpush2.bf16.msra.mxu0 %v1300
  %1449 = vmatprep.subr.bf16.mxu0 0
  %1450 = vmatpush2.bf16.msra.mxu0 %v1299
  %1451 = vmatprep.mubr.bf16.mxu0 %v837
  %1452 = vmatmul.mubr.bf16.gmra.mxu0 %v836
  %v1453 = vpop.f32.mrf.mxu0
  %v1454 = vadd.f32 %v1033, %v1453
  %v1455 = vpop.f32.mrf.mxu0
  %v1456 = vpop.f32.mrf.mxu0
  %v1457 = vadd.f32 %v1033, %v1456
  %v1458 = vpop.f32.mrf.mxu0
  %1459 = vmatprep.mubr.bf16.mxu0 %v845
  %1460 = vmatmul.mubr.bf16.gmra.mxu0 %v844
  %v1461 = vpop.f32.mrf.mxu0
  %v1462 = vadd.f32 %v1033, %v1461
  %v1463 = vpop.f32.mrf.mxu0
  %v1464 = vpop.f32.mrf.mxu0
  %v1465 = vadd.f32 %v1033, %v1464
  %v1466 = vpop.f32.mrf.mxu0
  %1467 = vmatprep.mubr.bf16.mxu0 %v853
  %1468 = vmatmul.mubr.bf16.gmra.mxu0 %v852
  %v1469 = vpop.f32.mrf.mxu0
  %v1470 = vadd.f32 %v1033, %v1469
  %v1471 = vpop.f32.mrf.mxu0
  %v1472 = vpop.f32.mrf.mxu0
  %v1473 = vadd.f32 %v1033, %v1472
  %v1474 = vpop.f32.mrf.mxu0
  %1475 = vmatprep.mubr.bf16.mxu0 %v861
  %1476 = vmatmul.mubr.bf16.gmra.mxu0 %v860
  %v1477 = vpop.f32.mrf.mxu0
  %v1478 = vadd.f32 %v1033, %v1477
  %v1479 = vpop.f32.mrf.mxu0
  %v1480 = vpop.f32.mrf.mxu0
  %v1481 = vadd.f32 %v1033, %v1480
  %v1482 = vpop.f32.mrf.mxu0
  %1483 = vmatprep.mubr.bf16.mxu0 %v869
  %1484 = vmatmul.mubr.bf16.gmra.mxu0 %v868
  %v1485 = vpop.f32.mrf.mxu0
  %v1486 = vadd.f32 %v1033, %v1485
  %v1487 = vpop.f32.mrf.mxu0
  %v1488 = vpop.f32.mrf.mxu0
  %v1489 = vadd.f32 %v1033, %v1488
  %v1490 = vpop.f32.mrf.mxu0
  %1491 = vmatprep.mubr.bf16.mxu0 %v877
  %1492 = vmatmul.mubr.bf16.gmra.mxu0 %v876
  %v1493 = vpop.f32.mrf.mxu0
  %v1494 = vadd.f32 %v1033, %v1493
  %v1495 = vpop.f32.mrf.mxu0
  %v1496 = vpop.f32.mrf.mxu0
  %v1497 = vadd.f32 %v1033, %v1496
  %v1498 = vpop.f32.mrf.mxu0
  %1499 = vmatprep.mubr.bf16.mxu0 %v885
  %1500 = vmatmul.mubr.bf16.gmra.mxu0 %v884
  %v1501 = vpop.f32.mrf.mxu0
  %v1502 = vadd.f32 %v1033, %v1501
  %v1503 = vpop.f32.mrf.mxu0
  %v1504 = vpop.f32.mrf.mxu0
  %v1505 = vadd.f32 %v1033, %v1504
  %v1506 = vpop.f32.mrf.mxu0
  %1507 = vmatprep.mubr.bf16.mxu0 %v893
  %1508 = vmatmul.mubr.bf16.gmra.mxu0 %v892
  %v1509 = vpop.f32.mrf.mxu0
  %v1510 = vadd.f32 %v1033, %v1509
  %v1511 = vpop.f32.mrf.mxu0
  %v1512 = vpop.f32.mrf.mxu0
  %v1513 = vadd.f32 %v1033, %v1512
  %v1514 = vpop.f32.mrf.mxu0
  %1515 = vdwg.mxu0
  %1516 = vmatprep.subr.bf16.mxu0 0
  %1517 = vmatpush1.bf16.msra.mxu0 %v1314
  %1518 = vmatprep.subr.bf16.mxu0 0
  %1519 = vmatpush1.bf16.msra.mxu0 %v1313
  %1520 = vmatprep.subr.bf16.mxu0 0
  %1521 = vmatpush1.bf16.msra.mxu0 %v1312
  %1522 = vmatprep.subr.bf16.mxu0 0
  %1523 = vmatpush1.bf16.msra.mxu0 %v1311
  %1524 = vmatprep.subr.bf16.mxu0 0
  %1525 = vmatpush1.bf16.msra.mxu0 %v1310
  %1526 = vmatprep.subr.bf16.mxu0 0
  %1527 = vmatpush1.bf16.msra.mxu0 %v1309
  %1528 = vmatprep.subr.bf16.mxu0 0
  %1529 = vmatpush1.bf16.msra.mxu0 %v1308
  %1530 = vmatprep.subr.bf16.mxu0 0
  %1531 = vmatpush1.bf16.msra.mxu0 %v1307
  %1532 = vmatprep.subr.bf16.mxu0 0
  %1533 = vmatpush2.bf16.msra.mxu0 %v1322
  %1534 = vmatprep.subr.bf16.mxu0 0
  %1535 = vmatpush2.bf16.msra.mxu0 %v1321
  %1536 = vmatprep.subr.bf16.mxu0 0
  %1537 = vmatpush2.bf16.msra.mxu0 %v1320
  %1538 = vmatprep.subr.bf16.mxu0 0
  %1539 = vmatpush2.bf16.msra.mxu0 %v1319
  %1540 = vmatprep.subr.bf16.mxu0 0
  %1541 = vmatpush2.bf16.msra.mxu0 %v1318
  %1542 = vmatprep.subr.bf16.mxu0 0
  %1543 = vmatpush2.bf16.msra.mxu0 %v1317
  %1544 = vmatprep.subr.bf16.mxu0 0
  %1545 = vmatpush2.bf16.msra.mxu0 %v1316
  %1546 = vmatprep.subr.bf16.mxu0 0
  %1547 = vmatpush2.bf16.msra.mxu0 %v1315
  %1548 = vmatprep.mubr.bf16.mxu0 %v839
  %1549 = vmatmul.mubr.bf16.gmra.mxu0 %v838
  %v1550 = vpop.f32.mrf.mxu0
  %v1551 = vadd.f32 %v1454, %v1550
  %v1552 = vpop.f32.mrf.mxu0
  %v1553 = vpop.f32.mrf.mxu0
  %v1554 = vadd.f32 %v1457, %v1553
  %v1555 = vpop.f32.mrf.mxu0
  %1556 = vmatprep.mubr.bf16.mxu0 %v847
  %1557 = vmatmul.mubr.bf16.gmra.mxu0 %v846
  %v1558 = vpop.f32.mrf.mxu0
  %v1559 = vadd.f32 %v1462, %v1558
  %v1560 = vpop.f32.mrf.mxu0
  %v1561 = vpop.f32.mrf.mxu0
  %v1562 = vadd.f32 %v1465, %v1561
  %v1563 = vpop.f32.mrf.mxu0
  %1564 = vmatprep.mubr.bf16.mxu0 %v855
  %1565 = vmatmul.mubr.bf16.gmra.mxu0 %v854
  %v1566 = vpop.f32.mrf.mxu0
  %v1567 = vadd.f32 %v1470, %v1566
  %v1568 = vpop.f32.mrf.mxu0
  %v1569 = vpop.f32.mrf.mxu0
  %v1570 = vadd.f32 %v1473, %v1569
  %v1571 = vpop.f32.mrf.mxu0
  %1572 = vmatprep.mubr.bf16.mxu0 %v863
  %1573 = vmatmul.mubr.bf16.gmra.mxu0 %v862
  %v1574 = vpop.f32.mrf.mxu0
  %v1575 = vadd.f32 %v1478, %v1574
  %v1576 = vpop.f32.mrf.mxu0
  %v1577 = vpop.f32.mrf.mxu0
  %v1578 = vadd.f32 %v1481, %v1577
  %v1579 = vpop.f32.mrf.mxu0
  %1580 = vmatprep.mubr.bf16.mxu0 %v871
  %1581 = vmatmul.mubr.bf16.gmra.mxu0 %v870
  %v1582 = vpop.f32.mrf.mxu0
  %v1583 = vadd.f32 %v1486, %v1582
  %v1584 = vpop.f32.mrf.mxu0
  %v1585 = vpop.f32.mrf.mxu0
  %v1586 = vadd.f32 %v1489, %v1585
  %v1587 = vpop.f32.mrf.mxu0
  %1588 = vmatprep.mubr.bf16.mxu0 %v879
  %1589 = vmatmul.mubr.bf16.gmra.mxu0 %v878
  %v1590 = vpop.f32.mrf.mxu0
  %v1591 = vadd.f32 %v1494, %v1590
  %v1592 = vpop.f32.mrf.mxu0
  %v1593 = vpop.f32.mrf.mxu0
  %v1594 = vadd.f32 %v1497, %v1593
  %v1595 = vpop.f32.mrf.mxu0
  %1596 = vmatprep.mubr.bf16.mxu0 %v887
  %1597 = vmatmul.mubr.bf16.gmra.mxu0 %v886
  %v1598 = vpop.f32.mrf.mxu0
  %v1599 = vadd.f32 %v1502, %v1598
  %v1600 = vpop.f32.mrf.mxu0
  %v1601 = vpop.f32.mrf.mxu0
  %v1602 = vadd.f32 %v1505, %v1601
  %v1603 = vpop.f32.mrf.mxu0
  %1604 = vmatprep.mubr.bf16.mxu0 %v895
  %1605 = vmatmul.mubr.bf16.gmra.mxu0 %v894
  %v1606 = vpop.f32.mrf.mxu0
  %v1607 = vadd.f32 %v1510, %v1606
  %v1608 = vpop.f32.mrf.mxu0
  %v1609 = vpop.f32.mrf.mxu0
  %v1610 = vadd.f32 %v1513, %v1609
  %v1611 = vpop.f32.mrf.mxu0
  %1612 = vdwg.mxu0
  %1613 = vmatprep.subr.bf16.mxu0 0
  %1614 = vmatpush1.bf16.msra.mxu0 %v1330
  %1615 = vmatprep.subr.bf16.mxu0 0
  %1616 = vmatpush1.bf16.msra.mxu0 %v1329
  %1617 = vmatprep.subr.bf16.mxu0 0
  %1618 = vmatpush1.bf16.msra.mxu0 %v1328
  %1619 = vmatprep.subr.bf16.mxu0 0
  %1620 = vmatpush1.bf16.msra.mxu0 %v1327
  %1621 = vmatprep.subr.bf16.mxu0 0
  %1622 = vmatpush1.bf16.msra.mxu0 %v1326
  %1623 = vmatprep.subr.bf16.mxu0 0
  %1624 = vmatpush1.bf16.msra.mxu0 %v1325
  %1625 = vmatprep.subr.bf16.mxu0 0
  %1626 = vmatpush1.bf16.msra.mxu0 %v1324
  %1627 = vmatprep.subr.bf16.mxu0 0
  %1628 = vmatpush1.bf16.msra.mxu0 %v1323
  %1629 = vmatprep.subr.bf16.mxu0 0
  %1630 = vmatpush2.bf16.msra.mxu0 %v1338
  %1631 = vmatprep.subr.bf16.mxu0 0
  %1632 = vmatpush2.bf16.msra.mxu0 %v1337
  %1633 = vmatprep.subr.bf16.mxu0 0
  %1634 = vmatpush2.bf16.msra.mxu0 %v1336
  %1635 = vmatprep.subr.bf16.mxu0 0
  %1636 = vmatpush2.bf16.msra.mxu0 %v1335
  %1637 = vmatprep.subr.bf16.mxu0 0
  %1638 = vmatpush2.bf16.msra.mxu0 %v1334
  %1639 = vmatprep.subr.bf16.mxu0 0
  %1640 = vmatpush2.bf16.msra.mxu0 %v1333
  %1641 = vmatprep.subr.bf16.mxu0 0
  %1642 = vmatpush2.bf16.msra.mxu0 %v1332
  %1643 = vmatprep.subr.bf16.mxu0 0
  %1644 = vmatpush2.bf16.msra.mxu0 %v1331
  %1645 = vmatprep.mubr.bf16.mxu0 %v841
  %1646 = vmatmul.mubr.bf16.gmra.mxu0 %v840
  %v1647 = vpop.f32.mrf.mxu0
  %v1648 = vadd.f32 %v1551, %v1647
  %v1649 = vpop.f32.mrf.mxu0
  %v1650 = vpop.f32.mrf.mxu0
  %v1651 = vadd.f32 %v1554, %v1650
  %v1652 = vpop.f32.mrf.mxu0
  %1653 = vmatprep.mubr.bf16.mxu0 %v849
  %1654 = vmatmul.mubr.bf16.gmra.mxu0 %v848
  %v1655 = vpop.f32.mrf.mxu0
  %v1656 = vadd.f32 %v1559, %v1655
  %v1657 = vpop.f32.mrf.mxu0
  %v1658 = vpop.f32.mrf.mxu0
  %v1659 = vadd.f32 %v1562, %v1658
  %v1660 = vpop.f32.mrf.mxu0
  %1661 = vmatprep.mubr.bf16.mxu0 %v857
  %1662 = vmatmul.mubr.bf16.gmra.mxu0 %v856
  %v1663 = vpop.f32.mrf.mxu0
  %v1664 = vadd.f32 %v1567, %v1663
  %v1665 = vpop.f32.mrf.mxu0
  %v1666 = vpop.f32.mrf.mxu0
  %v1667 = vadd.f32 %v1570, %v1666
  %v1668 = vpop.f32.mrf.mxu0
  %1669 = vmatprep.mubr.bf16.mxu0 %v865
  %1670 = vmatmul.mubr.bf16.gmra.mxu0 %v864
  %v1671 = vpop.f32.mrf.mxu0
  %v1672 = vadd.f32 %v1575, %v1671
  %v1673 = vpop.f32.mrf.mxu0
  %v1674 = vpop.f32.mrf.mxu0
  %v1675 = vadd.f32 %v1578, %v1674
  %v1676 = vpop.f32.mrf.mxu0
  %1677 = vmatprep.mubr.bf16.mxu0 %v873
  %1678 = vmatmul.mubr.bf16.gmra.mxu0 %v872
  %v1679 = vpop.f32.mrf.mxu0
  %v1680 = vadd.f32 %v1583, %v1679
  %v1681 = vpop.f32.mrf.mxu0
  %v1682 = vpop.f32.mrf.mxu0
  %v1683 = vadd.f32 %v1586, %v1682
  %v1684 = vpop.f32.mrf.mxu0
  %1685 = vmatprep.mubr.bf16.mxu0 %v881
  %1686 = vmatmul.mubr.bf16.gmra.mxu0 %v880
  %v1687 = vpop.f32.mrf.mxu0
  %v1688 = vadd.f32 %v1591, %v1687
  %v1689 = vpop.f32.mrf.mxu0
  %v1690 = vpop.f32.mrf.mxu0
  %v1691 = vadd.f32 %v1594, %v1690
  %v1692 = vpop.f32.mrf.mxu0
  %1693 = vmatprep.mubr.bf16.mxu0 %v889
  %1694 = vmatmul.mubr.bf16.gmra.mxu0 %v888
  %v1695 = vpop.f32.mrf.mxu0
  %v1696 = vadd.f32 %v1599, %v1695
  %v1697 = vpop.f32.mrf.mxu0
  %v1698 = vpop.f32.mrf.mxu0
  %v1699 = vadd.f32 %v1602, %v1698
  %v1700 = vpop.f32.mrf.mxu0
  %1701 = vmatprep.mubr.bf16.mxu0 %v897
  %1702 = vmatmul.mubr.bf16.gmra.mxu0 %v896
  %v1703 = vpop.f32.mrf.mxu0
  %v1704 = vadd.f32 %v1607, %v1703
  %v1705 = vpop.f32.mrf.mxu0
  %v1706 = vpop.f32.mrf.mxu0
  %v1707 = vadd.f32 %v1610, %v1706
  %v1708 = vpop.f32.mrf.mxu0
  %1709 = vdwg.mxu0
  %1710 = vmatprep.subr.bf16.mxu0 0
  %1711 = vmatpush1.bf16.msra.mxu0 %v1346
  %1712 = vmatprep.subr.bf16.mxu0 0
  %1713 = vmatpush1.bf16.msra.mxu0 %v1345
  %1714 = vmatprep.subr.bf16.mxu0 0
  %1715 = vmatpush1.bf16.msra.mxu0 %v1344
  %1716 = vmatprep.subr.bf16.mxu0 0
  %1717 = vmatpush1.bf16.msra.mxu0 %v1343
  %1718 = vmatprep.subr.bf16.mxu0 0
  %1719 = vmatpush1.bf16.msra.mxu0 %v1342
  %1720 = vmatprep.subr.bf16.mxu0 0
  %1721 = vmatpush1.bf16.msra.mxu0 %v1341
  %1722 = vmatprep.subr.bf16.mxu0 0
  %1723 = vmatpush1.bf16.msra.mxu0 %v1340
  %1724 = vmatprep.subr.bf16.mxu0 0
  %1725 = vmatpush1.bf16.msra.mxu0 %v1339
  %1726 = vmatprep.subr.bf16.mxu0 0
  %1727 = vmatpush2.bf16.msra.mxu0 %v1354
  %1728 = vmatprep.subr.bf16.mxu0 0
  %1729 = vmatpush2.bf16.msra.mxu0 %v1353
  %1730 = vmatprep.subr.bf16.mxu0 0
  %1731 = vmatpush2.bf16.msra.mxu0 %v1352
  %1732 = vmatprep.subr.bf16.mxu0 0
  %1733 = vmatpush2.bf16.msra.mxu0 %v1351
  %1734 = vmatprep.subr.bf16.mxu0 0
  %1735 = vmatpush2.bf16.msra.mxu0 %v1350
  %1736 = vmatprep.subr.bf16.mxu0 0
  %1737 = vmatpush2.bf16.msra.mxu0 %v1349
  %1738 = vmatprep.subr.bf16.mxu0 0
  %1739 = vmatpush2.bf16.msra.mxu0 %v1348
  %1740 = vmatprep.subr.bf16.mxu0 0
  %1741 = vmatpush2.bf16.msra.mxu0 %v1347
  %1742 = vmatprep.mubr.bf16.mxu0 %v843
  %1743 = vmatmul.mubr.bf16.gmra.mxu0 %v842
  %v1744 = vpop.f32.mrf.mxu0
  %v1745 = vadd.f32 %v1648, %v1744
  %v1746 = vpop.f32.mrf.mxu0
  %v1747 = vpop.f32.mrf.mxu0
  %v1748 = vadd.f32 %v1651, %v1747
  %v1749 = vpop.f32.mrf.mxu0
  %1750 = vmatprep.mubr.bf16.mxu0 %v851
  %1751 = vmatmul.mubr.bf16.gmra.mxu0 %v850
  %v1752 = vpop.f32.mrf.mxu0
  %v1753 = vadd.f32 %v1656, %v1752
  %v1754 = vpop.f32.mrf.mxu0
  %v1755 = vpop.f32.mrf.mxu0
  %v1756 = vadd.f32 %v1659, %v1755
  %v1757 = vpop.f32.mrf.mxu0
  %1758 = vmatprep.mubr.bf16.mxu0 %v859
  %1759 = vmatmul.mubr.bf16.gmra.mxu0 %v858
  %v1760 = vpop.f32.mrf.mxu0
  %v1761 = vadd.f32 %v1664, %v1760
  %v1762 = vpop.f32.mrf.mxu0
  %v1763 = vpop.f32.mrf.mxu0
  %v1764 = vadd.f32 %v1667, %v1763
  %v1765 = vpop.f32.mrf.mxu0
  %1766 = vmatprep.mubr.bf16.mxu0 %v867
  %1767 = vmatmul.mubr.bf16.gmra.mxu0 %v866
  %v1768 = vpop.f32.mrf.mxu0
  %v1769 = vadd.f32 %v1672, %v1768
  %v1770 = vpop.f32.mrf.mxu0
  %v1771 = vpop.f32.mrf.mxu0
  %v1772 = vadd.f32 %v1675, %v1771
  %v1773 = vpop.f32.mrf.mxu0
  %1774 = vmatprep.mubr.bf16.mxu0 %v875
  %1775 = vmatmul.mubr.bf16.gmra.mxu0 %v874
  %v1776 = vpop.f32.mrf.mxu0
  %v1777 = vadd.f32 %v1680, %v1776
  %v1778 = vpop.f32.mrf.mxu0
  %v1779 = vpop.f32.mrf.mxu0
  %v1780 = vadd.f32 %v1683, %v1779
  %v1781 = vpop.f32.mrf.mxu0
  %1782 = vmatprep.mubr.bf16.mxu0 %v883
  %1783 = vmatmul.mubr.bf16.gmra.mxu0 %v882
  %v1784 = vpop.f32.mrf.mxu0
  %v1785 = vadd.f32 %v1688, %v1784
  %v1786 = vpop.f32.mrf.mxu0
  %v1787 = vpop.f32.mrf.mxu0
  %v1788 = vadd.f32 %v1691, %v1787
  %v1789 = vpop.f32.mrf.mxu0
  %1790 = vmatprep.mubr.bf16.mxu0 %v891
  %1791 = vmatmul.mubr.bf16.gmra.mxu0 %v890
  %v1792 = vpop.f32.mrf.mxu0
  %v1793 = vadd.f32 %v1696, %v1792
  %v1794 = vpop.f32.mrf.mxu0
  %v1795 = vpop.f32.mrf.mxu0
  %v1796 = vadd.f32 %v1699, %v1795
  %v1797 = vpop.f32.mrf.mxu0
  %1798 = vmatprep.mubr.bf16.mxu0 %v899
  %1799 = vmatmul.mubr.bf16.gmra.mxu0 %v898
  %v1800 = vpop.f32.mrf.mxu0
  %v1801 = vadd.f32 %v1704, %v1800
  %v1802 = vpop.f32.mrf.mxu0
  %v1803 = vpop.f32.mrf.mxu0
  %v1804 = vadd.f32 %v1707, %v1803
  %v1805 = vpop.f32.mrf.mxu0
  %1806 = vdwg.mxu0
  %v1807 = vmul.f32 %v1745, %v1745
  %v1808 = vmul.f32 %v1748, %v1748
  %v1809 = vmul.f32 %v1753, %v1753
  %v1810 = vmul.f32 %v1756, %v1756
  %v1811 = vmul.f32 %v1761, %v1761
  %v1812 = vmul.f32 %v1764, %v1764
  %v1813 = vmul.f32 %v1769, %v1769
  %v1814 = vmul.f32 %v1772, %v1772
  %v1815 = vmul.f32 %v1777, %v1777
  %v1816 = vmul.f32 %v1780, %v1780
  %v1817 = vmul.f32 %v1785, %v1785
  %v1818 = vmul.f32 %v1788, %v1788
  %v1819 = vmul.f32 %v1793, %v1793
  %v1820 = vmul.f32 %v1796, %v1796
  %v1821 = vmul.f32 %v1801, %v1801
  %v1822 = vmul.f32 %v1804, %v1804
  %1823 = vadd.xlane.f32.xlu0 %v1807
  %v1824 = vpop.xlane.xlu0 %1823
  %1825 = vadd.xlane.f32.xlu0 %v1808
  %v1826 = vpop.xlane.xlu0 %1825
  %1827 = vadd.xlane.f32.xlu0 %v1809
  %v1828 = vpop.xlane.xlu0 %1827
  %1829 = vadd.xlane.f32.xlu0 %v1810
  %v1830 = vpop.xlane.xlu0 %1829
  %1831 = vadd.xlane.f32.xlu0 %v1811
  %v1832 = vpop.xlane.xlu0 %1831
  %1833 = vadd.xlane.f32.xlu0 %v1812
  %v1834 = vpop.xlane.xlu0 %1833
  %1835 = vadd.xlane.f32.xlu0 %v1813
  %v1836 = vpop.xlane.xlu0 %1835
  %1837 = vadd.xlane.f32.xlu0 %v1814
  %v1838 = vpop.xlane.xlu0 %1837
  %1839 = vadd.xlane.f32.xlu0 %v1815
  %v1840 = vpop.xlane.xlu0 %1839
  %1841 = vadd.xlane.f32.xlu0 %v1816
  %v1842 = vpop.xlane.xlu0 %1841
  %1843 = vadd.xlane.f32.xlu0 %v1817
  %v1844 = vpop.xlane.xlu0 %1843
  %1845 = vadd.xlane.f32.xlu0 %v1818
  %v1846 = vpop.xlane.xlu0 %1845
  %1847 = vadd.xlane.f32.xlu0 %v1819
  %v1848 = vpop.xlane.xlu0 %1847
  %1849 = vadd.xlane.f32.xlu0 %v1820
  %v1850 = vpop.xlane.xlu0 %1849
  %1851 = vadd.xlane.f32.xlu0 %v1821
  %v1852 = vpop.xlane.xlu0 %1851
  %1853 = vadd.xlane.f32.xlu0 %v1822
  %v1854 = vpop.xlane.xlu0 %1853
  %v1855 = vadd.f32 %v1824, 1e-08
  %v1856 = vadd.f32 %v1826, 1e-08
  %v1857 = vadd.f32 %v1828, 1e-08
  %v1858 = vadd.f32 %v1830, 1e-08
  %v1859 = vadd.f32 %v1832, 1e-08
  %v1860 = vadd.f32 %v1834, 1e-08
  %v1861 = vadd.f32 %v1836, 1e-08
  %v1862 = vadd.f32 %v1838, 1e-08
  %v1863 = vadd.f32 %v1840, 1e-08
  %v1864 = vadd.f32 %v1842, 1e-08
  %v1865 = vadd.f32 %v1844, 1e-08
  %v1866 = vadd.f32 %v1846, 1e-08
  %v1867 = vadd.f32 %v1848, 1e-08
  %v1868 = vadd.f32 %v1850, 1e-08
  %v1869 = vadd.f32 %v1852, 1e-08
  %v1870 = vadd.f32 %v1854, 1e-08
  %v1871 = vrsqrt.pop %v1855
  %v1872 = vrsqrt.pop %v1856
  %v1873 = vrsqrt.pop %v1857
  %v1874 = vrsqrt.pop %v1858
  %v1875 = vrsqrt.pop %v1859
  %v1876 = vrsqrt.pop %v1860
  %v1877 = vrsqrt.pop %v1861
  %v1878 = vrsqrt.pop %v1862
  %v1879 = vrsqrt.pop %v1863
  %v1880 = vrsqrt.pop %v1864
  %v1881 = vrsqrt.pop %v1865
  %v1882 = vrsqrt.pop %v1866
  %v1883 = vrsqrt.pop %v1867
  %v1884 = vrsqrt.pop %v1868
  %v1885 = vrsqrt.pop %v1869
  %v1886 = vrsqrt.pop %v1870
  %s1887 = smul.u32 0, 128
  %v1888 = vlaneseq
  %v1889 = vshrl.u32 %v1888, 7
  %v1890 = vadd.s32 %v1889, 8
  %v1891 = vadd.s32 %v1889, 16
  %v1892 = vadd.s32 %v1889, 24
  %v1893 = vadd.s32 %v1889, 32
  %v1894 = vadd.s32 %v1889, 40
  %v1895 = vadd.s32 %v1889, 48
  %v1896 = vadd.s32 %v1889, 56
  %v1897 = vadd.s32 %v1889, 64
  %v1898 = vadd.s32 %v1889, 72
  %v1899 = vadd.s32 %v1889, 80
  %v1900 = vadd.s32 %v1889, 88
  %v1901 = vadd.s32 %v1889, 96
  %v1902 = vadd.s32 %v1889, 104
  %v1903 = vadd.s32 %v1889, 112
  %v1904 = vadd.s32 %v1889, 120
  %v1905 = vstv %s1887
  %v1906 = vadd.s32 %v1889, %v1905
  %v1907 = vadd.s32 %v1890, %v1905
  %v1908 = vadd.s32 %v1891, %v1905
  %v1909 = vadd.s32 %v1892, %v1905
  %v1910 = vadd.s32 %v1893, %v1905
  %v1911 = vadd.s32 %v1894, %v1905
  %v1912 = vadd.s32 %v1895, %v1905
  %v1913 = vadd.s32 %v1896, %v1905
  %v1914 = vadd.s32 %v1897, %v1905
  %v1915 = vadd.s32 %v1898, %v1905
  %v1916 = vadd.s32 %v1899, %v1905
  %v1917 = vadd.s32 %v1900, %v1905
  %v1918 = vadd.s32 %v1901, %v1905
  %v1919 = vadd.s32 %v1902, %v1905
  %v1920 = vadd.s32 %v1903, %v1905
  %v1921 = vadd.s32 %v1904, %v1905
  %vm1922 = vcmp.lt.s32.totalorder %v1906, 16
  %vm1923 = vcmp.lt.s32.totalorder %v1907, 16
  %vm1924 = vcmp.lt.s32.totalorder %v1908, 16
  %vm1925 = vcmp.lt.s32.totalorder %v1909, 16
  %vm1926 = vcmp.lt.s32.totalorder %v1910, 16
  %vm1927 = vcmp.lt.s32.totalorder %v1911, 16
  %vm1928 = vcmp.lt.s32.totalorder %v1912, 16
  %vm1929 = vcmp.lt.s32.totalorder %v1913, 16
  %vm1930 = vcmp.lt.s32.totalorder %v1914, 16
  %vm1931 = vcmp.lt.s32.totalorder %v1915, 16
  %vm1932 = vcmp.lt.s32.totalorder %v1916, 16
  %vm1933 = vcmp.lt.s32.totalorder %v1917, 16
  %vm1934 = vcmp.lt.s32.totalorder %v1918, 16
  %vm1935 = vcmp.lt.s32.totalorder %v1919, 16
  %vm1936 = vcmp.lt.s32.totalorder %v1920, 16
  %vm1937 = vcmp.lt.s32.totalorder %v1921, 16
  %v1938 = vsel %vm1922, 1, 0
  %v1939 = vsel %vm1923, 1, 0
  %v1940 = vsel %vm1924, 1, 0
  %v1941 = vsel %vm1925, 1, 0
  %v1942 = vsel %vm1926, 1, 0
  %v1943 = vsel %vm1927, 1, 0
  %v1944 = vsel %vm1928, 1, 0
  %v1945 = vsel %vm1929, 1, 0
  %v1946 = vsel %vm1930, 1, 0
  %v1947 = vsel %vm1931, 1, 0
  %v1948 = vsel %vm1932, 1, 0
  %v1949 = vsel %vm1933, 1, 0
  %v1950 = vsel %vm1934, 1, 0
  %v1951 = vsel %vm1935, 1, 0
  %v1952 = vsel %vm1936, 1, 0
  %v1953 = vsel %vm1937, 1, 0
  %v1954 = vcvt.s32.f32 %v1938
  %v1955 = vcvt.s32.f32 %v1939
  %v1956 = vcvt.s32.f32 %v1940
  %v1957 = vcvt.s32.f32 %v1941
  %v1958 = vcvt.s32.f32 %v1942
  %v1959 = vcvt.s32.f32 %v1943
  %v1960 = vcvt.s32.f32 %v1944
  %v1961 = vcvt.s32.f32 %v1945
  %v1962 = vcvt.s32.f32 %v1946
  %v1963 = vcvt.s32.f32 %v1947
  %v1964 = vcvt.s32.f32 %v1948
  %v1965 = vcvt.s32.f32 %v1949
  %v1966 = vcvt.s32.f32 %v1950
  %v1967 = vcvt.s32.f32 %v1951
  %v1968 = vcvt.s32.f32 %v1952
  %v1969 = vcvt.s32.f32 %v1953
  %v1970 = vmul.f32 %v1745, %v1871
  %v1971 = vmul.f32 %v1748, %v1872
  %v1972 = vmul.f32 %v1753, %v1873
  %v1973 = vmul.f32 %v1756, %v1874
  %v1974 = vmul.f32 %v1761, %v1875
  %v1975 = vmul.f32 %v1764, %v1876
  %v1976 = vmul.f32 %v1769, %v1877
  %v1977 = vmul.f32 %v1772, %v1878
  %v1978 = vmul.f32 %v1777, %v1879
  %v1979 = vmul.f32 %v1780, %v1880
  %v1980 = vmul.f32 %v1785, %v1881
  %v1981 = vmul.f32 %v1788, %v1882
  %v1982 = vmul.f32 %v1793, %v1883
  %v1983 = vmul.f32 %v1796, %v1884
  %v1984 = vmul.f32 %v1801, %v1885
  %v1985 = vmul.f32 %v1804, %v1886
  %v1986 = vmul.f32 %v1970, %v1954
  %v1987 = vmul.f32 %v1971, %v1955
  %v1988 = vmul.f32 %v1972, %v1956
  %v1989 = vmul.f32 %v1973, %v1957
  %v1990 = vmul.f32 %v1974, %v1958
  %v1991 = vmul.f32 %v1975, %v1959
  %v1992 = vmul.f32 %v1976, %v1960
  %v1993 = vmul.f32 %v1977, %v1961
  %v1994 = vmul.f32 %v1978, %v1962
  %v1995 = vmul.f32 %v1979, %v1963
  %v1996 = vmul.f32 %v1980, %v1964
  %v1997 = vmul.f32 %v1981, %v1965
  %v1998 = vmul.f32 %v1982, %v1966
  %v1999 = vmul.f32 %v1983, %v1967
  %v2000 = vmul.f32 %v1984, %v1968
  %v2001 = vmul.f32 %v1985, %v1969
  %v2002 = vpack.c.bf16 %v1987, %v1986
  %v2003 = vpack.c.bf16 %v1989, %v1988
  %v2004 = vpack.c.bf16 %v1991, %v1990
  %v2005 = vpack.c.bf16 %v1993, %v1992
  %v2006 = vpack.c.bf16 %v1995, %v1994
  %v2007 = vpack.c.bf16 %v1997, %v1996
  %v2008 = vpack.c.bf16 %v1999, %v1998
  %v2009 = vpack.c.bf16 %v2001, %v2000
  %v2018 = vunpack.c.l.b16 %v2002
  %v2019 = vunpack.c.h.b16 %v2002
  %v2020 = vunpack.c.l.b16 %v2003
  %v2021 = vunpack.c.h.b16 %v2003
  %v2022 = vunpack.c.l.b16 %v2004
  %v2023 = vunpack.c.h.b16 %v2004
  %v2024 = vunpack.c.l.b16 %v2005
  %v2025 = vunpack.c.h.b16 %v2005
  %v2026 = vunpack.c.l.b16 %v2006
  %v2027 = vunpack.c.h.b16 %v2006
  %v2028 = vunpack.c.l.b16 %v2007
  %v2029 = vunpack.c.h.b16 %v2007
  %v2030 = vunpack.c.l.b16 %v2008
  %v2031 = vunpack.c.h.b16 %v2008
  %v2032 = vunpack.c.l.b16 %v2009
  %v2033 = vunpack.c.h.b16 %v2009
  %v2034 = vpack.c.b16 %v2018, %v2018
  %v2035 = vpack.c.b16 %v2019, %v2019
  %v2036 = vpack.c.b16 %v2020, %v2020
  %v2037 = vpack.c.b16 %v2021, %v2021
  %v2038 = vpack.c.b16 %v2022, %v2022
  %v2039 = vpack.c.b16 %v2023, %v2023
  %v2040 = vpack.c.b16 %v2024, %v2024
  %v2041 = vpack.c.b16 %v2025, %v2025
  %v2042 = vpack.c.b16 %v2026, %v2026
  %v2043 = vpack.c.b16 %v2027, %v2027
  %v2044 = vpack.c.b16 %v2028, %v2028
  %v2045 = vpack.c.b16 %v2029, %v2029
  %v2046 = vpack.c.b16 %v2030, %v2030
  %v2047 = vpack.c.b16 %v2031, %v2031
  %v2048 = vpack.c.b16 %v2032, %v2032
  %v2049 = vpack.c.b16 %v2033, %v2033
  %2066 = vst [vmem:[%s5] sm:$0xf] %v2034
  %2067 = vst [vmem:[%s5 + $0x4] sm:$0xf] %v2035
  %2068 = vst [vmem:[%s5 + $0x8] sm:$0xf] %v2036
  %2069 = vst [vmem:[%s5 + $0xc] sm:$0xf] %v2037
  %2070 = vst [vmem:[%s5 + $0x10] sm:$0xf] %v2038
  %2071 = vst [vmem:[%s5 + $0x14] sm:$0xf] %v2039
  %2072 = vst [vmem:[%s5 + $0x18] sm:$0xf] %v2040
  %2073 = vst [vmem:[%s5 + $0x1c] sm:$0xf] %v2041
  %2074 = vst [vmem:[%s5 + $0x20] sm:$0xf] %v2042
  %2075 = vst [vmem:[%s5 + $0x24] sm:$0xf] %v2043
  %2076 = vst [vmem:[%s5 + $0x28] sm:$0xf] %v2044
  %2077 = vst [vmem:[%s5 + $0x2c] sm:$0xf] %v2045
  %2078 = vst [vmem:[%s5 + $0x30] sm:$0xf] %v2046
  %2079 = vst [vmem:[%s5 + $0x34] sm:$0xf] %v2047
  %2080 = vst [vmem:[%s5 + $0x38] sm:$0xf] %v2048
  %2081 = vst [vmem:[%s5 + $0x3c] sm:$0xf] %v2049
  // Predicated region
  $region22: #{ncdnet_con_forward.7} parent=0 // pred_check
    _
  $region23: #{ncdnet_con_forward.7} parent=0 // pred_check_branch
    %2083 = sbr.rel (0) target = $region25
  $region24: #{ncdnet_con_forward.7} parent=0 // pred_region
    _
  $region25: #{ncdnet_con_forward.7} parent=0 // pred_fallthru
    _
  // Predicated region
  $region26: #{ncdnet_con_forward.7} parent=0 // pred_check
    _
  $region27: #{ncdnet_con_forward.7} parent=0 // pred_check_branch
    %2085 = sbr.rel (0) target = $region29
  $region28: #{ncdnet_con_forward.7} parent=0 // pred_region
    _
  $region29: #{ncdnet_con_forward.7} parent=0 // pred_fallthru
    _

// kernel: ncdnet_con_forward.5
$region0: #{ncdnet_con_forward.5}
  #allocation0 [shape = 'u32[]', space=smem, size = 0x4, offset = 0x4, fixed_abs, tag = 'smem constant byte address 0x4 - core index']
  #allocation1 [shape = 'u32[144,128]{1,0:T(1,128)}', space=vmem, size = 0x12000, scoped, tag = 'internal scratch']
  #allocation2 [shape = 'f32[1,1]{1,0:T(1,128)S(1)}', space=vmem, size = 0x200, scoped, tag = 'scoped memory for ncdnet_con_forward.5']
  %s0 = inlined_call_operand.vmem [shape: f32[8,32], index: 0, kind: input, shape index: {}]
  %s1 = inlined_call_operand.vmem [shape: f32[8,32], index: 1, kind: input, shape index: {}]
  %s2 = inlined_call_operand.vmem [shape: f32[8,1], index: 2, kind: input, shape index: {}]
  %s3 = inlined_call_operand.vmem [shape: f32[8,32], index: 3, kind: input, shape index: {}]
  %s4 = inlined_call_operand.vmem [shape: bf16[32,512], index: 4, kind: input, shape index: {}]
  %s5 = inlined_call_operand.vmem [shape: f32[1,512], index: 5, kind: input, shape index: {}]
  %s6 = inlined_call_operand.vmem [shape: bf16[512,256], index: 6, kind: input, shape index: {}]
  %s7 = inlined_call_operand.vmem [shape: f32[1,256], index: 7, kind: input, shape index: {}]
  %s8 = inlined_call_operand.vmem [shape: f32[1,256], index: 8, kind: input, shape index: {}]
  %s9 = inlined_call_operand.<no memory space> [shape: f32[1,1], index: 9, kind: input, shape index: {}]
  %s10 = inlined_call_operand.vmem [shape: f32[8,1], index: 10, kind: output, shape index: {}]
  %s11 = sld [smem:[#allocation0]]
  $region50: #{ncdnet_con_forward.5} parent=0
    _
  %s13 = ssub.s32 1, %s11
  %s14 = scalar_select 0, %s13, %s11
  %v15 = vstv %s9
  %16 = vst [vmem:[#allocation2] sm:$0x1] %v15
  // Predicated region
  $region2: #{ncdnet_con_forward.5} parent=0 // pred_check
    _
  $region3: #{ncdnet_con_forward.5} parent=0 // pred_check_branch
    %18 = sbr.rel (0) target = $region5
  $region4: #{ncdnet_con_forward.5} parent=0 // pred_region
    _
  $region5: #{ncdnet_con_forward.5} parent=0 // pred_fallthru
    _
  // Predicated region
  $region6: #{ncdnet_con_forward.5} parent=0 // pred_check
    _
  $region7: #{ncdnet_con_forward.5} parent=0 // pred_check_branch
    %20 = sbr.rel (0) target = $region9
  $region8: #{ncdnet_con_forward.5} parent=0 // pred_region
    _
  $region9: #{ncdnet_con_forward.5} parent=0 // pred_fallthru
    _
  // Predicated region
  $region10: #{ncdnet_con_forward.5} parent=0 // pred_check
    _
  $region11: #{ncdnet_con_forward.5} parent=0 // pred_check_branch
    %22 = sbr.rel (0) target = $region13
  $region12: #{ncdnet_con_forward.5} parent=0 // pred_region
    _
  $region13: #{ncdnet_con_forward.5} parent=0 // pred_fallthru
    _
  // Predicated region
  $region14: #{ncdnet_con_forward.5} parent=0 // pred_check
    _
  $region15: #{ncdnet_con_forward.5} parent=0 // pred_check_branch
    %24 = sbr.rel (0) target = $region17
  $region16: #{ncdnet_con_forward.5} parent=0 // pred_region
    _
  $region17: #{ncdnet_con_forward.5} parent=0 // pred_fallthru
    _
  // Predicated region
  $region18: #{ncdnet_con_forward.5} parent=0 // pred_check
    _
  $region19: #{ncdnet_con_forward.5} parent=0 // pred_check_branch
    %26 = sbr.rel (0) target = $region21
  $region20: #{ncdnet_con_forward.5} parent=0 // pred_region
    _
  $region21: #{ncdnet_con_forward.5} parent=0 // pred_fallthru
    _
  // Predicated region
  $region22: #{ncdnet_con_forward.5} parent=0 // pred_check
    _
  $region23: #{ncdnet_con_forward.5} parent=0 // pred_check_branch
    %28 = sbr.rel (0) target = $region25
  $region24: #{ncdnet_con_forward.5} parent=0 // pred_region
    _
  $region25: #{ncdnet_con_forward.5} parent=0 // pred_fallthru
    _
  // Predicated region
  $region26: #{ncdnet_con_forward.5} parent=0 // pred_check
    _
  $region27: #{ncdnet_con_forward.5} parent=0 // pred_check_branch
    %30 = sbr.rel (0) target = $region29
  $region28: #{ncdnet_con_forward.5} parent=0 // pred_region
    _
  $region29: #{ncdnet_con_forward.5} parent=0 // pred_fallthru
    _
  // Predicated region
  $region30: #{ncdnet_con_forward.5} parent=0 // pred_check
    _
  $region31: #{ncdnet_con_forward.5} parent=0 // pred_check_branch
    %32 = sbr.rel (0) target = $region33
  $region32: #{ncdnet_con_forward.5} parent=0 // pred_region
    _
  $region33: #{ncdnet_con_forward.5} parent=0 // pred_fallthru
    _
  // Predicated region
  $region34: #{ncdnet_con_forward.5} parent=0 // pred_check
    _
  $region35: #{ncdnet_con_forward.5} parent=0 // pred_check_branch
    %34 = sbr.rel (0) target = $region37
  $region36: #{ncdnet_con_forward.5} parent=0 // pred_region
    _
  $region37: #{ncdnet_con_forward.5} parent=0 // pred_fallthru
    _
  // Predicated region
  $region38: #{ncdnet_con_forward.5} parent=0 // pred_check
    _
  $region39: #{ncdnet_con_forward.5} parent=0 // pred_check_branch
    %36 = sbr.rel (0) target = $region41
  $region40: #{ncdnet_con_forward.5} parent=0 // pred_region
    _
  $region41: #{ncdnet_con_forward.5} parent=0 // pred_fallthru
    _
  %v38 = vld [vmem:[%s0] sm:$0xff]
  %v39 = vxor.u32 %v38, 2147483648
  %v40 = vmul.f32 %v39, 1.442695
  %v41 = vpow.pop %v40
  %v42 = vadd.f32 %v41, 1.0
  %v43 = vrcp.pop %v42
  %v44 = vmul.f32 1.0, %v43
  %v45 = vld [vmem:[%s1] sm:$0xff]
  %v46 = vxor.u32 %v45, 2147483648
  %v47 = vmul.f32 %v46, 1.442695
  %v48 = vpow.pop %v47
  %v49 = vadd.f32 %v48, 1.0
  %v50 = vrcp.pop %v49
  %v51 = vmul.f32 1.0, %v50
  %v52 = vld [vmem:[%s2] sm:$0xff]
  %v53 = vxor.u32 %v52, 2147483648
  %v54 = vmul.f32 %v53, 1.442695
  %v55 = vpow.pop %v54
  %v56 = vadd.f32 %v55, 1.0
  %v57 = vrcp.pop %v56
  %v58 = vmul.f32 1.0, %v57
  %v59 = vld [vmem:[%s3] sm:$0xff]
  %v60 = vsub.f32 %v44, %v51
  %v61 = vmul.f32 %v59, %v60
  %63 = vset.pattern.permute.xlu0 0
  %64 = vperm.xlu0 %63, %v58
  %v65 = vpop.permute.xlu0 %64
  %v67 = vmul.f32 %v61, %v65
  %v68 = vpack.c.bf16 %v67, %v67
  %v69 = vld [vmem:[%s4] sm:$0xff]
  %v70 = vld [vmem:[%s4 + $0x8] sm:$0xff]
  %v71 = vld [vmem:[%s4 + $0x10] sm:$0xff]
  %v72 = vld [vmem:[%s4 + $0x18] sm:$0xff]
  %v73 = vld [vmem:[%s4 + $0x20] sm:$0xff]
  %v74 = vld [vmem:[%s4 + $0x28] sm:$0xff]
  %v75 = vld [vmem:[%s4 + $0x30] sm:$0xff]
  %v76 = vld [vmem:[%s4 + $0x38] sm:$0xff]
  %v77 = vld [vmem:[%s5] sm:$0xf]
  %v79 = vlaneseq
  %v80 = vshrl.u32 %v79, 7
  %v81 = vsub.s32 0, %v80
  %v82 = vrot.slane %v77, %v81
  %v83 = vlaneseq
  %v84 = vshrl.u32 %v83, 7
  %v85 = vsub.s32 1, %v84
  %v86 = vrot.slane %v77, %v85
  %v87 = vlaneseq
  %v88 = vshrl.u32 %v87, 7
  %v89 = vsub.s32 2, %v88
  %v90 = vrot.slane %v77, %v89
  %v91 = vlaneseq
  %v92 = vshrl.u32 %v91, 7
  %v93 = vsub.s32 3, %v92
  %v94 = vrot.slane %v77, %v93
  %v107 = vunpack.c.l.b16 %v69
  %v108 = vunpack.c.h.b16 %v69
  %v109 = vunpack.c.l.b16 %v70
  %v110 = vunpack.c.h.b16 %v70
  %v111 = vunpack.c.l.b16 %v71
  %v112 = vunpack.c.h.b16 %v71
  %v113 = vunpack.c.l.b16 %v72
  %v114 = vunpack.c.h.b16 %v72
  %v115 = vunpack.c.l.b16 %v73
  %v116 = vunpack.c.h.b16 %v73
  %v117 = vunpack.c.l.b16 %v74
  %v118 = vunpack.c.h.b16 %v74
  %v119 = vunpack.c.l.b16 %v75
  %v120 = vunpack.c.h.b16 %v75
  %v121 = vunpack.c.l.b16 %v76
  %v122 = vunpack.c.h.b16 %v76
  %v123 = vpack.c.b16 %v111, %v107
  %v124 = vpack.c.b16 %v112, %v108
  %v125 = vpack.c.b16 %v113, %v109
  %v126 = vpack.c.b16 %v114, %v110
  %v127 = vpack.c.b16 %v119, %v115
  %v128 = vpack.c.b16 %v120, %v116
  %v129 = vpack.c.b16 %v121, %v117
  %v130 = vpack.c.b16 %v122, %v118
  %vm139 = vcmask 261120
  %v141 = vsel %vm139, %v68, 0
  %143 = vmatprep.subr.bf16.mxu0 0
  %144 = vmatpush1.bf16.msra.mxu0 0
  %145 = vmatprep.subr.bf16.mxu0 0
  %146 = vmatpush1.bf16.msra.mxu0 0
  %147 = vmatprep.subr.bf16.mxu0 0
  %148 = vmatpush1.bf16.msra.mxu0 0
  %149 = vmatprep.subr.bf16.mxu0 0
  %150 = vmatpush1.bf16.msra.mxu0 0
  %151 = vmatprep.subr.bf16.mxu0 0
  %152 = vmatpush1.bf16.msra.mxu0 0
  %153 = vmatprep.subr.bf16.mxu0 0
  %154 = vmatpush1.bf16.msra.mxu0 0
  %155 = vmatprep.subr.bf16.mxu0 %v128
  %156 = vmatpush1.bf16.msra.mxu0 %v127
  %157 = vmatprep.subr.bf16.mxu0 %v124
  %158 = vmatpush1.bf16.msra.mxu0 %v123
  %159 = vmatprep.subr.bf16.mxu0 0
  %160 = vmatpush2.bf16.msra.mxu0 0
  %161 = vmatprep.subr.bf16.mxu0 0
  %162 = vmatpush2.bf16.msra.mxu0 0
  %163 = vmatprep.subr.bf16.mxu0 0
  %164 = vmatpush2.bf16.msra.mxu0 0
  %165 = vmatprep.subr.bf16.mxu0 0
  %166 = vmatpush2.bf16.msra.mxu0 0
  %167 = vmatprep.subr.bf16.mxu0 0
  %168 = vmatpush2.bf16.msra.mxu0 0
  %169 = vmatprep.subr.bf16.mxu0 0
  %170 = vmatpush2.bf16.msra.mxu0 0
  %171 = vmatprep.subr.bf16.mxu0 0
  %172 = vmatpush2.bf16.msra.mxu0 0
  %173 = vmatprep.subr.bf16.mxu0 0
  %174 = vmatpush2.bf16.msra.mxu0 0
  %175 = vmatprep.mubr.bf16.mxu0 0
  %176 = vmatmul.mubr.bf16.gmra.mxu0 %v141
  %v177 = vpop.f32.mrf.mxu0
  %v178 = vadd.f32 %v82, %v177
  %v179 = vpop.f32.mrf.mxu0
  %v180 = vadd.f32 %v86, %v179
  %v181 = vpop.f32.mrf.mxu0
  %v182 = vpop.f32.mrf.mxu0
  %183 = vdwg.mxu0
  %184 = vmatprep.subr.bf16.mxu0 0
  %185 = vmatpush1.bf16.msra.mxu0 0
  %186 = vmatprep.subr.bf16.mxu0 0
  %187 = vmatpush1.bf16.msra.mxu0 0
  %188 = vmatprep.subr.bf16.mxu0 0
  %189 = vmatpush1.bf16.msra.mxu0 0
  %190 = vmatprep.subr.bf16.mxu0 0
  %191 = vmatpush1.bf16.msra.mxu0 0
  %192 = vmatprep.subr.bf16.mxu0 0
  %193 = vmatpush1.bf16.msra.mxu0 0
  %194 = vmatprep.subr.bf16.mxu0 0
  %195 = vmatpush1.bf16.msra.mxu0 0
  %196 = vmatprep.subr.bf16.mxu0 %v130
  %197 = vmatpush1.bf16.msra.mxu0 %v129
  %198 = vmatprep.subr.bf16.mxu0 %v126
  %199 = vmatpush1.bf16.msra.mxu0 %v125
  %200 = vmatprep.subr.bf16.mxu0 0
  %201 = vmatpush2.bf16.msra.mxu0 0
  %202 = vmatprep.subr.bf16.mxu0 0
  %203 = vmatpush2.bf16.msra.mxu0 0
  %204 = vmatprep.subr.bf16.mxu0 0
  %205 = vmatpush2.bf16.msra.mxu0 0
  %206 = vmatprep.subr.bf16.mxu0 0
  %207 = vmatpush2.bf16.msra.mxu0 0
  %208 = vmatprep.subr.bf16.mxu0 0
  %209 = vmatpush2.bf16.msra.mxu0 0
  %210 = vmatprep.subr.bf16.mxu0 0
  %211 = vmatpush2.bf16.msra.mxu0 0
  %212 = vmatprep.subr.bf16.mxu0 0
  %213 = vmatpush2.bf16.msra.mxu0 0
  %214 = vmatprep.subr.bf16.mxu0 0
  %215 = vmatpush2.bf16.msra.mxu0 0
  %216 = vmatprep.mubr.bf16.mxu0 0
  %217 = vmatmul.mubr.bf16.gmra.mxu0 %v141
  %v218 = vpop.f32.mrf.mxu0
  %v219 = vadd.f32 %v90, %v218
  %v220 = vpop.f32.mrf.mxu0
  %v221 = vadd.f32 %v94, %v220
  %v222 = vpop.f32.mrf.mxu0
  %v223 = vpop.f32.mrf.mxu0
  %224 = vdwg.mxu0
  %v225 = vxor.u32 %v178, 2147483648
  %v226 = vxor.u32 %v180, 2147483648
  %v227 = vxor.u32 %v219, 2147483648
  %v228 = vxor.u32 %v221, 2147483648
  %v229 = vmul.f32 %v225, 1.442695
  %v230 = vpow.pop %v229
  %v231 = vmul.f32 %v226, 1.442695
  %v232 = vpow.pop %v231
  %v233 = vmul.f32 %v227, 1.442695
  %v234 = vpow.pop %v233
  %v235 = vmul.f32 %v228, 1.442695
  %v236 = vpow.pop %v235
  %v237 = vadd.f32 %v230, 1.0
  %v238 = vadd.f32 %v232, 1.0
  %v239 = vadd.f32 %v234, 1.0
  %v240 = vadd.f32 %v236, 1.0
  %v241 = vrcp.pop %v237
  %v242 = vmul.f32 1.0, %v241
  %v243 = vrcp.pop %v238
  %v244 = vmul.f32 1.0, %v243
  %v245 = vrcp.pop %v239
  %v246 = vmul.f32 1.0, %v245
  %v247 = vrcp.pop %v240
  %v248 = vmul.f32 1.0, %v247
  %v249 = vpack.c.bf16 %v242, %v242
  %v250 = vpack.c.bf16 %v244, %v244
  %v251 = vpack.c.bf16 %v246, %v246
  %v252 = vpack.c.bf16 %v248, %v248
  %v253 = vld [vmem:[%s6] sm:$0xff]
  %v254 = vld [vmem:[%s6 + $0x8] sm:$0xff]
  %v255 = vld [vmem:[%s6 + $0x10] sm:$0xff]
  %v256 = vld [vmem:[%s6 + $0x18] sm:$0xff]
  %v257 = vld [vmem:[%s6 + $0x20] sm:$0xff]
  %v258 = vld [vmem:[%s6 + $0x28] sm:$0xff]
  %v259 = vld [vmem:[%s6 + $0x30] sm:$0xff]
  %v260 = vld [vmem:[%s6 + $0x38] sm:$0xff]
  %v261 = vld [vmem:[%s6 + $0x40] sm:$0xff]
  %v262 = vld [vmem:[%s6 + $0x48] sm:$0xff]
  %v263 = vld [vmem:[%s6 + $0x50] sm:$0xff]
  %v264 = vld [vmem:[%s6 + $0x58] sm:$0xff]
  %v265 = vld [vmem:[%s6 + $0x60] sm:$0xff]
  %v266 = vld [vmem:[%s6 + $0x68] sm:$0xff]
  %v267 = vld [vmem:[%s6 + $0x70] sm:$0xff]
  %v268 = vld [vmem:[%s6 + $0x78] sm:$0xff]
  %v269 = vld [vmem:[%s6 + $0x80] sm:$0xff]
  %v270 = vld [vmem:[%s6 + $0x88] sm:$0xff]
  %v271 = vld [vmem:[%s6 + $0x90] sm:$0xff]
  %v272 = vld [vmem:[%s6 + $0x98] sm:$0xff]
  %v273 = vld [vmem:[%s6 + $0xa0] sm:$0xff]
  %v274 = vld [vmem:[%s6 + $0xa8] sm:$0xff]
  %v275 = vld [vmem:[%s6 + $0xb0] sm:$0xff]
  %v276 = vld [vmem:[%s6 + $0xb8] sm:$0xff]
  %v277 = vld [vmem:[%s6 + $0xc0] sm:$0xff]
  %v278 = vld [vmem:[%s6 + $0xc8] sm:$0xff]
  %v279 = vld [vmem:[%s6 + $0xd0] sm:$0xff]
  %v280 = vld [vmem:[%s6 + $0xd8] sm:$0xff]
  %v281 = vld [vmem:[%s6 + $0xe0] sm:$0xff]
  %v282 = vld [vmem:[%s6 + $0xe8] sm:$0xff]
  %v283 = vld [vmem:[%s6 + $0xf0] sm:$0xff]
  %v284 = vld [vmem:[%s6 + $0xf8] sm:$0xff]
  %v285 = vld [vmem:[%s6 + $0x100] sm:$0xff]
  %v286 = vld [vmem:[%s6 + $0x108] sm:$0xff]
  %v287 = vld [vmem:[%s6 + $0x110] sm:$0xff]
  %v288 = vld [vmem:[%s6 + $0x118] sm:$0xff]
  %v289 = vld [vmem:[%s6 + $0x120] sm:$0xff]
  %v290 = vld [vmem:[%s6 + $0x128] sm:$0xff]
  %v291 = vld [vmem:[%s6 + $0x130] sm:$0xff]
  %v292 = vld [vmem:[%s6 + $0x138] sm:$0xff]
  %v293 = vld [vmem:[%s6 + $0x140] sm:$0xff]
  %v294 = vld [vmem:[%s6 + $0x148] sm:$0xff]
  %v295 = vld [vmem:[%s6 + $0x150] sm:$0xff]
  %v296 = vld [vmem:[%s6 + $0x158] sm:$0xff]
  %v297 = vld [vmem:[%s6 + $0x160] sm:$0xff]
  %v298 = vld [vmem:[%s6 + $0x168] sm:$0xff]
  %v299 = vld [vmem:[%s6 + $0x170] sm:$0xff]
  %v300 = vld [vmem:[%s6 + $0x178] sm:$0xff]
  %v301 = vld [vmem:[%s6 + $0x180] sm:$0xff]
  %v302 = vld [vmem:[%s6 + $0x188] sm:$0xff]
  %v303 = vld [vmem:[%s6 + $0x190] sm:$0xff]
  %v304 = vld [vmem:[%s6 + $0x198] sm:$0xff]
  %v305 = vld [vmem:[%s6 + $0x1a0] sm:$0xff]
  %v306 = vld [vmem:[%s6 + $0x1a8] sm:$0xff]
  %v307 = vld [vmem:[%s6 + $0x1b0] sm:$0xff]
  %v308 = vld [vmem:[%s6 + $0x1b8] sm:$0xff]
  %v309 = vld [vmem:[%s6 + $0x1c0] sm:$0xff]
  %v310 = vld [vmem:[%s6 + $0x1c8] sm:$0xff]
  %v311 = vld [vmem:[%s6 + $0x1d0] sm:$0xff]
  %v312 = vld [vmem:[%s6 + $0x1d8] sm:$0xff]
  %v313 = vld [vmem:[%s6 + $0x1e0] sm:$0xff]
  %v314 = vld [vmem:[%s6 + $0x1e8] sm:$0xff]
  %v315 = vld [vmem:[%s6 + $0x1f0] sm:$0xff]
  %v316 = vld [vmem:[%s6 + $0x1f8] sm:$0xff]
  %v317 = vld [vmem:[%s7] sm:$0x3]
  %v319 = vlaneseq
  %v320 = vshrl.u32 %v319, 7
  %v321 = vsub.s32 0, %v320
  %v322 = vrot.slane %v317, %v321
  %v323 = vlaneseq
  %v324 = vshrl.u32 %v323, 7
  %v325 = vsub.s32 1, %v324
  %v326 = vrot.slane %v317, %v325
  %v393 = vunpack.c.l.b16 %v253
  %v394 = vunpack.c.h.b16 %v253
  %v395 = vunpack.c.l.b16 %v254
  %v396 = vunpack.c.h.b16 %v254
  %v397 = vunpack.c.l.b16 %v255
  %v398 = vunpack.c.h.b16 %v255
  %v399 = vunpack.c.l.b16 %v256
  %v400 = vunpack.c.h.b16 %v256
  %v401 = vunpack.c.l.b16 %v257
  %v402 = vunpack.c.h.b16 %v257
  %v403 = vunpack.c.l.b16 %v258
  %v404 = vunpack.c.h.b16 %v258
  %v405 = vunpack.c.l.b16 %v259
  %v406 = vunpack.c.h.b16 %v259
  %v407 = vunpack.c.l.b16 %v260
  %v408 = vunpack.c.h.b16 %v260
  %v409 = vunpack.c.l.b16 %v261
  %v410 = vunpack.c.h.b16 %v261
  %v411 = vunpack.c.l.b16 %v262
  %v412 = vunpack.c.h.b16 %v262
  %v413 = vunpack.c.l.b16 %v263
  %v414 = vunpack.c.h.b16 %v263
  %v415 = vunpack.c.l.b16 %v264
  %v416 = vunpack.c.h.b16 %v264
  %v417 = vunpack.c.l.b16 %v265
  %v418 = vunpack.c.h.b16 %v265
  %v419 = vunpack.c.l.b16 %v266
  %v420 = vunpack.c.h.b16 %v266
  %v421 = vunpack.c.l.b16 %v267
  %v422 = vunpack.c.h.b16 %v267
  %v423 = vunpack.c.l.b16 %v268
  %v424 = vunpack.c.h.b16 %v268
  %v425 = vunpack.c.l.b16 %v269
  %v426 = vunpack.c.h.b16 %v269
  %v427 = vunpack.c.l.b16 %v270
  %v428 = vunpack.c.h.b16 %v270
  %v429 = vunpack.c.l.b16 %v271
  %v430 = vunpack.c.h.b16 %v271
  %v431 = vunpack.c.l.b16 %v272
  %v432 = vunpack.c.h.b16 %v272
  %v433 = vunpack.c.l.b16 %v273
  %v434 = vunpack.c.h.b16 %v273
  %v435 = vunpack.c.l.b16 %v274
  %v436 = vunpack.c.h.b16 %v274
  %v437 = vunpack.c.l.b16 %v275
  %v438 = vunpack.c.h.b16 %v275
  %v439 = vunpack.c.l.b16 %v276
  %v440 = vunpack.c.h.b16 %v276
  %v441 = vunpack.c.l.b16 %v277
  %v442 = vunpack.c.h.b16 %v277
  %v443 = vunpack.c.l.b16 %v278
  %v444 = vunpack.c.h.b16 %v278
  %v445 = vunpack.c.l.b16 %v279
  %v446 = vunpack.c.h.b16 %v279
  %v447 = vunpack.c.l.b16 %v280
  %v448 = vunpack.c.h.b16 %v280
  %v449 = vunpack.c.l.b16 %v281
  %v450 = vunpack.c.h.b16 %v281
  %v451 = vunpack.c.l.b16 %v282
  %v452 = vunpack.c.h.b16 %v282
  %v453 = vunpack.c.l.b16 %v283
  %v454 = vunpack.c.h.b16 %v283
  %v455 = vunpack.c.l.b16 %v284
  %v456 = vunpack.c.h.b16 %v284
  %v457 = vunpack.c.l.b16 %v285
  %v458 = vunpack.c.h.b16 %v285
  %v459 = vunpack.c.l.b16 %v286
  %v460 = vunpack.c.h.b16 %v286
  %v461 = vunpack.c.l.b16 %v287
  %v462 = vunpack.c.h.b16 %v287
  %v463 = vunpack.c.l.b16 %v288
  %v464 = vunpack.c.h.b16 %v288
  %v465 = vunpack.c.l.b16 %v289
  %v466 = vunpack.c.h.b16 %v289
  %v467 = vunpack.c.l.b16 %v290
  %v468 = vunpack.c.h.b16 %v290
  %v469 = vunpack.c.l.b16 %v291
  %v470 = vunpack.c.h.b16 %v291
  %v471 = vunpack.c.l.b16 %v292
  %v472 = vunpack.c.h.b16 %v292
  %v473 = vunpack.c.l.b16 %v293
  %v474 = vunpack.c.h.b16 %v293
  %v475 = vunpack.c.l.b16 %v294
  %v476 = vunpack.c.h.b16 %v294
  %v477 = vunpack.c.l.b16 %v295
  %v478 = vunpack.c.h.b16 %v295
  %v479 = vunpack.c.l.b16 %v296
  %v480 = vunpack.c.h.b16 %v296
  %v481 = vunpack.c.l.b16 %v297
  %v482 = vunpack.c.h.b16 %v297
  %v483 = vunpack.c.l.b16 %v298
  %v484 = vunpack.c.h.b16 %v298
  %v485 = vunpack.c.l.b16 %v299
  %v486 = vunpack.c.h.b16 %v299
  %v487 = vunpack.c.l.b16 %v300
  %v488 = vunpack.c.h.b16 %v300
  %v489 = vunpack.c.l.b16 %v301
  %v490 = vunpack.c.h.b16 %v301
  %v491 = vunpack.c.l.b16 %v302
  %v492 = vunpack.c.h.b16 %v302
  %v493 = vunpack.c.l.b16 %v303
  %v494 = vunpack.c.h.b16 %v303
  %v495 = vunpack.c.l.b16 %v304
  %v496 = vunpack.c.h.b16 %v304
  %v497 = vunpack.c.l.b16 %v305
  %v498 = vunpack.c.h.b16 %v305
  %v499 = vunpack.c.l.b16 %v306
  %v500 = vunpack.c.h.b16 %v306
  %v501 = vunpack.c.l.b16 %v307
  %v502 = vunpack.c.h.b16 %v307
  %v503 = vunpack.c.l.b16 %v308
  %v504 = vunpack.c.h.b16 %v308
  %v505 = vunpack.c.l.b16 %v309
  %v506 = vunpack.c.h.b16 %v309
  %v507 = vunpack.c.l.b16 %v310
  %v508 = vunpack.c.h.b16 %v310
  %v509 = vunpack.c.l.b16 %v311
  %v510 = vunpack.c.h.b16 %v311
  %v511 = vunpack.c.l.b16 %v312
  %v512 = vunpack.c.h.b16 %v312
  %v513 = vunpack.c.l.b16 %v313
  %v514 = vunpack.c.h.b16 %v313
  %v515 = vunpack.c.l.b16 %v314
  %v516 = vunpack.c.h.b16 %v314
  %v517 = vunpack.c.l.b16 %v315
  %v518 = vunpack.c.h.b16 %v315
  %v519 = vunpack.c.l.b16 %v316
  %v520 = vunpack.c.h.b16 %v316
  %v521 = vpack.c.b16 %v395, %v393
  %v522 = vpack.c.b16 %v396, %v394
  %v523 = vpack.c.b16 %v399, %v397
  %v524 = vpack.c.b16 %v400, %v398
  %v525 = vpack.c.b16 %v403, %v401
  %v526 = vpack.c.b16 %v404, %v402
  %v527 = vpack.c.b16 %v407, %v405
  %v528 = vpack.c.b16 %v408, %v406
  %v529 = vpack.c.b16 %v411, %v409
  %v530 = vpack.c.b16 %v412, %v410
  %v531 = vpack.c.b16 %v415, %v413
  %v532 = vpack.c.b16 %v416, %v414
  %v533 = vpack.c.b16 %v419, %v417
  %v534 = vpack.c.b16 %v420, %v418
  %v535 = vpack.c.b16 %v423, %v421
  %v536 = vpack.c.b16 %v424, %v422
  %v537 = vpack.c.b16 %v427, %v425
  %v538 = vpack.c.b16 %v428, %v426
  %v539 = vpack.c.b16 %v431, %v429
  %v540 = vpack.c.b16 %v432, %v430
  %v541 = vpack.c.b16 %v435, %v433
  %v542 = vpack.c.b16 %v436, %v434
  %v543 = vpack.c.b16 %v439, %v437
  %v544 = vpack.c.b16 %v440, %v438
  %v545 = vpack.c.b16 %v443, %v441
  %v546 = vpack.c.b16 %v444, %v442
  %v547 = vpack.c.b16 %v447, %v445
  %v548 = vpack.c.b16 %v448, %v446
  %v549 = vpack.c.b16 %v451, %v449
  %v550 = vpack.c.b16 %v452, %v450
  %v551 = vpack.c.b16 %v455, %v453
  %v552 = vpack.c.b16 %v456, %v454
  %v553 = vpack.c.b16 %v459, %v457
  %v554 = vpack.c.b16 %v460, %v458
  %v555 = vpack.c.b16 %v463, %v461
  %v556 = vpack.c.b16 %v464, %v462
  %v557 = vpack.c.b16 %v467, %v465
  %v558 = vpack.c.b16 %v468, %v466
  %v559 = vpack.c.b16 %v471, %v469
  %v560 = vpack.c.b16 %v472, %v470
  %v561 = vpack.c.b16 %v475, %v473
  %v562 = vpack.c.b16 %v476, %v474
  %v563 = vpack.c.b16 %v479, %v477
  %v564 = vpack.c.b16 %v480, %v478
  %v565 = vpack.c.b16 %v483, %v481
  %v566 = vpack.c.b16 %v484, %v482
  %v567 = vpack.c.b16 %v487, %v485
  %v568 = vpack.c.b16 %v488, %v486
  %v569 = vpack.c.b16 %v491, %v489
  %v570 = vpack.c.b16 %v492, %v490
  %v571 = vpack.c.b16 %v495, %v493
  %v572 = vpack.c.b16 %v496, %v494
  %v573 = vpack.c.b16 %v499, %v497
  %v574 = vpack.c.b16 %v500, %v498
  %v575 = vpack.c.b16 %v503, %v501
  %v576 = vpack.c.b16 %v504, %v502
  %v577 = vpack.c.b16 %v507, %v505
  %v578 = vpack.c.b16 %v508, %v506
  %v579 = vpack.c.b16 %v511, %v509
  %v580 = vpack.c.b16 %v512, %v510
  %v581 = vpack.c.b16 %v515, %v513
  %v582 = vpack.c.b16 %v516, %v514
  %v583 = vpack.c.b16 %v519, %v517
  %v584 = vpack.c.b16 %v520, %v518
  %649 = vmatprep.subr.bf16.mxu0 %v536
  %650 = vmatpush1.bf16.msra.mxu0 %v535
  %651 = vmatprep.subr.bf16.mxu0 %v534
  %652 = vmatpush1.bf16.msra.mxu0 %v533
  %653 = vmatprep.subr.bf16.mxu0 %v532
  %654 = vmatpush1.bf16.msra.mxu0 %v531
  %655 = vmatprep.subr.bf16.mxu0 %v530
  %656 = vmatpush1.bf16.msra.mxu0 %v529
  %657 = vmatprep.subr.bf16.mxu0 %v528
  %658 = vmatpush1.bf16.msra.mxu0 %v527
  %659 = vmatprep.subr.bf16.mxu0 %v526
  %660 = vmatpush1.bf16.msra.mxu0 %v525
  %661 = vmatprep.subr.bf16.mxu0 %v524
  %662 = vmatpush1.bf16.msra.mxu0 %v523
  %663 = vmatprep.subr.bf16.mxu0 %v522
  %664 = vmatpush1.bf16.msra.mxu0 %v521
  %665 = vmatprep.subr.bf16.mxu0 %v552
  %666 = vmatpush2.bf16.msra.mxu0 %v551
  %667 = vmatprep.subr.bf16.mxu0 %v550
  %668 = vmatpush2.bf16.msra.mxu0 %v549
  %669 = vmatprep.subr.bf16.mxu0 %v548
  %670 = vmatpush2.bf16.msra.mxu0 %v547
  %671 = vmatprep.subr.bf16.mxu0 %v546
  %672 = vmatpush2.bf16.msra.mxu0 %v545
  %673 = vmatprep.subr.bf16.mxu0 %v544
  %674 = vmatpush2.bf16.msra.mxu0 %v543
  %675 = vmatprep.subr.bf16.mxu0 %v542
  %676 = vmatpush2.bf16.msra.mxu0 %v541
  %677 = vmatprep.subr.bf16.mxu0 %v540
  %678 = vmatpush2.bf16.msra.mxu0 %v539
  %679 = vmatprep.subr.bf16.mxu0 %v538
  %680 = vmatpush2.bf16.msra.mxu0 %v537
  %681 = vmatprep.mubr.bf16.mxu0 %v250
  %682 = vmatmul.mubr.bf16.gmra.mxu0 %v249
  %v683 = vpop.f32.mrf.mxu0
  %v684 = vadd.f32 %v322, %v683
  %v685 = vpop.f32.mrf.mxu0
  %v686 = vadd.f32 %v326, %v685
  %v687 = vpop.f32.mrf.mxu0
  %v688 = vpop.f32.mrf.mxu0
  %689 = vdwg.mxu0
  %690 = vmatprep.subr.bf16.mxu0 %v568
  %691 = vmatpush1.bf16.msra.mxu0 %v567
  %692 = vmatprep.subr.bf16.mxu0 %v566
  %693 = vmatpush1.bf16.msra.mxu0 %v565
  %694 = vmatprep.subr.bf16.mxu0 %v564
  %695 = vmatpush1.bf16.msra.mxu0 %v563
  %696 = vmatprep.subr.bf16.mxu0 %v562
  %697 = vmatpush1.bf16.msra.mxu0 %v561
  %698 = vmatprep.subr.bf16.mxu0 %v560
  %699 = vmatpush1.bf16.msra.mxu0 %v559
  %700 = vmatprep.subr.bf16.mxu0 %v558
  %701 = vmatpush1.bf16.msra.mxu0 %v557
  %702 = vmatprep.subr.bf16.mxu0 %v556
  %703 = vmatpush1.bf16.msra.mxu0 %v555
  %704 = vmatprep.subr.bf16.mxu0 %v554
  %705 = vmatpush1.bf16.msra.mxu0 %v553
  %706 = vmatprep.subr.bf16.mxu0 %v584
  %707 = vmatpush2.bf16.msra.mxu0 %v583
  %708 = vmatprep.subr.bf16.mxu0 %v582
  %709 = vmatpush2.bf16.msra.mxu0 %v581
  %710 = vmatprep.subr.bf16.mxu0 %v580
  %711 = vmatpush2.bf16.msra.mxu0 %v579
  %712 = vmatprep.subr.bf16.mxu0 %v578
  %713 = vmatpush2.bf16.msra.mxu0 %v577
  %714 = vmatprep.subr.bf16.mxu0 %v576
  %715 = vmatpush2.bf16.msra.mxu0 %v575
  %716 = vmatprep.subr.bf16.mxu0 %v574
  %717 = vmatpush2.bf16.msra.mxu0 %v573
  %718 = vmatprep.subr.bf16.mxu0 %v572
  %719 = vmatpush2.bf16.msra.mxu0 %v571
  %720 = vmatprep.subr.bf16.mxu0 %v570
  %721 = vmatpush2.bf16.msra.mxu0 %v569
  %722 = vmatprep.mubr.bf16.mxu0 %v252
  %723 = vmatmul.mubr.bf16.gmra.mxu0 %v251
  %v724 = vpop.f32.mrf.mxu0
  %v725 = vadd.f32 %v684, %v724
  %v726 = vpop.f32.mrf.mxu0
  %v727 = vadd.f32 %v686, %v726
  %v728 = vpop.f32.mrf.mxu0
  %v729 = vpop.f32.mrf.mxu0
  %730 = vdwg.mxu0
  %v731 = vxor.u32 %v725, 2147483648
  %v732 = vxor.u32 %v727, 2147483648
  %v733 = vmul.f32 %v731, 1.442695
  %v734 = vpow.pop %v733
  %v735 = vmul.f32 %v732, 1.442695
  %v736 = vpow.pop %v735
  %v737 = vadd.f32 %v734, 1.0
  %v738 = vadd.f32 %v736, 1.0
  %v739 = vrcp.pop %v737
  %v740 = vmul.f32 1.0, %v739
  %v741 = vrcp.pop %v738
  %v742 = vmul.f32 1.0, %v741
  %v743 = vld [vmem:[%s8] sm:$0x3]
  %v745 = vlaneseq
  %v746 = vshrl.u32 %v745, 7
  %v747 = vsub.s32 0, %v746
  %v748 = vrot.slane %v743, %v747
  %v749 = vlaneseq
  %v750 = vshrl.u32 %v749, 7
  %v751 = vsub.s32 1, %v750
  %v752 = vrot.slane %v743, %v751
  %v755 = vmul.f32 %v740, %v748
  %v756 = vmul.f32 %v742, %v752
  %v757 = vadd.f32 %v755, %v756
  %758 = vadd.xlane.f32.xlu0 %v757
  %v759 = vpop.xlane.xlu0 %758
  %v760 = vld [vmem:[#allocation2] sm:$0x1]
  %v762 = vlaneseq
  %v763 = vshrl.u32 %v762, 7
  %v764 = vsub.s32 0, %v763
  %v765 = vrot.slane %v760, %v764
  %v767 = vadd.f32 %v759, %v765
  %v768 = vxor.u32 %v767, 2147483648
  %v769 = vmul.f32 %v768, 1.442695
  %v770 = vpow.pop %v769
  %v771 = vadd.f32 %v770, 1.0
  %v772 = vrcp.pop %v771
  %v773 = vmul.f32 1.0, %v772
  %vm774 = vcmask 7168
  %775 = vst.msk [vmem:[%s10] sm:$0xff] %vm774, %v773
  // Predicated region
  $region42: #{ncdnet_con_forward.5} parent=0 // pred_check
    _
  $region43: #{ncdnet_con_forward.5} parent=0 // pred_check_branch
    %777 = sbr.rel (0) target = $region45
  $region44: #{ncdnet_con_forward.5} parent=0 // pred_region
    _
  $region45: #{ncdnet_con_forward.5} parent=0 // pred_fallthru
    _
  // Predicated region
  $region46: #{ncdnet_con_forward.5} parent=0 // pred_check
    _
  $region47: #{ncdnet_con_forward.5} parent=0 // pred_check_branch
    %779 = sbr.rel (0) target = $region49
  $region48: #{ncdnet_con_forward.5} parent=0 // pred_region
    _
  $region49: #{ncdnet_con_forward.5} parent=0 // pred_fallthru
    _

</llo_original>
